<compile_context>
chip_gen: v5e
topology: v5e:2x2
jax: 0.10.0
libtpu: 0.0.40
codegen_flags: <defaults>
</compile_context>

<pallas_src>
import numpy as np
import jax
import jax.numpy as jnp
from jax.experimental import pallas as pl
from jax.experimental.pallas import tpu as pltpu


def make_tables(beta_1, beta_T, T):
    """Precompute diffusion coefficient tables in float64 (matches torch .double())."""
    betas = np.linspace(beta_1, beta_T, T, dtype=np.float64)
    alphas = 1.0 - betas
    alphas_bar = np.cumprod(alphas)
    alphas_bar_prev = np.concatenate([[1.0], alphas_bar[:-1]])
    sqrt_recip_alphas_bar = np.sqrt(1.0 / alphas_bar)
    sqrt_recipm1_alphas_bar = np.sqrt(1.0 / alphas_bar - 1.0)
    posterior_var = betas * (1.0 - alphas_bar_prev) / (1.0 - alphas_bar)
    posterior_mean_coef1 = np.sqrt(alphas_bar_prev) * betas / (1.0 - alphas_bar)
    posterior_mean_coef2 = np.sqrt(alphas) * (1.0 - alphas_bar_prev) / (1.0 - alphas_bar)
    # var_type == 'fixedlarge'; precompute sigma host-side (in float64).
    model_log_var = np.log(np.concatenate([posterior_var[1:2], betas[1:]]))
    sigma = np.exp(0.5 * model_log_var)
    return (sqrt_recip_alphas_bar, sqrt_recipm1_alphas_bar,
            posterior_mean_coef1, posterior_mean_coef2, sigma)


def pack_coefs(tables, W, b, temb):
    """Pack per-step tables + tiny eps-model params into one flat f32 SMEM array."""
    parts = [np.asarray(t, np.float32).reshape(-1) for t in tables]
    parts += [np.asarray(W, np.float32).reshape(-1),    # W[i, c] at i*C + c
              np.asarray(b, np.float32).reshape(-1),    # (C,)
              np.asarray(temb, np.float32).reshape(-1)]  # temb[t, c] at t*C + c
    return jnp.asarray(np.concatenate(parts))


def make_sampler_kernel(T, C, S):
    OFF_SR, OFF_SRM1, OFF_C1, OFF_C2, OFF_SIG = 0, T, 2 * T, 3 * T, 4 * T
    OFF_W = 5 * T
    OFF_B = OFF_W + C * C
    OFF_TEMB = OFF_B + C

    def kernel(coef_ref, xT_ref, noise_ref, out_ref, x_acc, eps_buf):
        # coef_ref: SMEM f32 flat coefficient/parameter table (scalar prefetch)
        # xT_ref / noise_ref / out_ref: lane-dense (C, tile_n) / (S, C, tile_n) tiles
        # x_acc, eps_buf: VMEM scratch (C, tile_n)
        k = pl.program_id(1)
        n_k = pl.num_programs(1)

        @pl.when(k == 0)
        def _():
            x_acc[...] = xT_ref[...]          # initialize carried state for this N tile

        # Step-invariant eps-model parameters (scalars in SMEM), hoisted out of the loop.
        w_sc = [[coef_ref[OFF_W + i * C + c] for c in range(C)] for i in range(C)]
        b_sc = [coef_ref[OFF_B + c] for c in range(C)]

        x = x_acc[...]                        # (C, tile_n), f32, lane-dense

        for s in range(S):                    # S fused diffusion steps, static unroll
            step = (T - 1) - (k * S + s)      # reversed time index
            sr = coef_ref[OFF_SR + step]      # sqrt(1/alphas_bar[t])
            srm1 = coef_ref[OFF_SRM1 + step]  # sqrt(1/alphas_bar[t] - 1)
            c1 = coef_ref[OFF_C1 + step]      # posterior_mean_coef1[t]
            c2 = coef_ref[OFF_C2 + step]      # posterior_mean_coef2[t]
            # sigma precomputed host-side; zero the noise term at time_step == 0
            sigma = jnp.where(step > 0, coef_ref[OFF_SIG + step], jnp.float32(0.0))

            # eps = tanh(W^T x + b + temb[step]) as C*C scalar-broadcast FMAs on the VPU
            # (no MXU push/pop for a 4x4 contraction). Rows assembled via VMEM scratch.
            for c in range(C):
                acc = x[0:1, :] * w_sc[0][c]
                for i in range(1, C):
                    acc = acc + x[i:i + 1, :] * w_sc[i][c]
                eps_buf[c:c + 1, :] = acc + (b_sc[c] + coef_ref[OFF_TEMB + step * C + c])
            eps = jnp.tanh(eps_buf[...])                       # (C, tile_n)

            x0 = jnp.clip(sr * x - srm1 * eps, -1.0, 1.0)      # predict_xstart_from_eps + clip
            mean = c1 * x0 + c2 * x                            # posterior mean
            x = mean + sigma * noise_ref[s]                    # sigma == 0 at time_step 0

        x_acc[...] = x                                         # carry to next grid step

        @pl.when(k == n_k - 1)
        def _():
            out_ref[...] = jnp.clip(x, -1.0, 1.0)              # final clip of x_0

    return kernel


def gaussian_diffusion_sample(x_T_nchw, noise_flat, coef_flat, T,
                              *, steps_per_block=None, tile_n=None):
    B, C, H, Wd = x_T_nchw.shape
    N = B * H * Wd
    # Lane-dense working layout: channels on sublanes, pixels on lanes.
    x_flat = jnp.transpose(x_T_nchw, (1, 0, 2, 3)).reshape(C, N).astype(jnp.float32)

    if steps_per_block is None:
        steps_per_block = next(s for s in (8, 4, 2, 1) if T % s == 0)
    S = steps_per_block
    assert T % S == 0

    if tile_n is None:
        tile_n = 256 if N % 256 == 0 else N
    assert N % tile_n == 0 and (tile_n % 128 == 0 or tile_n == N)
    num_tiles = N // tile_n

    out_flat = pl.pallas_call(
        make_sampler_kernel(T, C, S),
        out_shape=jax.ShapeDtypeStruct((C, N), jnp.float32),
        grid_spec=pltpu.PrefetchScalarGridSpec(
            num_scalar_prefetch=1,                  # coef table -> SMEM
            grid=(num_tiles, T // S),               # (parallel N tiles, fused time blocks)
            in_specs=[
                pl.BlockSpec((C, tile_n), lambda i, k, coef: (0, i)),      # x_T tile
                pl.BlockSpec((S, C, tile_n), lambda i, k, coef: (k, 0, i)),  # noise block
            ],
            out_specs=pl.BlockSpec((C, tile_n), lambda i, k, coef: (0, i)),
            scratch_shapes=[pltpu.VMEM((C, tile_n), jnp.float32),   # carried x_t state
                            pltpu.VMEM((C, tile_n), jnp.float32)],  # eps assembly buffer
        ),
        compiler_params=pltpu.CompilerParams(
            dimension_semantics=("parallel", "arbitrary")),
    )(coef_flat, x_flat, noise_flat)

    return out_flat.reshape(C, B, H, Wd).transpose(1, 0, 2, 3)


def reference_sample(x_T_nchw, W, b, temb, noise_flat, tables):
    """Pure-JAX reference in NCHW, same semantics as the PyTorch forward."""
    sr, srm1, c1, c2, sigma = [jnp.asarray(v, jnp.float32) for v in tables]
    B, C, H, Wd = x_T_nchw.shape
    T = sr.shape[0]
    # noise_flat: (T, C, N) with N flattened from (B, H, W)
    noise_nchw = noise_flat.reshape(T, C, B, H, Wd).transpose(0, 2, 1, 3, 4)

    x = x_T_nchw.astype(jnp.float32)
    for time_step in reversed(range(T)):
        eps = jnp.tanh(jnp.einsum('bihw,io->bohw', x, W)
                       + b.reshape(1, C, 1, 1) + temb[time_step].reshape(1, C, 1, 1))
        x0 = jnp.clip(sr[time_step] * x - srm1[time_step] * eps, -1.0, 1.0)
        mean = c1[time_step] * x0 + c2[time_step] * x
        if time_step > 0:
            x = mean + sigma[time_step] * noise_nchw[(T - 1) - time_step]
        else:
            x = mean
    return jnp.clip(x, -1.0, 1.0)


if __name__ == "__main__":
    # Small, deterministic configuration.
    B, C, H, Wd = 2, 4, 16, 16
    T = 8
    beta_1, beta_T = 1e-4, 0.02
    N = B * H * Wd

    tables = make_tables(beta_1, beta_T, T)

    key = jax.random.PRNGKey(0)
    k_x, k_w, k_b, k_t, k_n = jax.random.split(key, 5)
    x_T = jax.random.normal(k_x, (B, C, H, Wd), dtype=jnp.float32)
    W = jax.random.normal(k_w, (C, C), dtype=jnp.float32) * 0.5
    b = jax.random.normal(k_b, (C,), dtype=jnp.float32) * 0.1
    temb = jax.random.normal(k_t, (T, C), dtype=jnp.float32) * 0.1

    # Pre-generated sampling noise, (T, C, N), indexed by j = T-1-time_step.
    # The kernel zeroes the noise contribution at time_step == 0 itself.
    # TODO(synk): for realistic T / image sizes, generate noise in-kernel with
    # pltpu.prng_seed + pltpu.stateful_normal to remove the HBM noise stream
    # (changes the exact random sequence vs. this host-side reference).
    noise_flat = jax.random.normal(k_n, (T, C, N), dtype=jnp.float32)

    coef_flat = pack_coefs(tables, W, b, temb)

    out = gaussian_diffusion_sample(x_T, noise_flat, coef_flat, T)
    out = jax.block_until_ready(out)

    ref = reference_sample(x_T, W, b, temb, noise_flat, tables)
    ref = jax.block_until_ready(ref)

    assert out.shape == (B, C, H, Wd)
    max_diff = float(jnp.max(jnp.abs(out - ref)))
    assert jnp.allclose(out, ref, rtol=1e-4, atol=1e-4), f"max abs diff {max_diff}"

    print("KERNEL_OK")
</pallas_src>

<mosaic_0001>
module attributes {stable_mosaic.version = 11 : i64} {
  func.func @kernel(%arg0: i32, %arg1: i32, %arg2: memref<92xf32, #tpu.memory_space<smem>>, %arg3: memref<4x256xf32, #tpu.memory_space<vmem>>, %arg4: memref<8x4x256xf32, #tpu.memory_space<vmem>>, %arg5: memref<4x256xf32, #tpu.memory_space<vmem>>, %arg6: memref<4x256xf32, #tpu.memory_space<vmem>>, %arg7: memref<4x256xf32, #tpu.memory_space<vmem>>) attributes {dimension_semantics = [#tpu.dimension_semantics<parallel>, #tpu.dimension_semantics<arbitrary>], iteration_bounds = array<i64: 2, 1>, scalar_prefetch = 1 : i64, scratch_operands = 2 : i64, tpu.core_type = #tpu.core_type<tc>, window_params = [{transform_indices = @transform_0, window_bounds = array<i64: 4, 256>}, {transform_indices = @transform_1, window_bounds = array<i64: 8, 4, 256>}, {transform_indices = @transform_2, window_bounds = array<i64: 4, 256>}]} {
    %c0_i32 = arith.constant 0 : i32
    %0 = arith.cmpi eq, %arg1, %c0_i32 : i32
    %1 = arith.extui %0 : i1 to i32
    %c0_i32_0 = arith.constant 0 : i32
    %2 = arith.cmpi ne, %1, %c0_i32_0 : i32
    scf.if %2 {
      %c0_282 = arith.constant 0 : index
      %c0_283 = arith.constant 0 : index
      %1124 = vector.load %arg3[%c0_282, %c0_283] : memref<4x256xf32, #tpu.memory_space<vmem>>, vector<4x256xf32>
      %c0_284 = arith.constant 0 : index
      %c0_285 = arith.constant 0 : index
      %1125 = vector.load %arg6[%c0_284, %c0_285] : memref<4x256xf32, #tpu.memory_space<vmem>>, vector<4x256xf32>
      tpu.vector_store %arg6[%c0_284, %c0_285], %1124 {strides = array<i32>} : memref<4x256xf32, #tpu.memory_space<vmem>>, vector<4x256xf32>,
    } else {
    }
    %c40 = arith.constant 40 : index
    %3 = memref.load %arg2[%c40] : memref<92xf32, #tpu.memory_space<smem>>
    %c41 = arith.constant 41 : index
    %4 = memref.load %arg2[%c41] : memref<92xf32, #tpu.memory_space<smem>>
    %c42 = arith.constant 42 : index
    %5 = memref.load %arg2[%c42] : memref<92xf32, #tpu.memory_space<smem>>
    %c43 = arith.constant 43 : index
    %6 = memref.load %arg2[%c43] : memref<92xf32, #tpu.memory_space<smem>>
    %c44 = arith.constant 44 : index
    %7 = memref.load %arg2[%c44] : memref<92xf32, #tpu.memory_space<smem>>
    %c45 = arith.constant 45 : index
    %8 = memref.load %arg2[%c45] : memref<92xf32, #tpu.memory_space<smem>>
    %c46 = arith.constant 46 : index
    %9 = memref.load %arg2[%c46] : memref<92xf32, #tpu.memory_space<smem>>
    %c47 = arith.constant 47 : index
    %10 = memref.load %arg2[%c47] : memref<92xf32, #tpu.memory_space<smem>>
    %c48 = arith.constant 48 : index
    %11 = memref.load %arg2[%c48] : memref<92xf32, #tpu.memory_space<smem>>
    %c49 = arith.constant 49 : index
    %12 = memref.load %arg2[%c49] : memref<92xf32, #tpu.memory_space<smem>>
    %c50 = arith.constant 50 : index
    %13 = memref.load %arg2[%c50] : memref<92xf32, #tpu.memory_space<smem>>
    %c51 = arith.constant 51 : index
    %14 = memref.load %arg2[%c51] : memref<92xf32, #tpu.memory_space<smem>>
    %c52 = arith.constant 52 : index
    %15 = memref.load %arg2[%c52] : memref<92xf32, #tpu.memory_space<smem>>
    %c53 = arith.constant 53 : index
    %16 = memref.load %arg2[%c53] : memref<92xf32, #tpu.memory_space<smem>>
    %c54 = arith.constant 54 : index
    %17 = memref.load %arg2[%c54] : memref<92xf32, #tpu.memory_space<smem>>
    %c55 = arith.constant 55 : index
    %18 = memref.load %arg2[%c55] : memref<92xf32, #tpu.memory_space<smem>>
    %c56 = arith.constant 56 : index
    %19 = memref.load %arg2[%c56] : memref<92xf32, #tpu.memory_space<smem>>
    %c57 = arith.constant 57 : index
    %20 = memref.load %arg2[%c57] : memref<92xf32, #tpu.memory_space<smem>>
    %c58 = arith.constant 58 : index
    %21 = memref.load %arg2[%c58] : memref<92xf32, #tpu.memory_space<smem>>
    %c59 = arith.constant 59 : index
    %22 = memref.load %arg2[%c59] : memref<92xf32, #tpu.memory_space<smem>>
    %c0 = arith.constant 0 : index
    %c0_1 = arith.constant 0 : index
    %23 = vector.load %arg6[%c0, %c0_1] : memref<4x256xf32, #tpu.memory_space<vmem>>, vector<4x256xf32>
    %c8_i32 = arith.constant 8 : i32
    %24 = arith.muli %arg1, %c8_i32 : i32
    %c0_i32_2 = arith.constant 0 : i32
    %25 = arith.addi %24, %c0_i32_2 : i32
    %c7_i32 = arith.constant 7 : i32
    %26 = arith.subi %c7_i32, %25 : i32
    %c0_i32_3 = arith.constant 0 : i32
    %27 = arith.addi %c0_i32_3, %26 : i32
    %28 = arith.index_cast %27 : i32 to index
    %29 = memref.load %arg2[%28] : memref<92xf32, #tpu.memory_space<smem>>
    %c8_i32_4 = arith.constant 8 : i32
    %30 = arith.addi %c8_i32_4, %26 : i32
    %31 = arith.index_cast %30 : i32 to index
    %32 = memref.load %arg2[%31] : memref<92xf32, #tpu.memory_space<smem>>
    %c16_i32 = arith.constant 16 : i32
    %33 = arith.addi %c16_i32, %26 : i32
    %34 = arith.index_cast %33 : i32 to index
    %35 = memref.load %arg2[%34] : memref<92xf32, #tpu.memory_space<smem>>
    %c24_i32 = arith.constant 24 : i32
    %36 = arith.addi %c24_i32, %26 : i32
    %37 = arith.index_cast %36 : i32 to index
    %38 = memref.load %arg2[%37] : memref<92xf32, #tpu.memory_space<smem>>
    %c0_i32_5 = arith.constant 0 : i32
    %39 = arith.cmpi sgt, %26, %c0_i32_5 : i32
    %c32_i32 = arith.constant 32 : i32
    %40 = arith.addi %c32_i32, %26 : i32
    %41 = arith.index_cast %40 : i32 to index
    %42 = memref.load %arg2[%41] : memref<92xf32, #tpu.memory_space<smem>>
    %cst = arith.constant 0.000000e+00 : f32
    %43 = arith.select %39, %42, %cst : f32
    %44 = vector.extract_strided_slice %23 {offsets = [0, 0], sizes = [1, 256], strides = [1, 1]} : vector<4x256xf32> to vector<1x256xf32>
    %45 = vector.broadcast %3 : f32 to vector<1x256xf32>
    %46 = arith.mulf %44, %45 : vector<1x256xf32>
    %47 = vector.extract_strided_slice %23 {offsets = [1, 0], sizes = [1, 256], strides = [1, 1]} : vector<4x256xf32> to vector<1x256xf32>
    %48 = vector.broadcast %7 : f32 to vector<1x256xf32>
    %49 = arith.mulf %47, %48 : vector<1x256xf32>
    %50 = arith.addf %46, %49 : vector<1x256xf32>
    %51 = vector.extract_strided_slice %23 {offsets = [2, 0], sizes = [1, 256], strides = [1, 1]} : vector<4x256xf32> to vector<1x256xf32>
    %52 = vector.broadcast %11 : f32 to vector<1x256xf32>
    %53 = arith.mulf %51, %52 : vector<1x256xf32>
    %54 = arith.addf %50, %53 : vector<1x256xf32>
    %55 = vector.extract_strided_slice %23 {offsets = [3, 0], sizes = [1, 256], strides = [1, 1]} : vector<4x256xf32> to vector<1x256xf32>
    %56 = vector.broadcast %15 : f32 to vector<1x256xf32>
    %57 = arith.mulf %55, %56 : vector<1x256xf32>
    %58 = arith.addf %54, %57 : vector<1x256xf32>
    %c4_i32 = arith.constant 4 : i32
    %59 = arith.muli %26, %c4_i32 : i32
    %c60_i32 = arith.constant 60 : i32
    %60 = arith.addi %c60_i32, %59 : i32
    %c0_i32_6 = arith.constant 0 : i32
    %61 = arith.addi %60, %c0_i32_6 : i32
    %62 = arith.index_cast %61 : i32 to index
    %63 = memref.load %arg2[%62] : memref<92xf32, #tpu.memory_space<smem>>
    %64 = arith.addf %19, %63 : f32
    %65 = vector.broadcast %64 : f32 to vector<1x256xf32>
    %66 = arith.addf %58, %65 : vector<1x256xf32>
    %c0_7 = arith.constant 0 : index
    %c0_8 = arith.constant 0 : index
    %67 = vector.load %arg7[%c0_7, %c0_8] : memref<4x256xf32, #tpu.memory_space<vmem>>, vector<1x256xf32>
    tpu.vector_store %arg7[%c0_7, %c0_8], %66 {strides = array<i32>} : memref<4x256xf32, #tpu.memory_space<vmem>>, vector<1x256xf32>,
    %68 = vector.extract_strided_slice %23 {offsets = [0, 0], sizes = [1, 256], strides = [1, 1]} : vector<4x256xf32> to vector<1x256xf32>
    %69 = vector.broadcast %4 : f32 to vector<1x256xf32>
    %70 = arith.mulf %68, %69 : vector<1x256xf32>
    %71 = vector.extract_strided_slice %23 {offsets = [1, 0], sizes = [1, 256], strides = [1, 1]} : vector<4x256xf32> to vector<1x256xf32>
    %72 = vector.broadcast %8 : f32 to vector<1x256xf32>
    %73 = arith.mulf %71, %72 : vector<1x256xf32>
    %74 = arith.addf %70, %73 : vector<1x256xf32>
    %75 = vector.extract_strided_slice %23 {offsets = [2, 0], sizes = [1, 256], strides = [1, 1]} : vector<4x256xf32> to vector<1x256xf32>
    %76 = vector.broadcast %12 : f32 to vector<1x256xf32>
    %77 = arith.mulf %75, %76 : vector<1x256xf32>
    %78 = arith.addf %74, %77 : vector<1x256xf32>
    %79 = vector.extract_strided_slice %23 {offsets = [3, 0], sizes = [1, 256], strides = [1, 1]} : vector<4x256xf32> to vector<1x256xf32>
    %80 = vector.broadcast %16 : f32 to vector<1x256xf32>
    %81 = arith.mulf %79, %80 : vector<1x256xf32>
    %82 = arith.addf %78, %81 : vector<1x256xf32>
    %c4_i32_9 = arith.constant 4 : i32
    %83 = arith.muli %26, %c4_i32_9 : i32
    %c60_i32_10 = arith.constant 60 : i32
    %84 = arith.addi %c60_i32_10, %83 : i32
    %c1_i32 = arith.constant 1 : i32
    %85 = arith.addi %84, %c1_i32 : i32
    %86 = arith.index_cast %85 : i32 to index
    %87 = memref.load %arg2[%86] : memref<92xf32, #tpu.memory_space<smem>>
    %88 = arith.addf %20, %87 : f32
    %89 = vector.broadcast %88 : f32 to vector<1x256xf32>
    %90 = arith.addf %82, %89 : vector<1x256xf32>
    %c1 = arith.constant 1 : index
    %c0_11 = arith.constant 0 : index
    %91 = vector.load %arg7[%c1, %c0_11] : memref<4x256xf32, #tpu.memory_space<vmem>>, vector<1x256xf32>
    tpu.vector_store %arg7[%c1, %c0_11], %90 {strides = array<i32>} : memref<4x256xf32, #tpu.memory_space<vmem>>, vector<1x256xf32>,
    %92 = vector.extract_strided_slice %23 {offsets = [0, 0], sizes = [1, 256], strides = [1, 1]} : vector<4x256xf32> to vector<1x256xf32>
    %93 = vector.broadcast %5 : f32 to vector<1x256xf32>
    %94 = arith.mulf %92, %93 : vector<1x256xf32>
    %95 = vector.extract_strided_slice %23 {offsets = [1, 0], sizes = [1, 256], strides = [1, 1]} : vector<4x256xf32> to vector<1x256xf32>
    %96 = vector.broadcast %9 : f32 to vector<1x256xf32>
    %97 = arith.mulf %95, %96 : vector<1x256xf32>
    %98 = arith.addf %94, %97 : vector<1x256xf32>
    %99 = vector.extract_strided_slice %23 {offsets = [2, 0], sizes = [1, 256], strides = [1, 1]} : vector<4x256xf32> to vector<1x256xf32>
    %100 = vector.broadcast %13 : f32 to vector<1x256xf32>
    %101 = arith.mulf %99, %100 : vector<1x256xf32>
    %102 = arith.addf %98, %101 : vector<1x256xf32>
    %103 = vector.extract_strided_slice %23 {offsets = [3, 0], sizes = [1, 256], strides = [1, 1]} : vector<4x256xf32> to vector<1x256xf32>
    %104 = vector.broadcast %17 : f32 to vector<1x256xf32>
    %105 = arith.mulf %103, %104 : vector<1x256xf32>
    %106 = arith.addf %102, %105 : vector<1x256xf32>
    %c4_i32_12 = arith.constant 4 : i32
    %107 = arith.muli %26, %c4_i32_12 : i32
    %c60_i32_13 = arith.constant 60 : i32
    %108 = arith.addi %c60_i32_13, %107 : i32
    %c2_i32 = arith.constant 2 : i32
    %109 = arith.addi %108, %c2_i32 : i32
    %110 = arith.index_cast %109 : i32 to index
    %111 = memref.load %arg2[%110] : memref<92xf32, #tpu.memory_space<smem>>
    %112 = arith.addf %21, %111 : f32
    %113 = vector.broadcast %112 : f32 to vector<1x256xf32>
    %114 = arith.addf %106, %113 : vector<1x256xf32>
    %c2 = arith.constant 2 : index
    %c0_14 = arith.constant 0 : index
    %115 = vector.load %arg7[%c2, %c0_14] : memref<4x256xf32, #tpu.memory_space<vmem>>, vector<1x256xf32>
    tpu.vector_store %arg7[%c2, %c0_14], %114 {strides = array<i32>} : memref<4x256xf32, #tpu.memory_space<vmem>>, vector<1x256xf32>,
    %116 = vector.extract_strided_slice %23 {offsets = [0, 0], sizes = [1, 256], strides = [1, 1]} : vector<4x256xf32> to vector<1x256xf32>
    %117 = vector.broadcast %6 : f32 to vector<1x256xf32>
    %118 = arith.mulf %116, %117 : vector<1x256xf32>
    %119 = vector.extract_strided_slice %23 {offsets = [1, 0], sizes = [1, 256], strides = [1, 1]} : vector<4x256xf32> to vector<1x256xf32>
    %120 = vector.broadcast %10 : f32 to vector<1x256xf32>
    %121 = arith.mulf %119, %120 : vector<1x256xf32>
    %122 = arith.addf %118, %121 : vector<1x256xf32>
    %123 = vector.extract_strided_slice %23 {offsets = [2, 0], sizes = [1, 256], strides = [1, 1]} : vector<4x256xf32> to vector<1x256xf32>
    %124 = vector.broadcast %14 : f32 to vector<1x256xf32>
    %125 = arith.mulf %123, %124 : vector<1x256xf32>
    %126 = arith.addf %122, %125 : vector<1x256xf32>
    %127 = vector.extract_strided_slice %23 {offsets = [3, 0], sizes = [1, 256], strides = [1, 1]} : vector<4x256xf32> to vector<1x256xf32>
    %128 = vector.broadcast %18 : f32 to vector<1x256xf32>
    %129 = arith.mulf %127, %128 : vector<1x256xf32>
    %130 = arith.addf %126, %129 : vector<1x256xf32>
    %c4_i32_15 = arith.constant 4 : i32
    %131 = arith.muli %26, %c4_i32_15 : i32
    %c60_i32_16 = arith.constant 60 : i32
    %132 = arith.addi %c60_i32_16, %131 : i32
    %c3_i32 = arith.constant 3 : i32
    %133 = arith.addi %132, %c3_i32 : i32
    %134 = arith.index_cast %133 : i32 to index
    %135 = memref.load %arg2[%134] : memref<92xf32, #tpu.memory_space<smem>>
    %136 = arith.addf %22, %135 : f32
    %137 = vector.broadcast %136 : f32 to vector<1x256xf32>
    %138 = arith.addf %130, %137 : vector<1x256xf32>
    %c3 = arith.constant 3 : index
    %c0_17 = arith.constant 0 : index
    %139 = vector.load %arg7[%c3, %c0_17] : memref<4x256xf32, #tpu.memory_space<vmem>>, vector<1x256xf32>
    tpu.vector_store %arg7[%c3, %c0_17], %138 {strides = array<i32>} : memref<4x256xf32, #tpu.memory_space<vmem>>, vector<1x256xf32>,
    %c0_18 = arith.constant 0 : index
    %c0_19 = arith.constant 0 : index
    %140 = vector.load %arg7[%c0_18, %c0_19] : memref<4x256xf32, #tpu.memory_space<vmem>>, vector<4x256xf32>
    %141 = math.tanh %140 : vector<4x256xf32>
    %142 = vector.broadcast %29 : f32 to vector<4x256xf32>
    %143 = arith.mulf %142, %23 : vector<4x256xf32>
    %144 = vector.broadcast %32 : f32 to vector<4x256xf32>
    %145 = arith.mulf %144, %141 : vector<4x256xf32>
    %146 = arith.subf %143, %145 : vector<4x256xf32>
    %cst_20 = arith.constant -1.000000e+00 : f32
    %cst_21 = arith.constant 1.000000e+00 : f32
    %147 = vector.broadcast %cst_20 : f32 to vector<4x256xf32>
    %148 = arith.maximumf %147, %146 : vector<4x256xf32>
    %149 = vector.broadcast %cst_21 : f32 to vector<4x256xf32>
    %150 = arith.minimumf %149, %148 : vector<4x256xf32>
    %151 = vector.broadcast %35 : f32 to vector<4x256xf32>
    %152 = arith.mulf %151, %150 : vector<4x256xf32>
    %153 = vector.broadcast %38 : f32 to vector<4x256xf32>
    %154 = arith.mulf %153, %23 : vector<4x256xf32>
    %155 = arith.addf %152, %154 : vector<4x256xf32>
    %c0_22 = arith.constant 0 : index
    %c0_23 = arith.constant 0 : index
    %c0_24 = arith.constant 0 : index
    %156 = vector.load %arg4[%c0_22, %c0_23, %c0_24] : memref<8x4x256xf32, #tpu.memory_space<vmem>>, vector<1x4x256xf32>
    %157 = vector.shape_cast %156 : vector<1x4x256xf32> to vector<4x256xf32>
    %158 = vector.broadcast %43 : f32 to vector<4x256xf32>
    %159 = arith.mulf %158, %157 : vector<4x256xf32>
    %160 = arith.addf %155, %159 : vector<4x256xf32>
    %c8_i32_25 = arith.constant 8 : i32
    %161 = arith.muli %arg1, %c8_i32_25 : i32
    %c1_i32_26 = arith.constant 1 : i32
    %162 = arith.addi %161, %c1_i32_26 : i32
    %c7_i32_27 = arith.constant 7 : i32
    %163 = arith.subi %c7_i32_27, %162 : i32
    %c0_i32_28 = arith.constant 0 : i32
    %164 = arith.addi %c0_i32_28, %163 : i32
    %165 = arith.index_cast %164 : i32 to index
    %166 = memref.load %arg2[%165] : memref<92xf32, #tpu.memory_space<smem>>
    %c8_i32_29 = arith.constant 8 : i32
    %167 = arith.addi %c8_i32_29, %163 : i32
    %168 = arith.index_cast %167 : i32 to index
    %169 = memref.load %arg2[%168] : memref<92xf32, #tpu.memory_space<smem>>
    %c16_i32_30 = arith.constant 16 : i32
    %170 = arith.addi %c16_i32_30, %163 : i32
    %171 = arith.index_cast %170 : i32 to index
    %172 = memref.load %arg2[%171] : memref<92xf32, #tpu.memory_space<smem>>
    %c24_i32_31 = arith.constant 24 : i32
    %173 = arith.addi %c24_i32_31, %163 : i32
    %174 = arith.index_cast %173 : i32 to index
    %175 = memref.load %arg2[%174] : memref<92xf32, #tpu.memory_space<smem>>
    %c0_i32_32 = arith.constant 0 : i32
    %176 = arith.cmpi sgt, %163, %c0_i32_32 : i32
    %c32_i32_33 = arith.constant 32 : i32
    %177 = arith.addi %c32_i32_33, %163 : i32
    %178 = arith.index_cast %177 : i32 to index
    %179 = memref.load %arg2[%178] : memref<92xf32, #tpu.memory_space<smem>>
    %cst_34 = arith.constant 0.000000e+00 : f32
    %180 = arith.select %176, %179, %cst_34 : f32
    %181 = vector.extract_strided_slice %160 {offsets = [0, 0], sizes = [1, 256], strides = [1, 1]} : vector<4x256xf32> to vector<1x256xf32>
    %182 = vector.broadcast %3 : f32 to vector<1x256xf32>
    %183 = arith.mulf %181, %182 : vector<1x256xf32>
    %184 = vector.extract_strided_slice %160 {offsets = [1, 0], sizes = [1, 256], strides = [1, 1]} : vector<4x256xf32> to vector<1x256xf32>
    %185 = vector.broadcast %7 : f32 to vector<1x256xf32>
    %186 = arith.mulf %184, %185 : vector<1x256xf32>
    %187 = arith.addf %183, %186 : vector<1x256xf32>
    %188 = vector.extract_strided_slice %160 {offsets = [2, 0], sizes = [1, 256], strides = [1, 1]} : vector<4x256xf32> to vector<1x256xf32>
    %189 = vector.broadcast %11 : f32 to vector<1x256xf32>
    %190 = arith.mulf %188, %189 : vector<1x256xf32>
    %191 = arith.addf %187, %190 : vector<1x256xf32>
    %192 = vector.extract_strided_slice %160 {offsets = [3, 0], sizes = [1, 256], strides = [1, 1]} : vector<4x256xf32> to vector<1x256xf32>
    %193 = vector.broadcast %15 : f32 to vector<1x256xf32>
    %194 = arith.mulf %192, %193 : vector<1x256xf32>
    %195 = arith.addf %191, %194 : vector<1x256xf32>
    %c4_i32_35 = arith.constant 4 : i32
    %196 = arith.muli %163, %c4_i32_35 : i32
    %c60_i32_36 = arith.constant 60 : i32
    %197 = arith.addi %c60_i32_36, %196 : i32
    %c0_i32_37 = arith.constant 0 : i32
    %198 = arith.addi %197, %c0_i32_37 : i32
    %199 = arith.index_cast %198 : i32 to index
    %200 = memref.load %arg2[%199] : memref<92xf32, #tpu.memory_space<smem>>
    %201 = arith.addf %19, %200 : f32
    %202 = vector.broadcast %201 : f32 to vector<1x256xf32>
    %203 = arith.addf %195, %202 : vector<1x256xf32>
    %c0_38 = arith.constant 0 : index
    %c0_39 = arith.constant 0 : index
    %204 = vector.load %arg7[%c0_38, %c0_39] : memref<4x256xf32, #tpu.memory_space<vmem>>, vector<1x256xf32>
    tpu.vector_store %arg7[%c0_38, %c0_39], %203 {strides = array<i32>} : memref<4x256xf32, #tpu.memory_space<vmem>>, vector<1x256xf32>,
    %205 = vector.extract_strided_slice %160 {offsets = [0, 0], sizes = [1, 256], strides = [1, 1]} : vector<4x256xf32> to vector<1x256xf32>
    %206 = vector.broadcast %4 : f32 to vector<1x256xf32>
    %207 = arith.mulf %205, %206 : vector<1x256xf32>
    %208 = vector.extract_strided_slice %160 {offsets = [1, 0], sizes = [1, 256], strides = [1, 1]} : vector<4x256xf32> to vector<1x256xf32>
    %209 = vector.broadcast %8 : f32 to vector<1x256xf32>
    %210 = arith.mulf %208, %209 : vector<1x256xf32>
    %211 = arith.addf %207, %210 : vector<1x256xf32>
    %212 = vector.extract_strided_slice %160 {offsets = [2, 0], sizes = [1, 256], strides = [1, 1]} : vector<4x256xf32> to vector<1x256xf32>
    %213 = vector.broadcast %12 : f32 to vector<1x256xf32>
    %214 = arith.mulf %212, %213 : vector<1x256xf32>
    %215 = arith.addf %211, %214 : vector<1x256xf32>
    %216 = vector.extract_strided_slice %160 {offsets = [3, 0], sizes = [1, 256], strides = [1, 1]} : vector<4x256xf32> to vector<1x256xf32>
    %217 = vector.broadcast %16 : f32 to vector<1x256xf32>
    %218 = arith.mulf %216, %217 : vector<1x256xf32>
    %219 = arith.addf %215, %218 : vector<1x256xf32>
    %c4_i32_40 = arith.constant 4 : i32
    %220 = arith.muli %163, %c4_i32_40 : i32
    %c60_i32_41 = arith.constant 60 : i32
    %221 = arith.addi %c60_i32_41, %220 : i32
    %c1_i32_42 = arith.constant 1 : i32
    %222 = arith.addi %221, %c1_i32_42 : i32
    %223 = arith.index_cast %222 : i32 to index
    %224 = memref.load %arg2[%223] : memref<92xf32, #tpu.memory_space<smem>>
    %225 = arith.addf %20, %224 : f32
    %226 = vector.broadcast %225 : f32 to vector<1x256xf32>
    %227 = arith.addf %219, %226 : vector<1x256xf32>
    %c1_43 = arith.constant 1 : index
    %c0_44 = arith.constant 0 : index
    %228 = vector.load %arg7[%c1_43, %c0_44] : memref<4x256xf32, #tpu.memory_space<vmem>>, vector<1x256xf32>
    tpu.vector_store %arg7[%c1_43, %c0_44], %227 {strides = array<i32>} : memref<4x256xf32, #tpu.memory_space<vmem>>, vector<1x256xf32>,
    %229 = vector.extract_strided_slice %160 {offsets = [0, 0], sizes = [1, 256], strides = [1, 1]} : vector<4x256xf32> to vector<1x256xf32>
    %230 = vector.broadcast %5 : f32 to vector<1x256xf32>
    %231 = arith.mulf %229, %230 : vector<1x256xf32>
    %232 = vector.extract_strided_slice %160 {offsets = [1, 0], sizes = [1, 256], strides = [1, 1]} : vector<4x256xf32> to vector<1x256xf32>
    %233 = vector.broadcast %9 : f32 to vector<1x256xf32>
    %234 = arith.mulf %232, %233 : vector<1x256xf32>
    %235 = arith.addf %231, %234 : vector<1x256xf32>
    %236 = vector.extract_strided_slice %160 {offsets = [2, 0], sizes = [1, 256], strides = [1, 1]} : vector<4x256xf32> to vector<1x256xf32>
    %237 = vector.broadcast %13 : f32 to vector<1x256xf32>
    %238 = arith.mulf %236, %237 : vector<1x256xf32>
    %239 = arith.addf %235, %238 : vector<1x256xf32>
    %240 = vector.extract_strided_slice %160 {offsets = [3, 0], sizes = [1, 256], strides = [1, 1]} : vector<4x256xf32> to vector<1x256xf32>
    %241 = vector.broadcast %17 : f32 to vector<1x256xf32>
    %242 = arith.mulf %240, %241 : vector<1x256xf32>
    %243 = arith.addf %239, %242 : vector<1x256xf32>
    %c4_i32_45 = arith.constant 4 : i32
    %244 = arith.muli %163, %c4_i32_45 : i32
    %c60_i32_46 = arith.constant 60 : i32
    %245 = arith.addi %c60_i32_46, %244 : i32
    %c2_i32_47 = arith.constant 2 : i32
    %246 = arith.addi %245, %c2_i32_47 : i32
    %247 = arith.index_cast %246 : i32 to index
    %248 = memref.load %arg2[%247] : memref<92xf32, #tpu.memory_space<smem>>
    %249 = arith.addf %21, %248 : f32
    %250 = vector.broadcast %249 : f32 to vector<1x256xf32>
    %251 = arith.addf %243, %250 : vector<1x256xf32>
    %c2_48 = arith.constant 2 : index
    %c0_49 = arith.constant 0 : index
    %252 = vector.load %arg7[%c2_48, %c0_49] : memref<4x256xf32, #tpu.memory_space<vmem>>, vector<1x256xf32>
    tpu.vector_store %arg7[%c2_48, %c0_49], %251 {strides = array<i32>} : memref<4x256xf32, #tpu.memory_space<vmem>>, vector<1x256xf32>,
    %253 = vector.extract_strided_slice %160 {offsets = [0, 0], sizes = [1, 256], strides = [1, 1]} : vector<4x256xf32> to vector<1x256xf32>
    %254 = vector.broadcast %6 : f32 to vector<1x256xf32>
    %255 = arith.mulf %253, %254 : vector<1x256xf32>
    %256 = vector.extract_strided_slice %160 {offsets = [1, 0], sizes = [1, 256], strides = [1, 1]} : vector<4x256xf32> to vector<1x256xf32>
    %257 = vector.broadcast %10 : f32 to vector<1x256xf32>
    %258 = arith.mulf %256, %257 : vector<1x256xf32>
    %259 = arith.addf %255, %258 : vector<1x256xf32>
    %260 = vector.extract_strided_slice %160 {offsets = [2, 0], sizes = [1, 256], strides = [1, 1]} : vector<4x256xf32> to vector<1x256xf32>
    %261 = vector.broadcast %14 : f32 to vector<1x256xf32>
    %262 = arith.mulf %260, %261 : vector<1x256xf32>
    %263 = arith.addf %259, %262 : vector<1x256xf32>
    %264 = vector.extract_strided_slice %160 {offsets = [3, 0], sizes = [1, 256], strides = [1, 1]} : vector<4x256xf32> to vector<1x256xf32>
    %265 = vector.broadcast %18 : f32 to vector<1x256xf32>
    %266 = arith.mulf %264, %265 : vector<1x256xf32>
    %267 = arith.addf %263, %266 : vector<1x256xf32>
    %c4_i32_50 = arith.constant 4 : i32
    %268 = arith.muli %163, %c4_i32_50 : i32
    %c60_i32_51 = arith.constant 60 : i32
    %269 = arith.addi %c60_i32_51, %268 : i32
    %c3_i32_52 = arith.constant 3 : i32
    %270 = arith.addi %269, %c3_i32_52 : i32
    %271 = arith.index_cast %270 : i32 to index
    %272 = memref.load %arg2[%271] : memref<92xf32, #tpu.memory_space<smem>>
    %273 = arith.addf %22, %272 : f32
    %274 = vector.broadcast %273 : f32 to vector<1x256xf32>
    %275 = arith.addf %267, %274 : vector<1x256xf32>
    %c3_53 = arith.constant 3 : index
    %c0_54 = arith.constant 0 : index
    %276 = vector.load %arg7[%c3_53, %c0_54] : memref<4x256xf32, #tpu.memory_space<vmem>>, vector<1x256xf32>
    tpu.vector_store %arg7[%c3_53, %c0_54], %275 {strides = array<i32>} : memref<4x256xf32, #tpu.memory_space<vmem>>, vector<1x256xf32>,
    %c0_55 = arith.constant 0 : index
    %c0_56 = arith.constant 0 : index
    %277 = vector.load %arg7[%c0_55, %c0_56] : memref<4x256xf32, #tpu.memory_space<vmem>>, vector<4x256xf32>
    %278 = math.tanh %277 : vector<4x256xf32>
    %279 = vector.broadcast %166 : f32 to vector<4x256xf32>
    %280 = arith.mulf %279, %160 : vector<4x256xf32>
    %281 = vector.broadcast %169 : f32 to vector<4x256xf32>
    %282 = arith.mulf %281, %278 : vector<4x256xf32>
    %283 = arith.subf %280, %282 : vector<4x256xf32>
    %cst_57 = arith.constant -1.000000e+00 : f32
    %cst_58 = arith.constant 1.000000e+00 : f32
    %284 = vector.broadcast %cst_57 : f32 to vector<4x256xf32>
    %285 = arith.maximumf %284, %283 : vector<4x256xf32>
    %286 = vector.broadcast %cst_58 : f32 to vector<4x256xf32>
    %287 = arith.minimumf %286, %285 : vector<4x256xf32>
    %288 = vector.broadcast %172 : f32 to vector<4x256xf32>
    %289 = arith.mulf %288, %287 : vector<4x256xf32>
    %290 = vector.broadcast %175 : f32 to vector<4x256xf32>
    %291 = arith.mulf %290, %160 : vector<4x256xf32>
    %292 = arith.addf %289, %291 : vector<4x256xf32>
    %c1_59 = arith.constant 1 : index
    %c0_60 = arith.constant 0 : index
    %c0_61 = arith.constant 0 : index
    %293 = vector.load %arg4[%c1_59, %c0_60, %c0_61] : memref<8x4x256xf32, #tpu.memory_space<vmem>>, vector<1x4x256xf32>
    %294 = vector.shape_cast %293 : vector<1x4x256xf32> to vector<4x256xf32>
    %295 = vector.broadcast %180 : f32 to vector<4x256xf32>
    %296 = arith.mulf %295, %294 : vector<4x256xf32>
    %297 = arith.addf %292, %296 : vector<4x256xf32>
    %c8_i32_62 = arith.constant 8 : i32
    %298 = arith.muli %arg1, %c8_i32_62 : i32
    %c2_i32_63 = arith.constant 2 : i32
    %299 = arith.addi %298, %c2_i32_63 : i32
    %c7_i32_64 = arith.constant 7 : i32
    %300 = arith.subi %c7_i32_64, %299 : i32
    %c0_i32_65 = arith.constant 0 : i32
    %301 = arith.addi %c0_i32_65, %300 : i32
    %302 = arith.index_cast %301 : i32 to index
    %303 = memref.load %arg2[%302] : memref<92xf32, #tpu.memory_space<smem>>
    %c8_i32_66 = arith.constant 8 : i32
    %304 = arith.addi %c8_i32_66, %300 : i32
    %305 = arith.index_cast %304 : i32 to index
    %306 = memref.load %arg2[%305] : memref<92xf32, #tpu.memory_space<smem>>
    %c16_i32_67 = arith.constant 16 : i32
    %307 = arith.addi %c16_i32_67, %300 : i32
    %308 = arith.index_cast %307 : i32 to index
    %309 = memref.load %arg2[%308] : memref<92xf32, #tpu.memory_space<smem>>
    %c24_i32_68 = arith.constant 24 : i32
    %310 = arith.addi %c24_i32_68, %300 : i32
    %311 = arith.index_cast %310 : i32 to index
    %312 = memref.load %arg2[%311] : memref<92xf32, #tpu.memory_space<smem>>
    %c0_i32_69 = arith.constant 0 : i32
    %313 = arith.cmpi sgt, %300, %c0_i32_69 : i32
    %c32_i32_70 = arith.constant 32 : i32
    %314 = arith.addi %c32_i32_70, %300 : i32
    %315 = arith.index_cast %314 : i32 to index
    %316 = memref.load %arg2[%315] : memref<92xf32, #tpu.memory_space<smem>>
    %cst_71 = arith.constant 0.000000e+00 : f32
    %317 = arith.select %313, %316, %cst_71 : f32
    %318 = vector.extract_strided_slice %297 {offsets = [0, 0], sizes = [1, 256], strides = [1, 1]} : vector<4x256xf32> to vector<1x256xf32>
    %319 = vector.broadcast %3 : f32 to vector<1x256xf32>
    %320 = arith.mulf %318, %319 : vector<1x256xf32>
    %321 = vector.extract_strided_slice %297 {offsets = [1, 0], sizes = [1, 256], strides = [1, 1]} : vector<4x256xf32> to vector<1x256xf32>
    %322 = vector.broadcast %7 : f32 to vector<1x256xf32>
    %323 = arith.mulf %321, %322 : vector<1x256xf32>
    %324 = arith.addf %320, %323 : vector<1x256xf32>
    %325 = vector.extract_strided_slice %297 {offsets = [2, 0], sizes = [1, 256], strides = [1, 1]} : vector<4x256xf32> to vector<1x256xf32>
    %326 = vector.broadcast %11 : f32 to vector<1x256xf32>
    %327 = arith.mulf %325, %326 : vector<1x256xf32>
    %328 = arith.addf %324, %327 : vector<1x256xf32>
    %329 = vector.extract_strided_slice %297 {offsets = [3, 0], sizes = [1, 256], strides = [1, 1]} : vector<4x256xf32> to vector<1x256xf32>
    %330 = vector.broadcast %15 : f32 to vector<1x256xf32>
    %331 = arith.mulf %329, %330 : vector<1x256xf32>
    %332 = arith.addf %328, %331 : vector<1x256xf32>
    %c4_i32_72 = arith.constant 4 : i32
    %333 = arith.muli %300, %c4_i32_72 : i32
    %c60_i32_73 = arith.constant 60 : i32
    %334 = arith.addi %c60_i32_73, %333 : i32
    %c0_i32_74 = arith.constant 0 : i32
    %335 = arith.addi %334, %c0_i32_74 : i32
    %336 = arith.index_cast %335 : i32 to index
    %337 = memref.load %arg2[%336] : memref<92xf32, #tpu.memory_space<smem>>
    %338 = arith.addf %19, %337 : f32
    %339 = vector.broadcast %338 : f32 to vector<1x256xf32>
    %340 = arith.addf %332, %339 : vector<1x256xf32>
    %c0_75 = arith.constant 0 : index
    %c0_76 = arith.constant 0 : index
    %341 = vector.load %arg7[%c0_75, %c0_76] : memref<4x256xf32, #tpu.memory_space<vmem>>, vector<1x256xf32>
    tpu.vector_store %arg7[%c0_75, %c0_76], %340 {strides = array<i32>} : memref<4x256xf32, #tpu.memory_space<vmem>>, vector<1x256xf32>,
    %342 = vector.extract_strided_slice %297 {offsets = [0, 0], sizes = [1, 256], strides = [1, 1]} : vector<4x256xf32> to vector<1x256xf32>
    %343 = vector.broadcast %4 : f32 to vector<1x256xf32>
    %344 = arith.mulf %342, %343 : vector<1x256xf32>
    %345 = vector.extract_strided_slice %297 {offsets = [1, 0], sizes = [1, 256], strides = [1, 1]} : vector<4x256xf32> to vector<1x256xf32>
    %346 = vector.broadcast %8 : f32 to vector<1x256xf32>
    %347 = arith.mulf %345, %346 : vector<1x256xf32>
    %348 = arith.addf %344, %347 : vector<1x256xf32>
    %349 = vector.extract_strided_slice %297 {offsets = [2, 0], sizes = [1, 256], strides = [1, 1]} : vector<4x256xf32> to vector<1x256xf32>
    %350 = vector.broadcast %12 : f32 to vector<1x256xf32>
    %351 = arith.mulf %349, %350 : vector<1x256xf32>
    %352 = arith.addf %348, %351 : vector<1x256xf32>
    %353 = vector.extract_strided_slice %297 {offsets = [3, 0], sizes = [1, 256], strides = [1, 1]} : vector<4x256xf32> to vector<1x256xf32>
    %354 = vector.broadcast %16 : f32 to vector<1x256xf32>
    %355 = arith.mulf %353, %354 : vector<1x256xf32>
    %356 = arith.addf %352, %355 : vector<1x256xf32>
    %c4_i32_77 = arith.constant 4 : i32
    %357 = arith.muli %300, %c4_i32_77 : i32
    %c60_i32_78 = arith.constant 60 : i32
    %358 = arith.addi %c60_i32_78, %357 : i32
    %c1_i32_79 = arith.constant 1 : i32
    %359 = arith.addi %358, %c1_i32_79 : i32
    %360 = arith.index_cast %359 : i32 to index
    %361 = memref.load %arg2[%360] : memref<92xf32, #tpu.memory_space<smem>>
    %362 = arith.addf %20, %361 : f32
    %363 = vector.broadcast %362 : f32 to vector<1x256xf32>
    %364 = arith.addf %356, %363 : vector<1x256xf32>
    %c1_80 = arith.constant 1 : index
    %c0_81 = arith.constant 0 : index
    %365 = vector.load %arg7[%c1_80, %c0_81] : memref<4x256xf32, #tpu.memory_space<vmem>>, vector<1x256xf32>
    tpu.vector_store %arg7[%c1_80, %c0_81], %364 {strides = array<i32>} : memref<4x256xf32, #tpu.memory_space<vmem>>, vector<1x256xf32>,
    %366 = vector.extract_strided_slice %297 {offsets = [0, 0], sizes = [1, 256], strides = [1, 1]} : vector<4x256xf32> to vector<1x256xf32>
    %367 = vector.broadcast %5 : f32 to vector<1x256xf32>
    %368 = arith.mulf %366, %367 : vector<1x256xf32>
    %369 = vector.extract_strided_slice %297 {offsets = [1, 0], sizes = [1, 256], strides = [1, 1]} : vector<4x256xf32> to vector<1x256xf32>
    %370 = vector.broadcast %9 : f32 to vector<1x256xf32>
    %371 = arith.mulf %369, %370 : vector<1x256xf32>
    %372 = arith.addf %368, %371 : vector<1x256xf32>
    %373 = vector.extract_strided_slice %297 {offsets = [2, 0], sizes = [1, 256], strides = [1, 1]} : vector<4x256xf32> to vector<1x256xf32>
    %374 = vector.broadcast %13 : f32 to vector<1x256xf32>
    %375 = arith.mulf %373, %374 : vector<1x256xf32>
    %376 = arith.addf %372, %375 : vector<1x256xf32>
    %377 = vector.extract_strided_slice %297 {offsets = [3, 0], sizes = [1, 256], strides = [1, 1]} : vector<4x256xf32> to vector<1x256xf32>
    %378 = vector.broadcast %17 : f32 to vector<1x256xf32>
    %379 = arith.mulf %377, %378 : vector<1x256xf32>
    %380 = arith.addf %376, %379 : vector<1x256xf32>
    %c4_i32_82 = arith.constant 4 : i32
    %381 = arith.muli %300, %c4_i32_82 : i32
    %c60_i32_83 = arith.constant 60 : i32
    %382 = arith.addi %c60_i32_83, %381 : i32
    %c2_i32_84 = arith.constant 2 : i32
    %383 = arith.addi %382, %c2_i32_84 : i32
    %384 = arith.index_cast %383 : i32 to index
    %385 = memref.load %arg2[%384] : memref<92xf32, #tpu.memory_space<smem>>
    %386 = arith.addf %21, %385 : f32
    %387 = vector.broadcast %386 : f32 to vector<1x256xf32>
    %388 = arith.addf %380, %387 : vector<1x256xf32>
    %c2_85 = arith.constant 2 : index
    %c0_86 = arith.constant 0 : index
    %389 = vector.load %arg7[%c2_85, %c0_86] : memref<4x256xf32, #tpu.memory_space<vmem>>, vector<1x256xf32>
    tpu.vector_store %arg7[%c2_85, %c0_86], %388 {strides = array<i32>} : memref<4x256xf32, #tpu.memory_space<vmem>>, vector<1x256xf32>,
    %390 = vector.extract_strided_slice %297 {offsets = [0, 0], sizes = [1, 256], strides = [1, 1]} : vector<4x256xf32> to vector<1x256xf32>
    %391 = vector.broadcast %6 : f32 to vector<1x256xf32>
    %392 = arith.mulf %390, %391 : vector<1x256xf32>
    %393 = vector.extract_strided_slice %297 {offsets = [1, 0], sizes = [1, 256], strides = [1, 1]} : vector<4x256xf32> to vector<1x256xf32>
    %394 = vector.broadcast %10 : f32 to vector<1x256xf32>
    %395 = arith.mulf %393, %394 : vector<1x256xf32>
    %396 = arith.addf %392, %395 : vector<1x256xf32>
    %397 = vector.extract_strided_slice %297 {offsets = [2, 0], sizes = [1, 256], strides = [1, 1]} : vector<4x256xf32> to vector<1x256xf32>
    %398 = vector.broadcast %14 : f32 to vector<1x256xf32>
    %399 = arith.mulf %397, %398 : vector<1x256xf32>
    %400 = arith.addf %396, %399 : vector<1x256xf32>
    %401 = vector.extract_strided_slice %297 {offsets = [3, 0], sizes = [1, 256], strides = [1, 1]} : vector<4x256xf32> to vector<1x256xf32>
    %402 = vector.broadcast %18 : f32 to vector<1x256xf32>
    %403 = arith.mulf %401, %402 : vector<1x256xf32>
    %404 = arith.addf %400, %403 : vector<1x256xf32>
    %c4_i32_87 = arith.constant 4 : i32
    %405 = arith.muli %300, %c4_i32_87 : i32
    %c60_i32_88 = arith.constant 60 : i32
    %406 = arith.addi %c60_i32_88, %405 : i32
    %c3_i32_89 = arith.constant 3 : i32
    %407 = arith.addi %406, %c3_i32_89 : i32
    %408 = arith.index_cast %407 : i32 to index
    %409 = memref.load %arg2[%408] : memref<92xf32, #tpu.memory_space<smem>>
    %410 = arith.addf %22, %409 : f32
    %411 = vector.broadcast %410 : f32 to vector<1x256xf32>
    %412 = arith.addf %404, %411 : vector<1x256xf32>
    %c3_90 = arith.constant 3 : index
    %c0_91 = arith.constant 0 : index
    %413 = vector.load %arg7[%c3_90, %c0_91] : memref<4x256xf32, #tpu.memory_space<vmem>>, vector<1x256xf32>
    tpu.vector_store %arg7[%c3_90, %c0_91], %412 {strides = array<i32>} : memref<4x256xf32, #tpu.memory_space<vmem>>, vector<1x256xf32>,
    %c0_92 = arith.constant 0 : index
    %c0_93 = arith.constant 0 : index
    %414 = vector.load %arg7[%c0_92, %c0_93] : memref<4x256xf32, #tpu.memory_space<vmem>>, vector<4x256xf32>
    %415 = math.tanh %414 : vector<4x256xf32>
    %416 = vector.broadcast %303 : f32 to vector<4x256xf32>
    %417 = arith.mulf %416, %297 : vector<4x256xf32>
    %418 = vector.broadcast %306 : f32 to vector<4x256xf32>
    %419 = arith.mulf %418, %415 : vector<4x256xf32>
    %420 = arith.subf %417, %419 : vector<4x256xf32>
    %cst_94 = arith.constant -1.000000e+00 : f32
    %cst_95 = arith.constant 1.000000e+00 : f32
    %421 = vector.broadcast %cst_94 : f32 to vector<4x256xf32>
    %422 = arith.maximumf %421, %420 : vector<4x256xf32>
    %423 = vector.broadcast %cst_95 : f32 to vector<4x256xf32>
    %424 = arith.minimumf %423, %422 : vector<4x256xf32>
    %425 = vector.broadcast %309 : f32 to vector<4x256xf32>
    %426 = arith.mulf %425, %424 : vector<4x256xf32>
    %427 = vector.broadcast %312 : f32 to vector<4x256xf32>
    %428 = arith.mulf %427, %297 : vector<4x256xf32>
    %429 = arith.addf %426, %428 : vector<4x256xf32>
    %c2_96 = arith.constant 2 : index
    %c0_97 = arith.constant 0 : index
    %c0_98 = arith.constant 0 : index
    %430 = vector.load %arg4[%c2_96, %c0_97, %c0_98] : memref<8x4x256xf32, #tpu.memory_space<vmem>>, vector<1x4x256xf32>
    %431 = vector.shape_cast %430 : vector<1x4x256xf32> to vector<4x256xf32>
    %432 = vector.broadcast %317 : f32 to vector<4x256xf32>
    %433 = arith.mulf %432, %431 : vector<4x256xf32>
    %434 = arith.addf %429, %433 : vector<4x256xf32>
    %c8_i32_99 = arith.constant 8 : i32
    %435 = arith.muli %arg1, %c8_i32_99 : i32
    %c3_i32_100 = arith.constant 3 : i32
    %436 = arith.addi %435, %c3_i32_100 : i32
    %c7_i32_101 = arith.constant 7 : i32
    %437 = arith.subi %c7_i32_101, %436 : i32
    %c0_i32_102 = arith.constant 0 : i32
    %438 = arith.addi %c0_i32_102, %437 : i32
    %439 = arith.index_cast %438 : i32 to index
    %440 = memref.load %arg2[%439] : memref<92xf32, #tpu.memory_space<smem>>
    %c8_i32_103 = arith.constant 8 : i32
    %441 = arith.addi %c8_i32_103, %437 : i32
    %442 = arith.index_cast %441 : i32 to index
    %443 = memref.load %arg2[%442] : memref<92xf32, #tpu.memory_space<smem>>
    %c16_i32_104 = arith.constant 16 : i32
    %444 = arith.addi %c16_i32_104, %437 : i32
    %445 = arith.index_cast %444 : i32 to index
    %446 = memref.load %arg2[%445] : memref<92xf32, #tpu.memory_space<smem>>
    %c24_i32_105 = arith.constant 24 : i32
    %447 = arith.addi %c24_i32_105, %437 : i32
    %448 = arith.index_cast %447 : i32 to index
    %449 = memref.load %arg2[%448] : memref<92xf32, #tpu.memory_space<smem>>
    %c0_i32_106 = arith.constant 0 : i32
    %450 = arith.cmpi sgt, %437, %c0_i32_106 : i32
    %c32_i32_107 = arith.constant 32 : i32
    %451 = arith.addi %c32_i32_107, %437 : i32
    %452 = arith.index_cast %451 : i32 to index
    %453 = memref.load %arg2[%452] : memref<92xf32, #tpu.memory_space<smem>>
    %cst_108 = arith.constant 0.000000e+00 : f32
    %454 = arith.select %450, %453, %cst_108 : f32
    %455 = vector.extract_strided_slice %434 {offsets = [0, 0], sizes = [1, 256], strides = [1, 1]} : vector<4x256xf32> to vector<1x256xf32>
    %456 = vector.broadcast %3 : f32 to vector<1x256xf32>
    %457 = arith.mulf %455, %456 : vector<1x256xf32>
    %458 = vector.extract_strided_slice %434 {offsets = [1, 0], sizes = [1, 256], strides = [1, 1]} : vector<4x256xf32> to vector<1x256xf32>
    %459 = vector.broadcast %7 : f32 to vector<1x256xf32>
    %460 = arith.mulf %458, %459 : vector<1x256xf32>
    %461 = arith.addf %457, %460 : vector<1x256xf32>
    %462 = vector.extract_strided_slice %434 {offsets = [2, 0], sizes = [1, 256], strides = [1, 1]} : vector<4x256xf32> to vector<1x256xf32>
    %463 = vector.broadcast %11 : f32 to vector<1x256xf32>
    %464 = arith.mulf %462, %463 : vector<1x256xf32>
    %465 = arith.addf %461, %464 : vector<1x256xf32>
    %466 = vector.extract_strided_slice %434 {offsets = [3, 0], sizes = [1, 256], strides = [1, 1]} : vector<4x256xf32> to vector<1x256xf32>
    %467 = vector.broadcast %15 : f32 to vector<1x256xf32>
    %468 = arith.mulf %466, %467 : vector<1x256xf32>
    %469 = arith.addf %465, %468 : vector<1x256xf32>
    %c4_i32_109 = arith.constant 4 : i32
    %470 = arith.muli %437, %c4_i32_109 : i32
    %c60_i32_110 = arith.constant 60 : i32
    %471 = arith.addi %c60_i32_110, %470 : i32
    %c0_i32_111 = arith.constant 0 : i32
    %472 = arith.addi %471, %c0_i32_111 : i32
    %473 = arith.index_cast %472 : i32 to index
    %474 = memref.load %arg2[%473] : memref<92xf32, #tpu.memory_space<smem>>
    %475 = arith.addf %19, %474 : f32
    %476 = vector.broadcast %475 : f32 to vector<1x256xf32>
    %477 = arith.addf %469, %476 : vector<1x256xf32>
    %c0_112 = arith.constant 0 : index
    %c0_113 = arith.constant 0 : index
    %478 = vector.load %arg7[%c0_112, %c0_113] : memref<4x256xf32, #tpu.memory_space<vmem>>, vector<1x256xf32>
    tpu.vector_store %arg7[%c0_112, %c0_113], %477 {strides = array<i32>} : memref<4x256xf32, #tpu.memory_space<vmem>>, vector<1x256xf32>,
    %479 = vector.extract_strided_slice %434 {offsets = [0, 0], sizes = [1, 256], strides = [1, 1]} : vector<4x256xf32> to vector<1x256xf32>
    %480 = vector.broadcast %4 : f32 to vector<1x256xf32>
    %481 = arith.mulf %479, %480 : vector<1x256xf32>
    %482 = vector.extract_strided_slice %434 {offsets = [1, 0], sizes = [1, 256], strides = [1, 1]} : vector<4x256xf32> to vector<1x256xf32>
    %483 = vector.broadcast %8 : f32 to vector<1x256xf32>
    %484 = arith.mulf %482, %483 : vector<1x256xf32>
    %485 = arith.addf %481, %484 : vector<1x256xf32>
    %486 = vector.extract_strided_slice %434 {offsets = [2, 0], sizes = [1, 256], strides = [1, 1]} : vector<4x256xf32> to vector<1x256xf32>
    %487 = vector.broadcast %12 : f32 to vector<1x256xf32>
    %488 = arith.mulf %486, %487 : vector<1x256xf32>
    %489 = arith.addf %485, %488 : vector<1x256xf32>
    %490 = vector.extract_strided_slice %434 {offsets = [3, 0], sizes = [1, 256], strides = [1, 1]} : vector<4x256xf32> to vector<1x256xf32>
    %491 = vector.broadcast %16 : f32 to vector<1x256xf32>
    %492 = arith.mulf %490, %491 : vector<1x256xf32>
    %493 = arith.addf %489, %492 : vector<1x256xf32>
    %c4_i32_114 = arith.constant 4 : i32
    %494 = arith.muli %437, %c4_i32_114 : i32
    %c60_i32_115 = arith.constant 60 : i32
    %495 = arith.addi %c60_i32_115, %494 : i32
    %c1_i32_116 = arith.constant 1 : i32
    %496 = arith.addi %495, %c1_i32_116 : i32
    %497 = arith.index_cast %496 : i32 to index
    %498 = memref.load %arg2[%497] : memref<92xf32, #tpu.memory_space<smem>>
    %499 = arith.addf %20, %498 : f32
    %500 = vector.broadcast %499 : f32 to vector<1x256xf32>
    %501 = arith.addf %493, %500 : vector<1x256xf32>
    %c1_117 = arith.constant 1 : index
    %c0_118 = arith.constant 0 : index
    %502 = vector.load %arg7[%c1_117, %c0_118] : memref<4x256xf32, #tpu.memory_space<vmem>>, vector<1x256xf32>
    tpu.vector_store %arg7[%c1_117, %c0_118], %501 {strides = array<i32>} : memref<4x256xf32, #tpu.memory_space<vmem>>, vector<1x256xf32>,
    %503 = vector.extract_strided_slice %434 {offsets = [0, 0], sizes = [1, 256], strides = [1, 1]} : vector<4x256xf32> to vector<1x256xf32>
    %504 = vector.broadcast %5 : f32 to vector<1x256xf32>
    %505 = arith.mulf %503, %504 : vector<1x256xf32>
    %506 = vector.extract_strided_slice %434 {offsets = [1, 0], sizes = [1, 256], strides = [1, 1]} : vector<4x256xf32> to vector<1x256xf32>
    %507 = vector.broadcast %9 : f32 to vector<1x256xf32>
    %508 = arith.mulf %506, %507 : vector<1x256xf32>
    %509 = arith.addf %505, %508 : vector<1x256xf32>
    %510 = vector.extract_strided_slice %434 {offsets = [2, 0], sizes = [1, 256], strides = [1, 1]} : vector<4x256xf32> to vector<1x256xf32>
    %511 = vector.broadcast %13 : f32 to vector<1x256xf32>
    %512 = arith.mulf %510, %511 : vector<1x256xf32>
    %513 = arith.addf %509, %512 : vector<1x256xf32>
    %514 = vector.extract_strided_slice %434 {offsets = [3, 0], sizes = [1, 256], strides = [1, 1]} : vector<4x256xf32> to vector<1x256xf32>
    %515 = vector.broadcast %17 : f32 to vector<1x256xf32>
    %516 = arith.mulf %514, %515 : vector<1x256xf32>
    %517 = arith.addf %513, %516 : vector<1x256xf32>
    %c4_i32_119 = arith.constant 4 : i32
    %518 = arith.muli %437, %c4_i32_119 : i32
    %c60_i32_120 = arith.constant 60 : i32
    %519 = arith.addi %c60_i32_120, %518 : i32
    %c2_i32_121 = arith.constant 2 : i32
    %520 = arith.addi %519, %c2_i32_121 : i32
    %521 = arith.index_cast %520 : i32 to index
    %522 = memref.load %arg2[%521] : memref<92xf32, #tpu.memory_space<smem>>
    %523 = arith.addf %21, %522 : f32
    %524 = vector.broadcast %523 : f32 to vector<1x256xf32>
    %525 = arith.addf %517, %524 : vector<1x256xf32>
    %c2_122 = arith.constant 2 : index
    %c0_123 = arith.constant 0 : index
    %526 = vector.load %arg7[%c2_122, %c0_123] : memref<4x256xf32, #tpu.memory_space<vmem>>, vector<1x256xf32>
    tpu.vector_store %arg7[%c2_122, %c0_123], %525 {strides = array<i32>} : memref<4x256xf32, #tpu.memory_space<vmem>>, vector<1x256xf32>,
    %527 = vector.extract_strided_slice %434 {offsets = [0, 0], sizes = [1, 256], strides = [1, 1]} : vector<4x256xf32> to vector<1x256xf32>
    %528 = vector.broadcast %6 : f32 to vector<1x256xf32>
    %529 = arith.mulf %527, %528 : vector<1x256xf32>
    %530 = vector.extract_strided_slice %434 {offsets = [1, 0], sizes = [1, 256], strides = [1, 1]} : vector<4x256xf32> to vector<1x256xf32>
    %531 = vector.broadcast %10 : f32 to vector<1x256xf32>
    %532 = arith.mulf %530, %531 : vector<1x256xf32>
    %533 = arith.addf %529, %532 : vector<1x256xf32>
    %534 = vector.extract_strided_slice %434 {offsets = [2, 0], sizes = [1, 256], strides = [1, 1]} : vector<4x256xf32> to vector<1x256xf32>
    %535 = vector.broadcast %14 : f32 to vector<1x256xf32>
    %536 = arith.mulf %534, %535 : vector<1x256xf32>
    %537 = arith.addf %533, %536 : vector<1x256xf32>
    %538 = vector.extract_strided_slice %434 {offsets = [3, 0], sizes = [1, 256], strides = [1, 1]} : vector<4x256xf32> to vector<1x256xf32>
    %539 = vector.broadcast %18 : f32 to vector<1x256xf32>
    %540 = arith.mulf %538, %539 : vector<1x256xf32>
    %541 = arith.addf %537, %540 : vector<1x256xf32>
    %c4_i32_124 = arith.constant 4 : i32
    %542 = arith.muli %437, %c4_i32_124 : i32
    %c60_i32_125 = arith.constant 60 : i32
    %543 = arith.addi %c60_i32_125, %542 : i32
    %c3_i32_126 = arith.constant 3 : i32
    %544 = arith.addi %543, %c3_i32_126 : i32
    %545 = arith.index_cast %544 : i32 to index
    %546 = memref.load %arg2[%545] : memref<92xf32, #tpu.memory_space<smem>>
    %547 = arith.addf %22, %546 : f32
    %548 = vector.broadcast %547 : f32 to vector<1x256xf32>
    %549 = arith.addf %541, %548 : vector<1x256xf32>
    %c3_127 = arith.constant 3 : index
    %c0_128 = arith.constant 0 : index
    %550 = vector.load %arg7[%c3_127, %c0_128] : memref<4x256xf32, #tpu.memory_space<vmem>>, vector<1x256xf32>
    tpu.vector_store %arg7[%c3_127, %c0_128], %549 {strides = array<i32>} : memref<4x256xf32, #tpu.memory_space<vmem>>, vector<1x256xf32>,
    %c0_129 = arith.constant 0 : index
    %c0_130 = arith.constant 0 : index
    %551 = vector.load %arg7[%c0_129, %c0_130] : memref<4x256xf32, #tpu.memory_space<vmem>>, vector<4x256xf32>
    %552 = math.tanh %551 : vector<4x256xf32>
    %553 = vector.broadcast %440 : f32 to vector<4x256xf32>
    %554 = arith.mulf %553, %434 : vector<4x256xf32>
    %555 = vector.broadcast %443 : f32 to vector<4x256xf32>
    %556 = arith.mulf %555, %552 : vector<4x256xf32>
    %557 = arith.subf %554, %556 : vector<4x256xf32>
    %cst_131 = arith.constant -1.000000e+00 : f32
    %cst_132 = arith.constant 1.000000e+00 : f32
    %558 = vector.broadcast %cst_131 : f32 to vector<4x256xf32>
    %559 = arith.maximumf %558, %557 : vector<4x256xf32>
    %560 = vector.broadcast %cst_132 : f32 to vector<4x256xf32>
    %561 = arith.minimumf %560, %559 : vector<4x256xf32>
    %562 = vector.broadcast %446 : f32 to vector<4x256xf32>
    %563 = arith.mulf %562, %561 : vector<4x256xf32>
    %564 = vector.broadcast %449 : f32 to vector<4x256xf32>
    %565 = arith.mulf %564, %434 : vector<4x256xf32>
    %566 = arith.addf %563, %565 : vector<4x256xf32>
    %c3_133 = arith.constant 3 : index
    %c0_134 = arith.constant 0 : index
    %c0_135 = arith.constant 0 : index
    %567 = vector.load %arg4[%c3_133, %c0_134, %c0_135] : memref<8x4x256xf32, #tpu.memory_space<vmem>>, vector<1x4x256xf32>
    %568 = vector.shape_cast %567 : vector<1x4x256xf32> to vector<4x256xf32>
    %569 = vector.broadcast %454 : f32 to vector<4x256xf32>
    %570 = arith.mulf %569, %568 : vector<4x256xf32>
    %571 = arith.addf %566, %570 : vector<4x256xf32>
    %c8_i32_136 = arith.constant 8 : i32
    %572 = arith.muli %arg1, %c8_i32_136 : i32
    %c4_i32_137 = arith.constant 4 : i32
    %573 = arith.addi %572, %c4_i32_137 : i32
    %c7_i32_138 = arith.constant 7 : i32
    %574 = arith.subi %c7_i32_138, %573 : i32
    %c0_i32_139 = arith.constant 0 : i32
    %575 = arith.addi %c0_i32_139, %574 : i32
    %576 = arith.index_cast %575 : i32 to index
    %577 = memref.load %arg2[%576] : memref<92xf32, #tpu.memory_space<smem>>
    %c8_i32_140 = arith.constant 8 : i32
    %578 = arith.addi %c8_i32_140, %574 : i32
    %579 = arith.index_cast %578 : i32 to index
    %580 = memref.load %arg2[%579] : memref<92xf32, #tpu.memory_space<smem>>
    %c16_i32_141 = arith.constant 16 : i32
    %581 = arith.addi %c16_i32_141, %574 : i32
    %582 = arith.index_cast %581 : i32 to index
    %583 = memref.load %arg2[%582] : memref<92xf32, #tpu.memory_space<smem>>
    %c24_i32_142 = arith.constant 24 : i32
    %584 = arith.addi %c24_i32_142, %574 : i32
    %585 = arith.index_cast %584 : i32 to index
    %586 = memref.load %arg2[%585] : memref<92xf32, #tpu.memory_space<smem>>
    %c0_i32_143 = arith.constant 0 : i32
    %587 = arith.cmpi sgt, %574, %c0_i32_143 : i32
    %c32_i32_144 = arith.constant 32 : i32
    %588 = arith.addi %c32_i32_144, %574 : i32
    %589 = arith.index_cast %588 : i32 to index
    %590 = memref.load %arg2[%589] : memref<92xf32, #tpu.memory_space<smem>>
    %cst_145 = arith.constant 0.000000e+00 : f32
    %591 = arith.select %587, %590, %cst_145 : f32
    %592 = vector.extract_strided_slice %571 {offsets = [0, 0], sizes = [1, 256], strides = [1, 1]} : vector<4x256xf32> to vector<1x256xf32>
    %593 = vector.broadcast %3 : f32 to vector<1x256xf32>
    %594 = arith.mulf %592, %593 : vector<1x256xf32>
    %595 = vector.extract_strided_slice %571 {offsets = [1, 0], sizes = [1, 256], strides = [1, 1]} : vector<4x256xf32> to vector<1x256xf32>
    %596 = vector.broadcast %7 : f32 to vector<1x256xf32>
    %597 = arith.mulf %595, %596 : vector<1x256xf32>
    %598 = arith.addf %594, %597 : vector<1x256xf32>
    %599 = vector.extract_strided_slice %571 {offsets = [2, 0], sizes = [1, 256], strides = [1, 1]} : vector<4x256xf32> to vector<1x256xf32>
    %600 = vector.broadcast %11 : f32 to vector<1x256xf32>
    %601 = arith.mulf %599, %600 : vector<1x256xf32>
    %602 = arith.addf %598, %601 : vector<1x256xf32>
    %603 = vector.extract_strided_slice %571 {offsets = [3, 0], sizes = [1, 256], strides = [1, 1]} : vector<4x256xf32> to vector<1x256xf32>
    %604 = vector.broadcast %15 : f32 to vector<1x256xf32>
    %605 = arith.mulf %603, %604 : vector<1x256xf32>
    %606 = arith.addf %602, %605 : vector<1x256xf32>
    %c4_i32_146 = arith.constant 4 : i32
    %607 = arith.muli %574, %c4_i32_146 : i32
    %c60_i32_147 = arith.constant 60 : i32
    %608 = arith.addi %c60_i32_147, %607 : i32
    %c0_i32_148 = arith.constant 0 : i32
    %609 = arith.addi %608, %c0_i32_148 : i32
    %610 = arith.index_cast %609 : i32 to index
    %611 = memref.load %arg2[%610] : memref<92xf32, #tpu.memory_space<smem>>
    %612 = arith.addf %19, %611 : f32
    %613 = vector.broadcast %612 : f32 to vector<1x256xf32>
    %614 = arith.addf %606, %613 : vector<1x256xf32>
    %c0_149 = arith.constant 0 : index
    %c0_150 = arith.constant 0 : index
    %615 = vector.load %arg7[%c0_149, %c0_150] : memref<4x256xf32, #tpu.memory_space<vmem>>, vector<1x256xf32>
    tpu.vector_store %arg7[%c0_149, %c0_150], %614 {strides = array<i32>} : memref<4x256xf32, #tpu.memory_space<vmem>>, vector<1x256xf32>,
    %616 = vector.extract_strided_slice %571 {offsets = [0, 0], sizes = [1, 256], strides = [1, 1]} : vector<4x256xf32> to vector<1x256xf32>
    %617 = vector.broadcast %4 : f32 to vector<1x256xf32>
    %618 = arith.mulf %616, %617 : vector<1x256xf32>
    %619 = vector.extract_strided_slice %571 {offsets = [1, 0], sizes = [1, 256], strides = [1, 1]} : vector<4x256xf32> to vector<1x256xf32>
    %620 = vector.broadcast %8 : f32 to vector<1x256xf32>
    %621 = arith.mulf %619, %620 : vector<1x256xf32>
    %622 = arith.addf %618, %621 : vector<1x256xf32>
    %623 = vector.extract_strided_slice %571 {offsets = [2, 0], sizes = [1, 256], strides = [1, 1]} : vector<4x256xf32> to vector<1x256xf32>
    %624 = vector.broadcast %12 : f32 to vector<1x256xf32>
    %625 = arith.mulf %623, %624 : vector<1x256xf32>
    %626 = arith.addf %622, %625 : vector<1x256xf32>
    %627 = vector.extract_strided_slice %571 {offsets = [3, 0], sizes = [1, 256], strides = [1, 1]} : vector<4x256xf32> to vector<1x256xf32>
    %628 = vector.broadcast %16 : f32 to vector<1x256xf32>
    %629 = arith.mulf %627, %628 : vector<1x256xf32>
    %630 = arith.addf %626, %629 : vector<1x256xf32>
    %c4_i32_151 = arith.constant 4 : i32
    %631 = arith.muli %574, %c4_i32_151 : i32
    %c60_i32_152 = arith.constant 60 : i32
    %632 = arith.addi %c60_i32_152, %631 : i32
    %c1_i32_153 = arith.constant 1 : i32
    %633 = arith.addi %632, %c1_i32_153 : i32
    %634 = arith.index_cast %633 : i32 to index
    %635 = memref.load %arg2[%634] : memref<92xf32, #tpu.memory_space<smem>>
    %636 = arith.addf %20, %635 : f32
    %637 = vector.broadcast %636 : f32 to vector<1x256xf32>
    %638 = arith.addf %630, %637 : vector<1x256xf32>
    %c1_154 = arith.constant 1 : index
    %c0_155 = arith.constant 0 : index
    %639 = vector.load %arg7[%c1_154, %c0_155] : memref<4x256xf32, #tpu.memory_space<vmem>>, vector<1x256xf32>
    tpu.vector_store %arg7[%c1_154, %c0_155], %638 {strides = array<i32>} : memref<4x256xf32, #tpu.memory_space<vmem>>, vector<1x256xf32>,
    %640 = vector.extract_strided_slice %571 {offsets = [0, 0], sizes = [1, 256], strides = [1, 1]} : vector<4x256xf32> to vector<1x256xf32>
    %641 = vector.broadcast %5 : f32 to vector<1x256xf32>
    %642 = arith.mulf %640, %641 : vector<1x256xf32>
    %643 = vector.extract_strided_slice %571 {offsets = [1, 0], sizes = [1, 256], strides = [1, 1]} : vector<4x256xf32> to vector<1x256xf32>
    %644 = vector.broadcast %9 : f32 to vector<1x256xf32>
    %645 = arith.mulf %643, %644 : vector<1x256xf32>
    %646 = arith.addf %642, %645 : vector<1x256xf32>
    %647 = vector.extract_strided_slice %571 {offsets = [2, 0], sizes = [1, 256], strides = [1, 1]} : vector<4x256xf32> to vector<1x256xf32>
    %648 = vector.broadcast %13 : f32 to vector<1x256xf32>
    %649 = arith.mulf %647, %648 : vector<1x256xf32>
    %650 = arith.addf %646, %649 : vector<1x256xf32>
    %651 = vector.extract_strided_slice %571 {offsets = [3, 0], sizes = [1, 256], strides = [1, 1]} : vector<4x256xf32> to vector<1x256xf32>
    %652 = vector.broadcast %17 : f32 to vector<1x256xf32>
    %653 = arith.mulf %651, %652 : vector<1x256xf32>
    %654 = arith.addf %650, %653 : vector<1x256xf32>
    %c4_i32_156 = arith.constant 4 : i32
    %655 = arith.muli %574, %c4_i32_156 : i32
    %c60_i32_157 = arith.constant 60 : i32
    %656 = arith.addi %c60_i32_157, %655 : i32
    %c2_i32_158 = arith.constant 2 : i32
    %657 = arith.addi %656, %c2_i32_158 : i32
    %658 = arith.index_cast %657 : i32 to index
    %659 = memref.load %arg2[%658] : memref<92xf32, #tpu.memory_space<smem>>
    %660 = arith.addf %21, %659 : f32
    %661 = vector.broadcast %660 : f32 to vector<1x256xf32>
    %662 = arith.addf %654, %661 : vector<1x256xf32>
    %c2_159 = arith.constant 2 : index
    %c0_160 = arith.constant 0 : index
    %663 = vector.load %arg7[%c2_159, %c0_160] : memref<4x256xf32, #tpu.memory_space<vmem>>, vector<1x256xf32>
    tpu.vector_store %arg7[%c2_159, %c0_160], %662 {strides = array<i32>} : memref<4x256xf32, #tpu.memory_space<vmem>>, vector<1x256xf32>,
    %664 = vector.extract_strided_slice %571 {offsets = [0, 0], sizes = [1, 256], strides = [1, 1]} : vector<4x256xf32> to vector<1x256xf32>
    %665 = vector.broadcast %6 : f32 to vector<1x256xf32>
    %666 = arith.mulf %664, %665 : vector<1x256xf32>
    %667 = vector.extract_strided_slice %571 {offsets = [1, 0], sizes = [1, 256], strides = [1, 1]} : vector<4x256xf32> to vector<1x256xf32>
    %668 = vector.broadcast %10 : f32 to vector<1x256xf32>
    %669 = arith.mulf %667, %668 : vector<1x256xf32>
    %670 = arith.addf %666, %669 : vector<1x256xf32>
    %671 = vector.extract_strided_slice %571 {offsets = [2, 0], sizes = [1, 256], strides = [1, 1]} : vector<4x256xf32> to vector<1x256xf32>
    %672 = vector.broadcast %14 : f32 to vector<1x256xf32>
    %673 = arith.mulf %671, %672 : vector<1x256xf32>
    %674 = arith.addf %670, %673 : vector<1x256xf32>
    %675 = vector.extract_strided_slice %571 {offsets = [3, 0], sizes = [1, 256], strides = [1, 1]} : vector<4x256xf32> to vector<1x256xf32>
    %676 = vector.broadcast %18 : f32 to vector<1x256xf32>
    %677 = arith.mulf %675, %676 : vector<1x256xf32>
    %678 = arith.addf %674, %677 : vector<1x256xf32>
    %c4_i32_161 = arith.constant 4 : i32
    %679 = arith.muli %574, %c4_i32_161 : i32
    %c60_i32_162 = arith.constant 60 : i32
    %680 = arith.addi %c60_i32_162, %679 : i32
    %c3_i32_163 = arith.constant 3 : i32
    %681 = arith.addi %680, %c3_i32_163 : i32
    %682 = arith.index_cast %681 : i32 to index
    %683 = memref.load %arg2[%682] : memref<92xf32, #tpu.memory_space<smem>>
    %684 = arith.addf %22, %683 : f32
    %685 = vector.broadcast %684 : f32 to vector<1x256xf32>
    %686 = arith.addf %678, %685 : vector<1x256xf32>
    %c3_164 = arith.constant 3 : index
    %c0_165 = arith.constant 0 : index
    %687 = vector.load %arg7[%c3_164, %c0_165] : memref<4x256xf32, #tpu.memory_space<vmem>>, vector<1x256xf32>
    tpu.vector_store %arg7[%c3_164, %c0_165], %686 {strides = array<i32>} : memref<4x256xf32, #tpu.memory_space<vmem>>, vector<1x256xf32>,
    %c0_166 = arith.constant 0 : index
    %c0_167 = arith.constant 0 : index
    %688 = vector.load %arg7[%c0_166, %c0_167] : memref<4x256xf32, #tpu.memory_space<vmem>>, vector<4x256xf32>
    %689 = math.tanh %688 : vector<4x256xf32>
    %690 = vector.broadcast %577 : f32 to vector<4x256xf32>
    %691 = arith.mulf %690, %571 : vector<4x256xf32>
    %692 = vector.broadcast %580 : f32 to vector<4x256xf32>
    %693 = arith.mulf %692, %689 : vector<4x256xf32>
    %694 = arith.subf %691, %693 : vector<4x256xf32>
    %cst_168 = arith.constant -1.000000e+00 : f32
    %cst_169 = arith.constant 1.000000e+00 : f32
    %695 = vector.broadcast %cst_168 : f32 to vector<4x256xf32>
    %696 = arith.maximumf %695, %694 : vector<4x256xf32>
    %697 = vector.broadcast %cst_169 : f32 to vector<4x256xf32>
    %698 = arith.minimumf %697, %696 : vector<4x256xf32>
    %699 = vector.broadcast %583 : f32 to vector<4x256xf32>
    %700 = arith.mulf %699, %698 : vector<4x256xf32>
    %701 = vector.broadcast %586 : f32 to vector<4x256xf32>
    %702 = arith.mulf %701, %571 : vector<4x256xf32>
    %703 = arith.addf %700, %702 : vector<4x256xf32>
    %c4 = arith.constant 4 : index
    %c0_170 = arith.constant 0 : index
    %c0_171 = arith.constant 0 : index
    %704 = vector.load %arg4[%c4, %c0_170, %c0_171] : memref<8x4x256xf32, #tpu.memory_space<vmem>>, vector<1x4x256xf32>
    %705 = vector.shape_cast %704 : vector<1x4x256xf32> to vector<4x256xf32>
    %706 = vector.broadcast %591 : f32 to vector<4x256xf32>
    %707 = arith.mulf %706, %705 : vector<4x256xf32>
    %708 = arith.addf %703, %707 : vector<4x256xf32>
    %c8_i32_172 = arith.constant 8 : i32
    %709 = arith.muli %arg1, %c8_i32_172 : i32
    %c5_i32 = arith.constant 5 : i32
    %710 = arith.addi %709, %c5_i32 : i32
    %c7_i32_173 = arith.constant 7 : i32
    %711 = arith.subi %c7_i32_173, %710 : i32
    %c0_i32_174 = arith.constant 0 : i32
    %712 = arith.addi %c0_i32_174, %711 : i32
    %713 = arith.index_cast %712 : i32 to index
    %714 = memref.load %arg2[%713] : memref<92xf32, #tpu.memory_space<smem>>
    %c8_i32_175 = arith.constant 8 : i32
    %715 = arith.addi %c8_i32_175, %711 : i32
    %716 = arith.index_cast %715 : i32 to index
    %717 = memref.load %arg2[%716] : memref<92xf32, #tpu.memory_space<smem>>
    %c16_i32_176 = arith.constant 16 : i32
    %718 = arith.addi %c16_i32_176, %711 : i32
    %719 = arith.index_cast %718 : i32 to index
    %720 = memref.load %arg2[%719] : memref<92xf32, #tpu.memory_space<smem>>
    %c24_i32_177 = arith.constant 24 : i32
    %721 = arith.addi %c24_i32_177, %711 : i32
    %722 = arith.index_cast %721 : i32 to index
    %723 = memref.load %arg2[%722] : memref<92xf32, #tpu.memory_space<smem>>
    %c0_i32_178 = arith.constant 0 : i32
    %724 = arith.cmpi sgt, %711, %c0_i32_178 : i32
    %c32_i32_179 = arith.constant 32 : i32
    %725 = arith.addi %c32_i32_179, %711 : i32
    %726 = arith.index_cast %725 : i32 to index
    %727 = memref.load %arg2[%726] : memref<92xf32, #tpu.memory_space<smem>>
    %cst_180 = arith.constant 0.000000e+00 : f32
    %728 = arith.select %724, %727, %cst_180 : f32
    %729 = vector.extract_strided_slice %708 {offsets = [0, 0], sizes = [1, 256], strides = [1, 1]} : vector<4x256xf32> to vector<1x256xf32>
    %730 = vector.broadcast %3 : f32 to vector<1x256xf32>
    %731 = arith.mulf %729, %730 : vector<1x256xf32>
    %732 = vector.extract_strided_slice %708 {offsets = [1, 0], sizes = [1, 256], strides = [1, 1]} : vector<4x256xf32> to vector<1x256xf32>
    %733 = vector.broadcast %7 : f32 to vector<1x256xf32>
    %734 = arith.mulf %732, %733 : vector<1x256xf32>
    %735 = arith.addf %731, %734 : vector<1x256xf32>
    %736 = vector.extract_strided_slice %708 {offsets = [2, 0], sizes = [1, 256], strides = [1, 1]} : vector<4x256xf32> to vector<1x256xf32>
    %737 = vector.broadcast %11 : f32 to vector<1x256xf32>
    %738 = arith.mulf %736, %737 : vector<1x256xf32>
    %739 = arith.addf %735, %738 : vector<1x256xf32>
    %740 = vector.extract_strided_slice %708 {offsets = [3, 0], sizes = [1, 256], strides = [1, 1]} : vector<4x256xf32> to vector<1x256xf32>
    %741 = vector.broadcast %15 : f32 to vector<1x256xf32>
    %742 = arith.mulf %740, %741 : vector<1x256xf32>
    %743 = arith.addf %739, %742 : vector<1x256xf32>
    %c4_i32_181 = arith.constant 4 : i32
    %744 = arith.muli %711, %c4_i32_181 : i32
    %c60_i32_182 = arith.constant 60 : i32
    %745 = arith.addi %c60_i32_182, %744 : i32
    %c0_i32_183 = arith.constant 0 : i32
    %746 = arith.addi %745, %c0_i32_183 : i32
    %747 = arith.index_cast %746 : i32 to index
    %748 = memref.load %arg2[%747] : memref<92xf32, #tpu.memory_space<smem>>
    %749 = arith.addf %19, %748 : f32
    %750 = vector.broadcast %749 : f32 to vector<1x256xf32>
    %751 = arith.addf %743, %750 : vector<1x256xf32>
    %c0_184 = arith.constant 0 : index
    %c0_185 = arith.constant 0 : index
    %752 = vector.load %arg7[%c0_184, %c0_185] : memref<4x256xf32, #tpu.memory_space<vmem>>, vector<1x256xf32>
    tpu.vector_store %arg7[%c0_184, %c0_185], %751 {strides = array<i32>} : memref<4x256xf32, #tpu.memory_space<vmem>>, vector<1x256xf32>,
    %753 = vector.extract_strided_slice %708 {offsets = [0, 0], sizes = [1, 256], strides = [1, 1]} : vector<4x256xf32> to vector<1x256xf32>
    %754 = vector.broadcast %4 : f32 to vector<1x256xf32>
    %755 = arith.mulf %753, %754 : vector<1x256xf32>
    %756 = vector.extract_strided_slice %708 {offsets = [1, 0], sizes = [1, 256], strides = [1, 1]} : vector<4x256xf32> to vector<1x256xf32>
    %757 = vector.broadcast %8 : f32 to vector<1x256xf32>
    %758 = arith.mulf %756, %757 : vector<1x256xf32>
    %759 = arith.addf %755, %758 : vector<1x256xf32>
    %760 = vector.extract_strided_slice %708 {offsets = [2, 0], sizes = [1, 256], strides = [1, 1]} : vector<4x256xf32> to vector<1x256xf32>
    %761 = vector.broadcast %12 : f32 to vector<1x256xf32>
    %762 = arith.mulf %760, %761 : vector<1x256xf32>
    %763 = arith.addf %759, %762 : vector<1x256xf32>
    %764 = vector.extract_strided_slice %708 {offsets = [3, 0], sizes = [1, 256], strides = [1, 1]} : vector<4x256xf32> to vector<1x256xf32>
    %765 = vector.broadcast %16 : f32 to vector<1x256xf32>
    %766 = arith.mulf %764, %765 : vector<1x256xf32>
    %767 = arith.addf %763, %766 : vector<1x256xf32>
    %c4_i32_186 = arith.constant 4 : i32
    %768 = arith.muli %711, %c4_i32_186 : i32
    %c60_i32_187 = arith.constant 60 : i32
    %769 = arith.addi %c60_i32_187, %768 : i32
    %c1_i32_188 = arith.constant 1 : i32
    %770 = arith.addi %769, %c1_i32_188 : i32
    %771 = arith.index_cast %770 : i32 to index
    %772 = memref.load %arg2[%771] : memref<92xf32, #tpu.memory_space<smem>>
    %773 = arith.addf %20, %772 : f32
    %774 = vector.broadcast %773 : f32 to vector<1x256xf32>
    %775 = arith.addf %767, %774 : vector<1x256xf32>
    %c1_189 = arith.constant 1 : index
    %c0_190 = arith.constant 0 : index
    %776 = vector.load %arg7[%c1_189, %c0_190] : memref<4x256xf32, #tpu.memory_space<vmem>>, vector<1x256xf32>
    tpu.vector_store %arg7[%c1_189, %c0_190], %775 {strides = array<i32>} : memref<4x256xf32, #tpu.memory_space<vmem>>, vector<1x256xf32>,
    %777 = vector.extract_strided_slice %708 {offsets = [0, 0], sizes = [1, 256], strides = [1, 1]} : vector<4x256xf32> to vector<1x256xf32>
    %778 = vector.broadcast %5 : f32 to vector<1x256xf32>
    %779 = arith.mulf %777, %778 : vector<1x256xf32>
    %780 = vector.extract_strided_slice %708 {offsets = [1, 0], sizes = [1, 256], strides = [1, 1]} : vector<4x256xf32> to vector<1x256xf32>
    %781 = vector.broadcast %9 : f32 to vector<1x256xf32>
    %782 = arith.mulf %780, %781 : vector<1x256xf32>
    %783 = arith.addf %779, %782 : vector<1x256xf32>
    %784 = vector.extract_strided_slice %708 {offsets = [2, 0], sizes = [1, 256], strides = [1, 1]} : vector<4x256xf32> to vector<1x256xf32>
    %785 = vector.broadcast %13 : f32 to vector<1x256xf32>
    %786 = arith.mulf %784, %785 : vector<1x256xf32>
    %787 = arith.addf %783, %786 : vector<1x256xf32>
    %788 = vector.extract_strided_slice %708 {offsets = [3, 0], sizes = [1, 256], strides = [1, 1]} : vector<4x256xf32> to vector<1x256xf32>
    %789 = vector.broadcast %17 : f32 to vector<1x256xf32>
    %790 = arith.mulf %788, %789 : vector<1x256xf32>
    %791 = arith.addf %787, %790 : vector<1x256xf32>
    %c4_i32_191 = arith.constant 4 : i32
    %792 = arith.muli %711, %c4_i32_191 : i32
    %c60_i32_192 = arith.constant 60 : i32
    %793 = arith.addi %c60_i32_192, %792 : i32
    %c2_i32_193 = arith.constant 2 : i32
    %794 = arith.addi %793, %c2_i32_193 : i32
    %795 = arith.index_cast %794 : i32 to index
    %796 = memref.load %arg2[%795] : memref<92xf32, #tpu.memory_space<smem>>
    %797 = arith.addf %21, %796 : f32
    %798 = vector.broadcast %797 : f32 to vector<1x256xf32>
    %799 = arith.addf %791, %798 : vector<1x256xf32>
    %c2_194 = arith.constant 2 : index
    %c0_195 = arith.constant 0 : index
    %800 = vector.load %arg7[%c2_194, %c0_195] : memref<4x256xf32, #tpu.memory_space<vmem>>, vector<1x256xf32>
    tpu.vector_store %arg7[%c2_194, %c0_195], %799 {strides = array<i32>} : memref<4x256xf32, #tpu.memory_space<vmem>>, vector<1x256xf32>,
    %801 = vector.extract_strided_slice %708 {offsets = [0, 0], sizes = [1, 256], strides = [1, 1]} : vector<4x256xf32> to vector<1x256xf32>
    %802 = vector.broadcast %6 : f32 to vector<1x256xf32>
    %803 = arith.mulf %801, %802 : vector<1x256xf32>
    %804 = vector.extract_strided_slice %708 {offsets = [1, 0], sizes = [1, 256], strides = [1, 1]} : vector<4x256xf32> to vector<1x256xf32>
    %805 = vector.broadcast %10 : f32 to vector<1x256xf32>
    %806 = arith.mulf %804, %805 : vector<1x256xf32>
    %807 = arith.addf %803, %806 : vector<1x256xf32>
    %808 = vector.extract_strided_slice %708 {offsets = [2, 0], sizes = [1, 256], strides = [1, 1]} : vector<4x256xf32> to vector<1x256xf32>
    %809 = vector.broadcast %14 : f32 to vector<1x256xf32>
    %810 = arith.mulf %808, %809 : vector<1x256xf32>
    %811 = arith.addf %807, %810 : vector<1x256xf32>
    %812 = vector.extract_strided_slice %708 {offsets = [3, 0], sizes = [1, 256], strides = [1, 1]} : vector<4x256xf32> to vector<1x256xf32>
    %813 = vector.broadcast %18 : f32 to vector<1x256xf32>
    %814 = arith.mulf %812, %813 : vector<1x256xf32>
    %815 = arith.addf %811, %814 : vector<1x256xf32>
    %c4_i32_196 = arith.constant 4 : i32
    %816 = arith.muli %711, %c4_i32_196 : i32
    %c60_i32_197 = arith.constant 60 : i32
    %817 = arith.addi %c60_i32_197, %816 : i32
    %c3_i32_198 = arith.constant 3 : i32
    %818 = arith.addi %817, %c3_i32_198 : i32
    %819 = arith.index_cast %818 : i32 to index
    %820 = memref.load %arg2[%819] : memref<92xf32, #tpu.memory_space<smem>>
    %821 = arith.addf %22, %820 : f32
    %822 = vector.broadcast %821 : f32 to vector<1x256xf32>
    %823 = arith.addf %815, %822 : vector<1x256xf32>
    %c3_199 = arith.constant 3 : index
    %c0_200 = arith.constant 0 : index
    %824 = vector.load %arg7[%c3_199, %c0_200] : memref<4x256xf32, #tpu.memory_space<vmem>>, vector<1x256xf32>
    tpu.vector_store %arg7[%c3_199, %c0_200], %823 {strides = array<i32>} : memref<4x256xf32, #tpu.memory_space<vmem>>, vector<1x256xf32>,
    %c0_201 = arith.constant 0 : index
    %c0_202 = arith.constant 0 : index
    %825 = vector.load %arg7[%c0_201, %c0_202] : memref<4x256xf32, #tpu.memory_space<vmem>>, vector<4x256xf32>
    %826 = math.tanh %825 : vector<4x256xf32>
    %827 = vector.broadcast %714 : f32 to vector<4x256xf32>
    %828 = arith.mulf %827, %708 : vector<4x256xf32>
    %829 = vector.broadcast %717 : f32 to vector<4x256xf32>
    %830 = arith.mulf %829, %826 : vector<4x256xf32>
    %831 = arith.subf %828, %830 : vector<4x256xf32>
    %cst_203 = arith.constant -1.000000e+00 : f32
    %cst_204 = arith.constant 1.000000e+00 : f32
    %832 = vector.broadcast %cst_203 : f32 to vector<4x256xf32>
    %833 = arith.maximumf %832, %831 : vector<4x256xf32>
    %834 = vector.broadcast %cst_204 : f32 to vector<4x256xf32>
    %835 = arith.minimumf %834, %833 : vector<4x256xf32>
    %836 = vector.broadcast %720 : f32 to vector<4x256xf32>
    %837 = arith.mulf %836, %835 : vector<4x256xf32>
    %838 = vector.broadcast %723 : f32 to vector<4x256xf32>
    %839 = arith.mulf %838, %708 : vector<4x256xf32>
    %840 = arith.addf %837, %839 : vector<4x256xf32>
    %c5 = arith.constant 5 : index
    %c0_205 = arith.constant 0 : index
    %c0_206 = arith.constant 0 : index
    %841 = vector.load %arg4[%c5, %c0_205, %c0_206] : memref<8x4x256xf32, #tpu.memory_space<vmem>>, vector<1x4x256xf32>
    %842 = vector.shape_cast %841 : vector<1x4x256xf32> to vector<4x256xf32>
    %843 = vector.broadcast %728 : f32 to vector<4x256xf32>
    %844 = arith.mulf %843, %842 : vector<4x256xf32>
    %845 = arith.addf %840, %844 : vector<4x256xf32>
    %c8_i32_207 = arith.constant 8 : i32
    %846 = arith.muli %arg1, %c8_i32_207 : i32
    %c6_i32 = arith.constant 6 : i32
    %847 = arith.addi %846, %c6_i32 : i32
    %c7_i32_208 = arith.constant 7 : i32
    %848 = arith.subi %c7_i32_208, %847 : i32
    %c0_i32_209 = arith.constant 0 : i32
    %849 = arith.addi %c0_i32_209, %848 : i32
    %850 = arith.index_cast %849 : i32 to index
    %851 = memref.load %arg2[%850] : memref<92xf32, #tpu.memory_space<smem>>
    %c8_i32_210 = arith.constant 8 : i32
    %852 = arith.addi %c8_i32_210, %848 : i32
    %853 = arith.index_cast %852 : i32 to index
    %854 = memref.load %arg2[%853] : memref<92xf32, #tpu.memory_space<smem>>
    %c16_i32_211 = arith.constant 16 : i32
    %855 = arith.addi %c16_i32_211, %848 : i32
    %856 = arith.index_cast %855 : i32 to index
    %857 = memref.load %arg2[%856] : memref<92xf32, #tpu.memory_space<smem>>
    %c24_i32_212 = arith.constant 24 : i32
    %858 = arith.addi %c24_i32_212, %848 : i32
    %859 = arith.index_cast %858 : i32 to index
    %860 = memref.load %arg2[%859] : memref<92xf32, #tpu.memory_space<smem>>
    %c0_i32_213 = arith.constant 0 : i32
    %861 = arith.cmpi sgt, %848, %c0_i32_213 : i32
    %c32_i32_214 = arith.constant 32 : i32
    %862 = arith.addi %c32_i32_214, %848 : i32
    %863 = arith.index_cast %862 : i32 to index
    %864 = memref.load %arg2[%863] : memref<92xf32, #tpu.memory_space<smem>>
    %cst_215 = arith.constant 0.000000e+00 : f32
    %865 = arith.select %861, %864, %cst_215 : f32
    %866 = vector.extract_strided_slice %845 {offsets = [0, 0], sizes = [1, 256], strides = [1, 1]} : vector<4x256xf32> to vector<1x256xf32>
    %867 = vector.broadcast %3 : f32 to vector<1x256xf32>
    %868 = arith.mulf %866, %867 : vector<1x256xf32>
    %869 = vector.extract_strided_slice %845 {offsets = [1, 0], sizes = [1, 256], strides = [1, 1]} : vector<4x256xf32> to vector<1x256xf32>
    %870 = vector.broadcast %7 : f32 to vector<1x256xf32>
    %871 = arith.mulf %869, %870 : vector<1x256xf32>
    %872 = arith.addf %868, %871 : vector<1x256xf32>
    %873 = vector.extract_strided_slice %845 {offsets = [2, 0], sizes = [1, 256], strides = [1, 1]} : vector<4x256xf32> to vector<1x256xf32>
    %874 = vector.broadcast %11 : f32 to vector<1x256xf32>
    %875 = arith.mulf %873, %874 : vector<1x256xf32>
    %876 = arith.addf %872, %875 : vector<1x256xf32>
    %877 = vector.extract_strided_slice %845 {offsets = [3, 0], sizes = [1, 256], strides = [1, 1]} : vector<4x256xf32> to vector<1x256xf32>
    %878 = vector.broadcast %15 : f32 to vector<1x256xf32>
    %879 = arith.mulf %877, %878 : vector<1x256xf32>
    %880 = arith.addf %876, %879 : vector<1x256xf32>
    %c4_i32_216 = arith.constant 4 : i32
    %881 = arith.muli %848, %c4_i32_216 : i32
    %c60_i32_217 = arith.constant 60 : i32
    %882 = arith.addi %c60_i32_217, %881 : i32
    %c0_i32_218 = arith.constant 0 : i32
    %883 = arith.addi %882, %c0_i32_218 : i32
    %884 = arith.index_cast %883 : i32 to index
    %885 = memref.load %arg2[%884] : memref<92xf32, #tpu.memory_space<smem>>
    %886 = arith.addf %19, %885 : f32
    %887 = vector.broadcast %886 : f32 to vector<1x256xf32>
    %888 = arith.addf %880, %887 : vector<1x256xf32>
    %c0_219 = arith.constant 0 : index
    %c0_220 = arith.constant 0 : index
    %889 = vector.load %arg7[%c0_219, %c0_220] : memref<4x256xf32, #tpu.memory_space<vmem>>, vector<1x256xf32>
    tpu.vector_store %arg7[%c0_219, %c0_220], %888 {strides = array<i32>} : memref<4x256xf32, #tpu.memory_space<vmem>>, vector<1x256xf32>,
    %890 = vector.extract_strided_slice %845 {offsets = [0, 0], sizes = [1, 256], strides = [1, 1]} : vector<4x256xf32> to vector<1x256xf32>
    %891 = vector.broadcast %4 : f32 to vector<1x256xf32>
    %892 = arith.mulf %890, %891 : vector<1x256xf32>
    %893 = vector.extract_strided_slice %845 {offsets = [1, 0], sizes = [1, 256], strides = [1, 1]} : vector<4x256xf32> to vector<1x256xf32>
    %894 = vector.broadcast %8 : f32 to vector<1x256xf32>
    %895 = arith.mulf %893, %894 : vector<1x256xf32>
    %896 = arith.addf %892, %895 : vector<1x256xf32>
    %897 = vector.extract_strided_slice %845 {offsets = [2, 0], sizes = [1, 256], strides = [1, 1]} : vector<4x256xf32> to vector<1x256xf32>
    %898 = vector.broadcast %12 : f32 to vector<1x256xf32>
    %899 = arith.mulf %897, %898 : vector<1x256xf32>
    %900 = arith.addf %896, %899 : vector<1x256xf32>
    %901 = vector.extract_strided_slice %845 {offsets = [3, 0], sizes = [1, 256], strides = [1, 1]} : vector<4x256xf32> to vector<1x256xf32>
    %902 = vector.broadcast %16 : f32 to vector<1x256xf32>
    %903 = arith.mulf %901, %902 : vector<1x256xf32>
    %904 = arith.addf %900, %903 : vector<1x256xf32>
    %c4_i32_221 = arith.constant 4 : i32
    %905 = arith.muli %848, %c4_i32_221 : i32
    %c60_i32_222 = arith.constant 60 : i32
    %906 = arith.addi %c60_i32_222, %905 : i32
    %c1_i32_223 = arith.constant 1 : i32
    %907 = arith.addi %906, %c1_i32_223 : i32
    %908 = arith.index_cast %907 : i32 to index
    %909 = memref.load %arg2[%908] : memref<92xf32, #tpu.memory_space<smem>>
    %910 = arith.addf %20, %909 : f32
    %911 = vector.broadcast %910 : f32 to vector<1x256xf32>
    %912 = arith.addf %904, %911 : vector<1x256xf32>
    %c1_224 = arith.constant 1 : index
    %c0_225 = arith.constant 0 : index
    %913 = vector.load %arg7[%c1_224, %c0_225] : memref<4x256xf32, #tpu.memory_space<vmem>>, vector<1x256xf32>
    tpu.vector_store %arg7[%c1_224, %c0_225], %912 {strides = array<i32>} : memref<4x256xf32, #tpu.memory_space<vmem>>, vector<1x256xf32>,
    %914 = vector.extract_strided_slice %845 {offsets = [0, 0], sizes = [1, 256], strides = [1, 1]} : vector<4x256xf32> to vector<1x256xf32>
    %915 = vector.broadcast %5 : f32 to vector<1x256xf32>
    %916 = arith.mulf %914, %915 : vector<1x256xf32>
    %917 = vector.extract_strided_slice %845 {offsets = [1, 0], sizes = [1, 256], strides = [1, 1]} : vector<4x256xf32> to vector<1x256xf32>
    %918 = vector.broadcast %9 : f32 to vector<1x256xf32>
    %919 = arith.mulf %917, %918 : vector<1x256xf32>
    %920 = arith.addf %916, %919 : vector<1x256xf32>
    %921 = vector.extract_strided_slice %845 {offsets = [2, 0], sizes = [1, 256], strides = [1, 1]} : vector<4x256xf32> to vector<1x256xf32>
    %922 = vector.broadcast %13 : f32 to vector<1x256xf32>
    %923 = arith.mulf %921, %922 : vector<1x256xf32>
    %924 = arith.addf %920, %923 : vector<1x256xf32>
    %925 = vector.extract_strided_slice %845 {offsets = [3, 0], sizes = [1, 256], strides = [1, 1]} : vector<4x256xf32> to vector<1x256xf32>
    %926 = vector.broadcast %17 : f32 to vector<1x256xf32>
    %927 = arith.mulf %925, %926 : vector<1x256xf32>
    %928 = arith.addf %924, %927 : vector<1x256xf32>
    %c4_i32_226 = arith.constant 4 : i32
    %929 = arith.muli %848, %c4_i32_226 : i32
    %c60_i32_227 = arith.constant 60 : i32
    %930 = arith.addi %c60_i32_227, %929 : i32
    %c2_i32_228 = arith.constant 2 : i32
    %931 = arith.addi %930, %c2_i32_228 : i32
    %932 = arith.index_cast %931 : i32 to index
    %933 = memref.load %arg2[%932] : memref<92xf32, #tpu.memory_space<smem>>
    %934 = arith.addf %21, %933 : f32
    %935 = vector.broadcast %934 : f32 to vector<1x256xf32>
    %936 = arith.addf %928, %935 : vector<1x256xf32>
    %c2_229 = arith.constant 2 : index
    %c0_230 = arith.constant 0 : index
    %937 = vector.load %arg7[%c2_229, %c0_230] : memref<4x256xf32, #tpu.memory_space<vmem>>, vector<1x256xf32>
    tpu.vector_store %arg7[%c2_229, %c0_230], %936 {strides = array<i32>} : memref<4x256xf32, #tpu.memory_space<vmem>>, vector<1x256xf32>,
    %938 = vector.extract_strided_slice %845 {offsets = [0, 0], sizes = [1, 256], strides = [1, 1]} : vector<4x256xf32> to vector<1x256xf32>
    %939 = vector.broadcast %6 : f32 to vector<1x256xf32>
    %940 = arith.mulf %938, %939 : vector<1x256xf32>
    %941 = vector.extract_strided_slice %845 {offsets = [1, 0], sizes = [1, 256], strides = [1, 1]} : vector<4x256xf32> to vector<1x256xf32>
    %942 = vector.broadcast %10 : f32 to vector<1x256xf32>
    %943 = arith.mulf %941, %942 : vector<1x256xf32>
    %944 = arith.addf %940, %943 : vector<1x256xf32>
    %945 = vector.extract_strided_slice %845 {offsets = [2, 0], sizes = [1, 256], strides = [1, 1]} : vector<4x256xf32> to vector<1x256xf32>
    %946 = vector.broadcast %14 : f32 to vector<1x256xf32>
    %947 = arith.mulf %945, %946 : vector<1x256xf32>
    %948 = arith.addf %944, %947 : vector<1x256xf32>
    %949 = vector.extract_strided_slice %845 {offsets = [3, 0], sizes = [1, 256], strides = [1, 1]} : vector<4x256xf32> to vector<1x256xf32>
    %950 = vector.broadcast %18 : f32 to vector<1x256xf32>
    %951 = arith.mulf %949, %950 : vector<1x256xf32>
    %952 = arith.addf %948, %951 : vector<1x256xf32>
    %c4_i32_231 = arith.constant 4 : i32
    %953 = arith.muli %848, %c4_i32_231 : i32
    %c60_i32_232 = arith.constant 60 : i32
    %954 = arith.addi %c60_i32_232, %953 : i32
    %c3_i32_233 = arith.constant 3 : i32
    %955 = arith.addi %954, %c3_i32_233 : i32
    %956 = arith.index_cast %955 : i32 to index
    %957 = memref.load %arg2[%956] : memref<92xf32, #tpu.memory_space<smem>>
    %958 = arith.addf %22, %957 : f32
    %959 = vector.broadcast %958 : f32 to vector<1x256xf32>
    %960 = arith.addf %952, %959 : vector<1x256xf32>
    %c3_234 = arith.constant 3 : index
    %c0_235 = arith.constant 0 : index
    %961 = vector.load %arg7[%c3_234, %c0_235] : memref<4x256xf32, #tpu.memory_space<vmem>>, vector<1x256xf32>
    tpu.vector_store %arg7[%c3_234, %c0_235], %960 {strides = array<i32>} : memref<4x256xf32, #tpu.memory_space<vmem>>, vector<1x256xf32>,
    %c0_236 = arith.constant 0 : index
    %c0_237 = arith.constant 0 : index
    %962 = vector.load %arg7[%c0_236, %c0_237] : memref<4x256xf32, #tpu.memory_space<vmem>>, vector<4x256xf32>
    %963 = math.tanh %962 : vector<4x256xf32>
    %964 = vector.broadcast %851 : f32 to vector<4x256xf32>
    %965 = arith.mulf %964, %845 : vector<4x256xf32>
    %966 = vector.broadcast %854 : f32 to vector<4x256xf32>
    %967 = arith.mulf %966, %963 : vector<4x256xf32>
    %968 = arith.subf %965, %967 : vector<4x256xf32>
    %cst_238 = arith.constant -1.000000e+00 : f32
    %cst_239 = arith.constant 1.000000e+00 : f32
    %969 = vector.broadcast %cst_238 : f32 to vector<4x256xf32>
    %970 = arith.maximumf %969, %968 : vector<4x256xf32>
    %971 = vector.broadcast %cst_239 : f32 to vector<4x256xf32>
    %972 = arith.minimumf %971, %970 : vector<4x256xf32>
    %973 = vector.broadcast %857 : f32 to vector<4x256xf32>
    %974 = arith.mulf %973, %972 : vector<4x256xf32>
    %975 = vector.broadcast %860 : f32 to vector<4x256xf32>
    %976 = arith.mulf %975, %845 : vector<4x256xf32>
    %977 = arith.addf %974, %976 : vector<4x256xf32>
    %c6 = arith.constant 6 : index
    %c0_240 = arith.constant 0 : index
    %c0_241 = arith.constant 0 : index
    %978 = vector.load %arg4[%c6, %c0_240, %c0_241] : memref<8x4x256xf32, #tpu.memory_space<vmem>>, vector<1x4x256xf32>
    %979 = vector.shape_cast %978 : vector<1x4x256xf32> to vector<4x256xf32>
    %980 = vector.broadcast %865 : f32 to vector<4x256xf32>
    %981 = arith.mulf %980, %979 : vector<4x256xf32>
    %982 = arith.addf %977, %981 : vector<4x256xf32>
    %c8_i32_242 = arith.constant 8 : i32
    %983 = arith.muli %arg1, %c8_i32_242 : i32
    %c7_i32_243 = arith.constant 7 : i32
    %984 = arith.addi %983, %c7_i32_243 : i32
    %c7_i32_244 = arith.constant 7 : i32
    %985 = arith.subi %c7_i32_244, %984 : i32
    %c0_i32_245 = arith.constant 0 : i32
    %986 = arith.addi %c0_i32_245, %985 : i32
    %987 = arith.index_cast %986 : i32 to index
    %988 = memref.load %arg2[%987] : memref<92xf32, #tpu.memory_space<smem>>
    %c8_i32_246 = arith.constant 8 : i32
    %989 = arith.addi %c8_i32_246, %985 : i32
    %990 = arith.index_cast %989 : i32 to index
    %991 = memref.load %arg2[%990] : memref<92xf32, #tpu.memory_space<smem>>
    %c16_i32_247 = arith.constant 16 : i32
    %992 = arith.addi %c16_i32_247, %985 : i32
    %993 = arith.index_cast %992 : i32 to index
    %994 = memref.load %arg2[%993] : memref<92xf32, #tpu.memory_space<smem>>
    %c24_i32_248 = arith.constant 24 : i32
    %995 = arith.addi %c24_i32_248, %985 : i32
    %996 = arith.index_cast %995 : i32 to index
    %997 = memref.load %arg2[%996] : memref<92xf32, #tpu.memory_space<smem>>
    %c0_i32_249 = arith.constant 0 : i32
    %998 = arith.cmpi sgt, %985, %c0_i32_249 : i32
    %c32_i32_250 = arith.constant 32 : i32
    %999 = arith.addi %c32_i32_250, %985 : i32
    %1000 = arith.index_cast %999 : i32 to index
    %1001 = memref.load %arg2[%1000] : memref<92xf32, #tpu.memory_space<smem>>
    %cst_251 = arith.constant 0.000000e+00 : f32
    %1002 = arith.select %998, %1001, %cst_251 : f32
    %1003 = vector.extract_strided_slice %982 {offsets = [0, 0], sizes = [1, 256], strides = [1, 1]} : vector<4x256xf32> to vector<1x256xf32>
    %1004 = vector.broadcast %3 : f32 to vector<1x256xf32>
    %1005 = arith.mulf %1003, %1004 : vector<1x256xf32>
    %1006 = vector.extract_strided_slice %982 {offsets = [1, 0], sizes = [1, 256], strides = [1, 1]} : vector<4x256xf32> to vector<1x256xf32>
    %1007 = vector.broadcast %7 : f32 to vector<1x256xf32>
    %1008 = arith.mulf %1006, %1007 : vector<1x256xf32>
    %1009 = arith.addf %1005, %1008 : vector<1x256xf32>
    %1010 = vector.extract_strided_slice %982 {offsets = [2, 0], sizes = [1, 256], strides = [1, 1]} : vector<4x256xf32> to vector<1x256xf32>
    %1011 = vector.broadcast %11 : f32 to vector<1x256xf32>
    %1012 = arith.mulf %1010, %1011 : vector<1x256xf32>
    %1013 = arith.addf %1009, %1012 : vector<1x256xf32>
    %1014 = vector.extract_strided_slice %982 {offsets = [3, 0], sizes = [1, 256], strides = [1, 1]} : vector<4x256xf32> to vector<1x256xf32>
    %1015 = vector.broadcast %15 : f32 to vector<1x256xf32>
    %1016 = arith.mulf %1014, %1015 : vector<1x256xf32>
    %1017 = arith.addf %1013, %1016 : vector<1x256xf32>
    %c4_i32_252 = arith.constant 4 : i32
    %1018 = arith.muli %985, %c4_i32_252 : i32
    %c60_i32_253 = arith.constant 60 : i32
    %1019 = arith.addi %c60_i32_253, %1018 : i32
    %c0_i32_254 = arith.constant 0 : i32
    %1020 = arith.addi %1019, %c0_i32_254 : i32
    %1021 = arith.index_cast %1020 : i32 to index
    %1022 = memref.load %arg2[%1021] : memref<92xf32, #tpu.memory_space<smem>>
    %1023 = arith.addf %19, %1022 : f32
    %1024 = vector.broadcast %1023 : f32 to vector<1x256xf32>
    %1025 = arith.addf %1017, %1024 : vector<1x256xf32>
    %c0_255 = arith.constant 0 : index
    %c0_256 = arith.constant 0 : index
    %1026 = vector.load %arg7[%c0_255, %c0_256] : memref<4x256xf32, #tpu.memory_space<vmem>>, vector<1x256xf32>
    tpu.vector_store %arg7[%c0_255, %c0_256], %1025 {strides = array<i32>} : memref<4x256xf32, #tpu.memory_space<vmem>>, vector<1x256xf32>,
    %1027 = vector.extract_strided_slice %982 {offsets = [0, 0], sizes = [1, 256], strides = [1, 1]} : vector<4x256xf32> to vector<1x256xf32>
    %1028 = vector.broadcast %4 : f32 to vector<1x256xf32>
    %1029 = arith.mulf %1027, %1028 : vector<1x256xf32>
    %1030 = vector.extract_strided_slice %982 {offsets = [1, 0], sizes = [1, 256], strides = [1, 1]} : vector<4x256xf32> to vector<1x256xf32>
    %1031 = vector.broadcast %8 : f32 to vector<1x256xf32>
    %1032 = arith.mulf %1030, %1031 : vector<1x256xf32>
    %1033 = arith.addf %1029, %1032 : vector<1x256xf32>
    %1034 = vector.extract_strided_slice %982 {offsets = [2, 0], sizes = [1, 256], strides = [1, 1]} : vector<4x256xf32> to vector<1x256xf32>
    %1035 = vector.broadcast %12 : f32 to vector<1x256xf32>
    %1036 = arith.mulf %1034, %1035 : vector<1x256xf32>
    %1037 = arith.addf %1033, %1036 : vector<1x256xf32>
    %1038 = vector.extract_strided_slice %982 {offsets = [3, 0], sizes = [1, 256], strides = [1, 1]} : vector<4x256xf32> to vector<1x256xf32>
    %1039 = vector.broadcast %16 : f32 to vector<1x256xf32>
    %1040 = arith.mulf %1038, %1039 : vector<1x256xf32>
    %1041 = arith.addf %1037, %1040 : vector<1x256xf32>
    %c4_i32_257 = arith.constant 4 : i32
    %1042 = arith.muli %985, %c4_i32_257 : i32
    %c60_i32_258 = arith.constant 60 : i32
    %1043 = arith.addi %c60_i32_258, %1042 : i32
    %c1_i32_259 = arith.constant 1 : i32
    %1044 = arith.addi %1043, %c1_i32_259 : i32
    %1045 = arith.index_cast %1044 : i32 to index
    %1046 = memref.load %arg2[%1045] : memref<92xf32, #tpu.memory_space<smem>>
    %1047 = arith.addf %20, %1046 : f32
    %1048 = vector.broadcast %1047 : f32 to vector<1x256xf32>
    %1049 = arith.addf %1041, %1048 : vector<1x256xf32>
    %c1_260 = arith.constant 1 : index
    %c0_261 = arith.constant 0 : index
    %1050 = vector.load %arg7[%c1_260, %c0_261] : memref<4x256xf32, #tpu.memory_space<vmem>>, vector<1x256xf32>
    tpu.vector_store %arg7[%c1_260, %c0_261], %1049 {strides = array<i32>} : memref<4x256xf32, #tpu.memory_space<vmem>>, vector<1x256xf32>,
    %1051 = vector.extract_strided_slice %982 {offsets = [0, 0], sizes = [1, 256], strides = [1, 1]} : vector<4x256xf32> to vector<1x256xf32>
    %1052 = vector.broadcast %5 : f32 to vector<1x256xf32>
    %1053 = arith.mulf %1051, %1052 : vector<1x256xf32>
    %1054 = vector.extract_strided_slice %982 {offsets = [1, 0], sizes = [1, 256], strides = [1, 1]} : vector<4x256xf32> to vector<1x256xf32>
    %1055 = vector.broadcast %9 : f32 to vector<1x256xf32>
    %1056 = arith.mulf %1054, %1055 : vector<1x256xf32>
    %1057 = arith.addf %1053, %1056 : vector<1x256xf32>
    %1058 = vector.extract_strided_slice %982 {offsets = [2, 0], sizes = [1, 256], strides = [1, 1]} : vector<4x256xf32> to vector<1x256xf32>
    %1059 = vector.broadcast %13 : f32 to vector<1x256xf32>
    %1060 = arith.mulf %1058, %1059 : vector<1x256xf32>
    %1061 = arith.addf %1057, %1060 : vector<1x256xf32>
    %1062 = vector.extract_strided_slice %982 {offsets = [3, 0], sizes = [1, 256], strides = [1, 1]} : vector<4x256xf32> to vector<1x256xf32>
    %1063 = vector.broadcast %17 : f32 to vector<1x256xf32>
    %1064 = arith.mulf %1062, %1063 : vector<1x256xf32>
    %1065 = arith.addf %1061, %1064 : vector<1x256xf32>
    %c4_i32_262 = arith.constant 4 : i32
    %1066 = arith.muli %985, %c4_i32_262 : i32
    %c60_i32_263 = arith.constant 60 : i32
    %1067 = arith.addi %c60_i32_263, %1066 : i32
    %c2_i32_264 = arith.constant 2 : i32
    %1068 = arith.addi %1067, %c2_i32_264 : i32
    %1069 = arith.index_cast %1068 : i32 to index
    %1070 = memref.load %arg2[%1069] : memref<92xf32, #tpu.memory_space<smem>>
    %1071 = arith.addf %21, %1070 : f32
    %1072 = vector.broadcast %1071 : f32 to vector<1x256xf32>
    %1073 = arith.addf %1065, %1072 : vector<1x256xf32>
    %c2_265 = arith.constant 2 : index
    %c0_266 = arith.constant 0 : index
    %1074 = vector.load %arg7[%c2_265, %c0_266] : memref<4x256xf32, #tpu.memory_space<vmem>>, vector<1x256xf32>
    tpu.vector_store %arg7[%c2_265, %c0_266], %1073 {strides = array<i32>} : memref<4x256xf32, #tpu.memory_space<vmem>>, vector<1x256xf32>,
    %1075 = vector.extract_strided_slice %982 {offsets = [0, 0], sizes = [1, 256], strides = [1, 1]} : vector<4x256xf32> to vector<1x256xf32>
    %1076 = vector.broadcast %6 : f32 to vector<1x256xf32>
    %1077 = arith.mulf %1075, %1076 : vector<1x256xf32>
    %1078 = vector.extract_strided_slice %982 {offsets = [1, 0], sizes = [1, 256], strides = [1, 1]} : vector<4x256xf32> to vector<1x256xf32>
    %1079 = vector.broadcast %10 : f32 to vector<1x256xf32>
    %1080 = arith.mulf %1078, %1079 : vector<1x256xf32>
    %1081 = arith.addf %1077, %1080 : vector<1x256xf32>
    %1082 = vector.extract_strided_slice %982 {offsets = [2, 0], sizes = [1, 256], strides = [1, 1]} : vector<4x256xf32> to vector<1x256xf32>
    %1083 = vector.broadcast %14 : f32 to vector<1x256xf32>
    %1084 = arith.mulf %1082, %1083 : vector<1x256xf32>
    %1085 = arith.addf %1081, %1084 : vector<1x256xf32>
    %1086 = vector.extract_strided_slice %982 {offsets = [3, 0], sizes = [1, 256], strides = [1, 1]} : vector<4x256xf32> to vector<1x256xf32>
    %1087 = vector.broadcast %18 : f32 to vector<1x256xf32>
    %1088 = arith.mulf %1086, %1087 : vector<1x256xf32>
    %1089 = arith.addf %1085, %1088 : vector<1x256xf32>
    %c4_i32_267 = arith.constant 4 : i32
    %1090 = arith.muli %985, %c4_i32_267 : i32
    %c60_i32_268 = arith.constant 60 : i32
    %1091 = arith.addi %c60_i32_268, %1090 : i32
    %c3_i32_269 = arith.constant 3 : i32
    %1092 = arith.addi %1091, %c3_i32_269 : i32
    %1093 = arith.index_cast %1092 : i32 to index
    %1094 = memref.load %arg2[%1093] : memref<92xf32, #tpu.memory_space<smem>>
    %1095 = arith.addf %22, %1094 : f32
    %1096 = vector.broadcast %1095 : f32 to vector<1x256xf32>
    %1097 = arith.addf %1089, %1096 : vector<1x256xf32>
    %c3_270 = arith.constant 3 : index
    %c0_271 = arith.constant 0 : index
    %1098 = vector.load %arg7[%c3_270, %c0_271] : memref<4x256xf32, #tpu.memory_space<vmem>>, vector<1x256xf32>
    tpu.vector_store %arg7[%c3_270, %c0_271], %1097 {strides = array<i32>} : memref<4x256xf32, #tpu.memory_space<vmem>>, vector<1x256xf32>,
    %c0_272 = arith.constant 0 : index
    %c0_273 = arith.constant 0 : index
    %1099 = vector.load %arg7[%c0_272, %c0_273] : memref<4x256xf32, #tpu.memory_space<vmem>>, vector<4x256xf32>
    %1100 = math.tanh %1099 : vector<4x256xf32>
    %1101 = vector.broadcast %988 : f32 to vector<4x256xf32>
    %1102 = arith.mulf %1101, %982 : vector<4x256xf32>
    %1103 = vector.broadcast %991 : f32 to vector<4x256xf32>
    %1104 = arith.mulf %1103, %1100 : vector<4x256xf32>
    %1105 = arith.subf %1102, %1104 : vector<4x256xf32>
    %cst_274 = arith.constant -1.000000e+00 : f32
    %cst_275 = arith.constant 1.000000e+00 : f32
    %1106 = vector.broadcast %cst_274 : f32 to vector<4x256xf32>
    %1107 = arith.maximumf %1106, %1105 : vector<4x256xf32>
    %1108 = vector.broadcast %cst_275 : f32 to vector<4x256xf32>
    %1109 = arith.minimumf %1108, %1107 : vector<4x256xf32>
    %1110 = vector.broadcast %994 : f32 to vector<4x256xf32>
    %1111 = arith.mulf %1110, %1109 : vector<4x256xf32>
    %1112 = vector.broadcast %997 : f32 to vector<4x256xf32>
    %1113 = arith.mulf %1112, %982 : vector<4x256xf32>
    %1114 = arith.addf %1111, %1113 : vector<4x256xf32>
    %c7 = arith.constant 7 : index
    %c0_276 = arith.constant 0 : index
    %c0_277 = arith.constant 0 : index
    %1115 = vector.load %arg4[%c7, %c0_276, %c0_277] : memref<8x4x256xf32, #tpu.memory_space<vmem>>, vector<1x4x256xf32>
    %1116 = vector.shape_cast %1115 : vector<1x4x256xf32> to vector<4x256xf32>
    %1117 = vector.broadcast %1002 : f32 to vector<4x256xf32>
    %1118 = arith.mulf %1117, %1116 : vector<4x256xf32>
    %1119 = arith.addf %1114, %1118 : vector<4x256xf32>
    %c0_278 = arith.constant 0 : index
    %c0_279 = arith.constant 0 : index
    %1120 = vector.load %arg6[%c0_278, %c0_279] : memref<4x256xf32, #tpu.memory_space<vmem>>, vector<4x256xf32>
    tpu.vector_store %arg6[%c0_278, %c0_279], %1119 {strides = array<i32>} : memref<4x256xf32, #tpu.memory_space<vmem>>, vector<4x256xf32>,
    %c0_i32_280 = arith.constant 0 : i32
    %1121 = arith.cmpi eq, %arg1, %c0_i32_280 : i32
    %1122 = arith.extui %1121 : i1 to i32
    %c0_i32_281 = arith.constant 0 : i32
    %1123 = arith.cmpi ne, %1122, %c0_i32_281 : i32
    scf.if %1123 {
      %cst_282 = arith.constant -1.000000e+00 : f32
      %cst_283 = arith.constant 1.000000e+00 : f32
      %1124 = vector.broadcast %cst_282 : f32 to vector<4x256xf32>
      %1125 = arith.maximumf %1124, %1119 : vector<4x256xf32>
      %1126 = vector.broadcast %cst_283 : f32 to vector<4x256xf32>
      %1127 = arith.minimumf %1126, %1125 : vector<4x256xf32>
      %c0_284 = arith.constant 0 : index
      %c0_285 = arith.constant 0 : index
      %1128 = vector.load %arg5[%c0_284, %c0_285] : memref<4x256xf32, #tpu.memory_space<vmem>>, vector<4x256xf32>
      tpu.vector_store %arg5[%c0_284, %c0_285], %1127 {strides = array<i32>} : memref<4x256xf32, #tpu.memory_space<vmem>>, vector<4x256xf32>,
    } else {
    }
    return
  }
  func.func @transform_0(%arg0: i32, %arg1: i32, %arg2: memref<92xf32, #tpu.memory_space<smem>>) -> (i32, i32) {
    %c0_i32 = arith.constant 0 : i32
    %c0_i32_0 = arith.constant 0 : i32
    return %c0_i32, %arg0 : i32, i32
  }
  func.func @transform_1(%arg0: i32, %arg1: i32, %arg2: memref<92xf32, #tpu.memory_space<smem>>) -> (i32, i32, i32) {
    %c0_i32 = arith.constant 0 : i32
    %c0_i32_0 = arith.constant 0 : i32
    return %arg1, %c0_i32, %arg0 : i32, i32, i32
  }
  func.func @transform_2(%arg0: i32, %arg1: i32, %arg2: memref<92xf32, #tpu.memory_space<smem>>) -> (i32, i32) {
    %c0_i32 = arith.constant 0 : i32
    %c0_i32_0 = arith.constant 0 : i32
    return %c0_i32, %arg0 : i32, i32
  }
}

</mosaic_0001>

<llo_original>
// kernel: tpu_custom_call.1
$region0: #{tpu_custom_call.1}
  #allocation0 [shape = 'u32[]', space=smem, size = 0x4, offset = 0x4, fixed_abs, tag = 'smem constant byte address 0x4 - core index']
  #allocation1 [shape = 'u32[72,128]{1,0:T(1,128)}', space=vmem, size = 0x9000, scoped, tag = 'internal scratch']
  #allocation2 [shape = 'f32[4,256]{1,0:T(4,128)}', space=vmem, size = 0x1000, scoped, tag = 'scratch operand']
  #allocation3 [shape = 'f32[4,256]{1,0:T(4,128)}', space=vmem, size = 0x1000, scoped, tag = 'scratch operand']
  #allocation4 [shape = 's32[1]{0}', space=sflag, size = 0x4, scoped, tag = 'scoped memory for tpu_custom_call.1']
  #allocation5 [shape = 'u8[512]{0}', space=smem, size = 0x200, scoped, tag = 'prefetched SMEM operand 0']
  %s0 = inlined_call_operand.hbm [shape: f32[92], index: 0, kind: input, shape index: {}]
  %s1 = inlined_call_operand.hbm [shape: f32[4,512], index: 1, kind: input, shape index: {}]
  %s2 = inlined_call_operand.hbm [shape: f32[8,4,512], index: 2, kind: input, shape index: {}]
  %s3 = inlined_call_operand.hbm [shape: f32[4,512], index: 3, kind: output, shape index: {}]
  %s4 = sld [smem:[#allocation0]]
  $region57: #{tpu_custom_call.1} parent=0
    _
  %s6 = ssub.s32 1, %s4
  %s7 = scalar_select 0, %s6, %s4
  %s9 = sshll.u32 %s0, 4
  %s10 = int_to_ptr.hbm [resolvable:$true] %s9
  %12 = dma.hbm_to_smem %s10, 16, [#allocation5], [#allocation4]
  %14 = dma.done [#allocation4], 16
  %15 = sfence
  $region1: #{tpu_custom_call.1} parent=0
    #allocation6 [shape = 'u8[8192]{0}', space=vmem, size = 0x2000, scoped, tag = 'input window, operand 1']
    #allocation7 [shape = 's32[2]{0}', space=sflag, size = 0x8, scoped, tag = 'scoped memory for tpu_custom_call.1']
    #allocation8 [shape = 's32[2]{0}', space=sflag, size = 0x8, scoped, tag = 'scoped memory for tpu_custom_call.1']
    #allocation9 [shape = 'u8[65536]{0}', space=vmem, size = 0x10000, scoped, tag = 'input window, operand 2']
    #allocation10 [shape = 's32[2]{0}', space=sflag, size = 0x8, scoped, tag = 'scoped memory for tpu_custom_call.1']
    #allocation11 [shape = 'u8[8192]{0}', space=vmem, size = 0x2000, scoped, tag = 'output window, operand 0']
    %16 = vsyncpa [#allocation7], 0
    %s17 = scalar_lea.sflag [#allocation7], 1
    %18 = vsyncpa %s17, 0
    %19 = vsyncpa [#allocation10], 0
    %s20 = scalar_lea.sflag [#allocation10], 1
    %21 = vsyncpa %s20, 0
    %22 = vsyncpa [#allocation8], 0
    %s23 = scalar_lea.sflag [#allocation8], 1
    %24 = vsyncpa %s23, 0
    loop: start=0, step=1, limit=4
    $region2: #{tpu_custom_call.1} parent=1 // loop_pre_header
      _
    $region3: #{tpu_custom_call.1} parent=1 // loop_header
      %s26 = sphi 0, %s30
      %p27 = scmp.ge.s32.totalorder %s26, 4
      %s33 = sphi 0, %s45
      %s34 = sphi 0, %s41
      %s35 = sphi 0, %s33
      %s36 = sphi 0, %s34
      %s37 = sphi 0, %s35
      %s38 = sphi 0, %s36
      %s48 = sphi 0, %s50
      %s51 = sphi 0, %s48
      %s52 = sphi 0, %s51
      %s68 = sphi 0, %s52
      %s76 = sphi 0, %s78
      %s79 = sphi 0, %s76
      %s80 = sphi 0, %s79
      %s96 = sphi 0, %s80
      %s102 = sphi 0, %s104
      %s105 = sphi 0, %s102
      %s106 = sphi 0, %s105
      %s122 = sphi 0, %s106
    $region4: #{tpu_custom_call.1} parent=1 // loop_header_branch
      %29 = sbr.rel (%p27) target = $region8
    $region5: #{tpu_custom_call.1} parent=1 // loop_body
      %s31 = ssub.s32 %s26, 1
      %s32 = ssub.s32 %s26, 2
      %s39 = sadd.s32 1, %s34
      %p40 = scmp.ge.s32.totalorder %s39, 1
      %s41 = scalar_select %p40, 0, %s39
      %s42 = sadd.s32 1, %s33
      %s43 = scalar_select %p40, %s42, %s33
      %p44 = scmp.ge.s32.totalorder %s43, 2
      %s45 = scalar_select %p44, 0, %s43
      %s46 = ssub.s32 %s33, %s45
      %p47 = scmp.eq.s32.totalorder %s46, 0
      %s49 = sadd.s32 %s48, 1
      %s50 = scalar_select %p47, %s48, %s49
      %p53 = pneg %p47
      %p54 = scmp.eq.s32.totalorder %s26, 1
      %p55 = por %p53, %p54
      %p56 = scmp.ne.s32.totalorder %s48, %s51
      %p57 = scmp.eq.s32.totalorder %s26, 0
      %p58 = por %p56, %p57
      %p59 = scmp.ne.s32.totalorder %s48, %s51
      %p60 = scmp.eq.s32.totalorder %s31, 1
      %p61 = por %p59, %p60
      %p62 = scmp.ne.s32.totalorder %s51, %s52
      %p63 = scmp.eq.s32.totalorder %s31, 0
      %p64 = por %p62, %p63
      %p65 = scmp.ne.s32.totalorder %s51, %s52
      %p66 = scmp.eq.s32.totalorder %s32, 1
      %p67 = por %p65, %p66
      %p69 = scmp.ne.s32.totalorder %s52, %s68
      %p70 = scmp.eq.s32.totalorder %s32, 0
      %p71 = por %p69, %p70
      %s72 = ssub.s32 %s34, %s41
      %s73 = ssub.s32 %s33, %s45
      %s74 = sor.u32 %s72, %s73
      %p75 = scmp.eq.s32.totalorder %s74, 0
      %s77 = sadd.s32 %s76, 1
      %s78 = scalar_select %p75, %s76, %s77
      %p81 = pneg %p75
      %p82 = scmp.eq.s32.totalorder %s26, 1
      %p83 = por %p81, %p82
      %p84 = scmp.ne.s32.totalorder %s76, %s79
      %p85 = scmp.eq.s32.totalorder %s26, 0
      %p86 = por %p84, %p85
      %p87 = scmp.ne.s32.totalorder %s76, %s79
      %p88 = scmp.eq.s32.totalorder %s31, 1
      %p89 = por %p87, %p88
      %p90 = scmp.ne.s32.totalorder %s79, %s80
      %p91 = scmp.eq.s32.totalorder %s31, 0
      %p92 = por %p90, %p91
      %p93 = scmp.ne.s32.totalorder %s79, %s80
      %p94 = scmp.eq.s32.totalorder %s32, 1
      %p95 = por %p93, %p94
      %p97 = scmp.ne.s32.totalorder %s80, %s96
      %p98 = scmp.eq.s32.totalorder %s32, 0
      %p99 = por %p97, %p98
      %s100 = ssub.s32 %s33, %s45
      %p101 = scmp.eq.s32.totalorder %s100, 0
      %s103 = sadd.s32 %s102, 1
      %s104 = scalar_select %p101, %s102, %s103
      %p107 = pneg %p101
      %p108 = scmp.eq.s32.totalorder %s26, 1
      %p109 = por %p107, %p108
      %p110 = scmp.ne.s32.totalorder %s102, %s105
      %p111 = scmp.eq.s32.totalorder %s26, 0
      %p112 = por %p110, %p111
      %p113 = scmp.ne.s32.totalorder %s102, %s105
      %p114 = scmp.eq.s32.totalorder %s31, 1
      %p115 = por %p113, %p114
      %p116 = scmp.ne.s32.totalorder %s105, %s106
      %p117 = scmp.eq.s32.totalorder %s31, 0
      %p118 = por %p116, %p117
      %p119 = scmp.ne.s32.totalorder %s105, %s106
      %p120 = scmp.eq.s32.totalorder %s32, 1
      %p121 = por %p119, %p120
      %p123 = scmp.ne.s32.totalorder %s106, %s122
      %p124 = scmp.eq.s32.totalorder %s32, 0
      %p125 = por %p123, %p124
      %p126 = scmp.le.s32.totalorder 1, %s26
      %p127 = scmp.lt.s32.totalorder %s26, 3
      %p128 = pnand %p126, %p127
      %p129 = pneg %p128
      // Predicated region
      $region9: #{tpu_custom_call.1} parent=5 // pred_check
        _
      $region10: #{tpu_custom_call.1} parent=5 // pred_check_branch
        %131 = sbr.rel (%p128) target = $region12
      $region11: #{tpu_custom_call.1} parent=5 // pred_region
        %s132 = ssub.s32 %s26, 1
      $region12: #{tpu_custom_call.1} parent=5 // pred_fallthru
        _
      %p133 = scmp.lt.s32.totalorder %s26, 2
      // Predicated region
      $region13: #{tpu_custom_call.1} parent=5 // pred_check
        %p134 = pneg %p133
      $region14: #{tpu_custom_call.1} parent=5 // pred_check_branch
        %136 = sbr.rel (%p134) target = $region16
      $region15: #{tpu_custom_call.1} parent=5 // pred_region
        // Predicated region
        $region17: #{tpu_custom_call.1} parent=15 // pred_check
          %p137 = pneg %p58
        $region18: #{tpu_custom_call.1} parent=15 // pred_check_branch
          %139 = sbr.rel (%p137) target = $region20
        $region19: #{tpu_custom_call.1} parent=15 // pred_region
          %s140 = sand.u32 %s48, 1
          %s141 = scalar_lea.sflag [#allocation7], %s140
          %s142 = sand.u32 %s48, 1
          %s143 = smul.addr %s142, 8
          %s144 = scalar_lea.vmem [#allocation6], %s143
          %s145 = smul.u32 2, %s33
          %147 = vsyncadd %s141, 0
          %s148 = smul.addr %s145, 4
          %s149 = scalar_lea.hbm %s1, %s148
          %s151 = sshll.u32 %s149, 4
          %s152 = int_to_ptr.hbm [resolvable:$true] %s151
          %s153 = sshll.u32 %s144, 4
          %s154 = int_to_ptr.vmem [resolvable:$true] %s153
          %156 = dma.hbm_to_vmem [thread:$0]  %s152, 128, %s154, %s141
        $region20: #{tpu_custom_call.1} parent=15 // pred_fallthru
          _
        // Predicated region
        $region21: #{tpu_custom_call.1} parent=15 // pred_check
          %p157 = pneg %p86
        $region22: #{tpu_custom_call.1} parent=15 // pred_check_branch
          %159 = sbr.rel (%p157) target = $region24
        $region23: #{tpu_custom_call.1} parent=15 // pred_region
          %s160 = sand.u32 %s76, 1
          %s161 = scalar_lea.sflag [#allocation10], %s160
          %s162 = sand.u32 %s76, 1
          %s163 = smul.addr %s162, 64
          %s164 = scalar_lea.vmem [#allocation9], %s163
          %s165 = smul.u32 8, %s34
          %s166 = smul.u32 2, %s33
          %168 = vsyncadd %s161, 0
          %s169 = smul.addr %s165, 4
          %s170 = sadd.s32 %s166, %s169
          %s171 = smul.addr %s170, 4
          %s172 = scalar_lea.hbm %s2, %s171
          %s173 = sshll.u32 %s172, 4
          %s174 = int_to_ptr.hbm [resolvable:$true] %s173
          %s175 = sshll.u32 %s164, 4
          %s176 = int_to_ptr.vmem [resolvable:$true] %s175
          %181 = dma.hbm_to_vmem [thread:$0]  %s174, 1024, %s176, %s161, 256, 128, 8
        $region24: #{tpu_custom_call.1} parent=15 // pred_fallthru
          _
      $region16: #{tpu_custom_call.1} parent=5 // pred_fallthru
        _
      %p182 = scmp.le.s32.totalorder 1, %s26
      %p183 = scmp.lt.s32.totalorder %s26, 3
      %p184 = pnand %p182, %p183
      %p185 = pneg %p184
      // Predicated region
      $region25: #{tpu_custom_call.1} parent=5 // pred_check
        _
      $region26: #{tpu_custom_call.1} parent=5 // pred_check_branch
        %187 = sbr.rel (%p184) target = $region28
      $region27: #{tpu_custom_call.1} parent=5 // pred_region
        %s188 = ssub.s32 %s26, 1
        %s189 = sand.u32 %s51, 1
        %s190 = scalar_lea.sflag [#allocation7], %s189
        %s191 = sand.u32 %s51, 1
        %s192 = smul.addr %s191, 8
        %s193 = scalar_lea.vmem [#allocation6], %s192
        // Predicated region
        $region29: #{tpu_custom_call.1} parent=27 // pred_check
          %p194 = pneg %p64
        $region30: #{tpu_custom_call.1} parent=27 // pred_check_branch
          %196 = sbr.rel (%p194) target = $region32
        $region31: #{tpu_custom_call.1} parent=27 // pred_region
          %198 = dma.done %s190, 128
        $region32: #{tpu_custom_call.1} parent=27 // pred_fallthru
          _
        %s199 = sand.u32 %s79, 1
        %s200 = scalar_lea.sflag [#allocation10], %s199
        %s201 = sand.u32 %s79, 1
        %s202 = smul.addr %s201, 64
        %s203 = scalar_lea.vmem [#allocation9], %s202
        // Predicated region
        $region33: #{tpu_custom_call.1} parent=27 // pred_check
          %p204 = pneg %p92
        $region34: #{tpu_custom_call.1} parent=27 // pred_check_branch
          %206 = sbr.rel (%p204) target = $region36
        $region35: #{tpu_custom_call.1} parent=27 // pred_region
          %208 = dma.done %s200, 1024
        $region36: #{tpu_custom_call.1} parent=27 // pred_fallthru
          _
        %s209 = sand.u32 %s51, 1
        %s210 = scalar_lea.sflag [#allocation7], %s209
        %s211 = sand.u32 %s51, 1
        %s212 = smul.addr %s211, 8
        %s213 = scalar_lea.vmem [#allocation6], %s212
        %p214 = pneg %p64
        %p215 = pneg %p61
        %s216 = sand.u32 %s79, 1
        %s217 = scalar_lea.sflag [#allocation10], %s216
        %s218 = sand.u32 %s79, 1
        %s219 = smul.addr %s218, 64
        %s220 = scalar_lea.vmem [#allocation9], %s219
        %p221 = pneg %p92
        %p222 = pneg %p89
        %p223 = pneg %p118
        %p224 = pneg %p115
        %s225 = sand.u32 %s105, 1
        %s226 = scalar_lea.sflag [#allocation8], %s225
        %s227 = sand.u32 %s105, 1
        %s228 = smul.addr %s227, 8
        %s229 = scalar_lea.vmem [#allocation11], %s228
        %s230 = smul.u32 2, %s35
        %s231 = smul.u32 8, %s36
        %s232 = smul.u32 2, %s35
        %s233 = smul.u32 2, %s35
        %p234 = scmp.eq.s32.totalorder %s36, 0
        // Predicated region
        $region37: #{tpu_custom_call.1} parent=27 // pred_check
          %p235 = pneg %p234
        $region38: #{tpu_custom_call.1} parent=27 // pred_check_branch
          %237 = sbr.rel (%p235) target = $region40
        $region39: #{tpu_custom_call.1} parent=27 // pred_region
          %v238 = vld [vmem:[%s193] sm:$0xff]
          %239 = vst [vmem:[#allocation2] sm:$0xff] %v238
        $region40: #{tpu_custom_call.1} parent=27 // pred_fallthru
          _
        %s240 = sld [smem:[#allocation5 + $0x28]]
        %s241 = sld [smem:[#allocation5 + $0x29]]
        %s242 = sld [smem:[#allocation5 + $0x2a]]
        %s243 = sld [smem:[#allocation5 + $0x2b]]
        %s244 = sld [smem:[#allocation5 + $0x2c]]
        %s245 = sld [smem:[#allocation5 + $0x2d]]
        %s246 = sld [smem:[#allocation5 + $0x2e]]
        %s247 = sld [smem:[#allocation5 + $0x2f]]
        %s248 = sld [smem:[#allocation5 + $0x30]]
        %s249 = sld [smem:[#allocation5 + $0x31]]
        %s250 = sld [smem:[#allocation5 + $0x32]]
        %s251 = sld [smem:[#allocation5 + $0x33]]
        %s252 = sld [smem:[#allocation5 + $0x34]]
        %s253 = sld [smem:[#allocation5 + $0x35]]
        %s254 = sld [smem:[#allocation5 + $0x36]]
        %s255 = sld [smem:[#allocation5 + $0x37]]
        %s256 = sld [smem:[#allocation5 + $0x38]]
        %s257 = sld [smem:[#allocation5 + $0x39]]
        %s258 = sld [smem:[#allocation5 + $0x3a]]
        %s259 = sld [smem:[#allocation5 + $0x3b]]
        %v260 = vld [vmem:[#allocation2] sm:$0xff]
        %s261 = smul.u32 %s36, 8
        %s262 = ssub.s32 7, %s261
        %s263 = sld [smem:[#allocation5 + %s262]]
        %s264 = ssub.s32 15, %s261
        %s265 = sld [smem:[#allocation5 + %s264]]
        %s266 = ssub.s32 23, %s261
        %s267 = sld [smem:[#allocation5 + %s266]]
        %s268 = ssub.s32 31, %s261
        %s269 = sld [smem:[#allocation5 + %s268]]
        %p270 = scmp.gt.s32.totalorder %s262, 0
        %s271 = ssub.s32 39, %s261
        %s272 = sld [smem:[#allocation5 + %s271]]
        %s273 = scalar_select %p270, %s272, 0.0
        %v274 = vstv %s240
        %v275 = vmul.f32 %v260, %v274
        %v276 = vstv %s244
        %v277 = vmul.f32 %v260, %v276
        %v279 = vrot.slane %v277, 5
        %v280 = vrot.slane %v279, 4
        %v282 = vadd.f32 %v275, %v280
        %v283 = vstv %s248
        %v284 = vmul.f32 %v260, %v283
        %v286 = vrot.slane %v284, 6
        %v287 = vrot.slane %v286, 4
        %v289 = vadd.f32 %v282, %v287
        %v290 = vstv %s252
        %v291 = vmul.f32 %v260, %v290
        %v293 = vrot.slane %v291, 7
        %v294 = vrot.slane %v293, 4
        %v296 = vadd.f32 %v289, %v294
        %s297 = smul.u32 %s262, 4
        %s298 = sadd.s32 %s297, 60
        %s299 = sld [smem:[#allocation5 + %s298]]
        %s300 = sadd.f32 %s256, %s299
        %v301 = vstv %s300
        %v302 = vadd.f32 %v296, %v301
        %v304 = vrot.slane %v302, 3
        %vm305 = vcmask 1040384
        %v306 = vsel %vm305, %v302, %v304
        %v308 = vlaneseq
        %vm309 = vcmp.ge.s32.totalorder %v308, 0
        %vm310 = vcmp.lt.s32.totalorder %v308, 256
        %vm311 = vmand %vm309, %vm310
        %312 = vst.msk [vmem:[#allocation3] ss:$4 sm:$0x3] %vm311, %v306
        %v313 = vstv %s241
        %v314 = vmul.f32 %v260, %v313
        %v315 = vstv %s245
        %v316 = vmul.f32 %v260, %v315
        %v318 = vrot.slane %v316, 5
        %v319 = vrot.slane %v318, 4
        %v321 = vadd.f32 %v314, %v319
        %v322 = vstv %s249
        %v323 = vmul.f32 %v260, %v322
        %v325 = vrot.slane %v323, 6
        %v326 = vrot.slane %v325, 4
        %v328 = vadd.f32 %v321, %v326
        %v329 = vstv %s253
        %v330 = vmul.f32 %v260, %v329
        %v332 = vrot.slane %v330, 7
        %v333 = vrot.slane %v332, 4
        %v335 = vadd.f32 %v328, %v333
        %s336 = sadd.s32 %s297, 61
        %s337 = sld [smem:[#allocation5 + %s336]]
        %s338 = sadd.f32 %s257, %s337
        %v339 = vstv %s338
        %v340 = vadd.f32 %v335, %v339
        %v342 = vrot.slane %v340, 3
        %v343 = vsel %vm305, %v340, %v342
        %s345 = scalar_lea.vmem [#allocation3], 1
        %346 = vst.msk [vmem:[%s345] ss:$4 sm:$0x3] %vm311, %v343
        %v347 = vstv %s242
        %v348 = vmul.f32 %v260, %v347
        %v349 = vstv %s246
        %v350 = vmul.f32 %v260, %v349
        %v352 = vrot.slane %v350, 5
        %v353 = vrot.slane %v352, 4
        %v355 = vadd.f32 %v348, %v353
        %v356 = vstv %s250
        %v357 = vmul.f32 %v260, %v356
        %v359 = vrot.slane %v357, 6
        %v360 = vrot.slane %v359, 4
        %v362 = vadd.f32 %v355, %v360
        %v363 = vstv %s254
        %v364 = vmul.f32 %v260, %v363
        %v366 = vrot.slane %v364, 7
        %v367 = vrot.slane %v366, 4
        %v369 = vadd.f32 %v362, %v367
        %s370 = sadd.s32 %s297, 62
        %s371 = sld [smem:[#allocation5 + %s370]]
        %s372 = sadd.f32 %s258, %s371
        %v373 = vstv %s372
        %v374 = vadd.f32 %v369, %v373
        %v376 = vrot.slane %v374, 3
        %v377 = vsel %vm305, %v374, %v376
        %s379 = scalar_lea.vmem [#allocation3], 2
        %380 = vst.msk [vmem:[%s379] ss:$4 sm:$0x3] %vm311, %v377
        %v381 = vstv %s243
        %v382 = vmul.f32 %v260, %v381
        %v383 = vstv %s247
        %v384 = vmul.f32 %v260, %v383
        %v386 = vrot.slane %v384, 5
        %v387 = vrot.slane %v386, 4
        %v389 = vadd.f32 %v382, %v387
        %v390 = vstv %s251
        %v391 = vmul.f32 %v260, %v390
        %v393 = vrot.slane %v391, 6
        %v394 = vrot.slane %v393, 4
        %v396 = vadd.f32 %v389, %v394
        %v397 = vstv %s255
        %v398 = vmul.f32 %v260, %v397
        %v400 = vrot.slane %v398, 7
        %v401 = vrot.slane %v400, 4
        %v403 = vadd.f32 %v396, %v401
        %s404 = sadd.s32 %s297, 63
        %s405 = sld [smem:[#allocation5 + %s404]]
        %s406 = sadd.f32 %s259, %s405
        %v407 = vstv %s406
        %v408 = vadd.f32 %v403, %v407
        %v410 = vrot.slane %v408, 3
        %v411 = vsel %vm305, %v408, %v410
        %s413 = scalar_lea.vmem [#allocation3], 3
        %414 = vst.msk [vmem:[%s413] ss:$4 sm:$0x3] %vm311, %v411
        %v415 = vld [vmem:[#allocation3] sm:$0xff]
        %v416 = vtanh.pop %v415
        %v417 = vstv %s263
        %v418 = vmul.f32 %v417, %v260
        %v419 = vstv %s265
        %v420 = vmul.f32 %v419, %v416
        %v421 = vsub.f32 %v418, %v420
        %v422 = vmax.f32 %v421, -1.0
        %v423 = vmin.f32 %v422, 1.0
        %v424 = vstv %s267
        %v425 = vmul.f32 %v424, %v423
        %v426 = vstv %s269
        %v427 = vmul.f32 %v426, %v260
        %v428 = vadd.f32 %v425, %v427
        %v429 = vld [vmem:[%s203] sm:$0xff]
        %v430 = vstv %s273
        %v431 = vmul.f32 %v430, %v429
        %v432 = vadd.f32 %v428, %v431
        %s433 = ssub.s32 6, %s261
        %s434 = sld [smem:[#allocation5 + %s433]]
        %s435 = ssub.s32 14, %s261
        %s436 = sld [smem:[#allocation5 + %s435]]
        %s437 = ssub.s32 22, %s261
        %s438 = sld [smem:[#allocation5 + %s437]]
        %s439 = ssub.s32 30, %s261
        %s440 = sld [smem:[#allocation5 + %s439]]
        %p441 = scmp.gt.s32.totalorder %s433, 0
        %s442 = ssub.s32 38, %s261
        %s443 = sld [smem:[#allocation5 + %s442]]
        %s444 = scalar_select %p441, %s443, 0.0
        %v445 = vmul.f32 %v432, %v274
        %v446 = vmul.f32 %v432, %v276
        %v448 = vrot.slane %v446, 5
        %v449 = vrot.slane %v448, 4
        %v451 = vadd.f32 %v445, %v449
        %v452 = vmul.f32 %v432, %v283
        %v454 = vrot.slane %v452, 6
        %v455 = vrot.slane %v454, 4
        %v457 = vadd.f32 %v451, %v455
        %v458 = vmul.f32 %v432, %v290
        %v460 = vrot.slane %v458, 7
        %v461 = vrot.slane %v460, 4
        %v463 = vadd.f32 %v457, %v461
        %s464 = smul.u32 %s433, 4
        %s465 = sadd.s32 %s464, 60
        %s466 = sld [smem:[#allocation5 + %s465]]
        %s467 = sadd.f32 %s256, %s466
        %v468 = vstv %s467
        %v469 = vadd.f32 %v463, %v468
        %v471 = vrot.slane %v469, 3
        %v472 = vsel %vm305, %v469, %v471
        %474 = vst.msk [vmem:[#allocation3] ss:$4 sm:$0x3] %vm311, %v472
        %v475 = vmul.f32 %v432, %v313
        %v476 = vmul.f32 %v432, %v315
        %v478 = vrot.slane %v476, 5
        %v479 = vrot.slane %v478, 4
        %v481 = vadd.f32 %v475, %v479
        %v482 = vmul.f32 %v432, %v322
        %v484 = vrot.slane %v482, 6
        %v485 = vrot.slane %v484, 4
        %v487 = vadd.f32 %v481, %v485
        %v488 = vmul.f32 %v432, %v329
        %v490 = vrot.slane %v488, 7
        %v491 = vrot.slane %v490, 4
        %v493 = vadd.f32 %v487, %v491
        %s494 = sadd.s32 %s464, 61
        %s495 = sld [smem:[#allocation5 + %s494]]
        %s496 = sadd.f32 %s257, %s495
        %v497 = vstv %s496
        %v498 = vadd.f32 %v493, %v497
        %v500 = vrot.slane %v498, 3
        %v501 = vsel %vm305, %v498, %v500
        %503 = vst.msk [vmem:[%s345] ss:$4 sm:$0x3] %vm311, %v501
        %v504 = vmul.f32 %v432, %v347
        %v505 = vmul.f32 %v432, %v349
        %v507 = vrot.slane %v505, 5
        %v508 = vrot.slane %v507, 4
        %v510 = vadd.f32 %v504, %v508
        %v511 = vmul.f32 %v432, %v356
        %v513 = vrot.slane %v511, 6
        %v514 = vrot.slane %v513, 4
        %v516 = vadd.f32 %v510, %v514
        %v517 = vmul.f32 %v432, %v363
        %v519 = vrot.slane %v517, 7
        %v520 = vrot.slane %v519, 4
        %v522 = vadd.f32 %v516, %v520
        %s523 = sadd.s32 %s464, 62
        %s524 = sld [smem:[#allocation5 + %s523]]
        %s525 = sadd.f32 %s258, %s524
        %v526 = vstv %s525
        %v527 = vadd.f32 %v522, %v526
        %v529 = vrot.slane %v527, 3
        %v530 = vsel %vm305, %v527, %v529
        %532 = vst.msk [vmem:[%s379] ss:$4 sm:$0x3] %vm311, %v530
        %v533 = vmul.f32 %v432, %v381
        %v534 = vmul.f32 %v432, %v383
        %v536 = vrot.slane %v534, 5
        %v537 = vrot.slane %v536, 4
        %v539 = vadd.f32 %v533, %v537
        %v540 = vmul.f32 %v432, %v390
        %v542 = vrot.slane %v540, 6
        %v543 = vrot.slane %v542, 4
        %v545 = vadd.f32 %v539, %v543
        %v546 = vmul.f32 %v432, %v397
        %v548 = vrot.slane %v546, 7
        %v549 = vrot.slane %v548, 4
        %v551 = vadd.f32 %v545, %v549
        %s552 = sadd.s32 %s464, 63
        %s553 = sld [smem:[#allocation5 + %s552]]
        %s554 = sadd.f32 %s259, %s553
        %v555 = vstv %s554
        %v556 = vadd.f32 %v551, %v555
        %v558 = vrot.slane %v556, 3
        %v559 = vsel %vm305, %v556, %v558
        %561 = vst.msk [vmem:[%s413] ss:$4 sm:$0x3] %vm311, %v559
        %v562 = vld [vmem:[#allocation3] sm:$0xff]
        %v563 = vtanh.pop %v562
        %v564 = vstv %s434
        %v565 = vmul.f32 %v564, %v432
        %v566 = vstv %s436
        %v567 = vmul.f32 %v566, %v563
        %v568 = vsub.f32 %v565, %v567
        %v569 = vmax.f32 %v568, -1.0
        %v570 = vmin.f32 %v569, 1.0
        %v571 = vstv %s438
        %v572 = vmul.f32 %v571, %v570
        %v573 = vstv %s440
        %v574 = vmul.f32 %v573, %v432
        %v575 = vadd.f32 %v572, %v574
        %s576 = scalar_lea.vmem %s203, 8 [#allocation9]
        %v577 = vld [vmem:[%s576] sm:$0xff]
        %v578 = vstv %s444
        %v579 = vmul.f32 %v578, %v577
        %v580 = vadd.f32 %v575, %v579
        %s581 = ssub.s32 5, %s261
        %s582 = sld [smem:[#allocation5 + %s581]]
        %s583 = ssub.s32 13, %s261
        %s584 = sld [smem:[#allocation5 + %s583]]
        %s585 = ssub.s32 21, %s261
        %s586 = sld [smem:[#allocation5 + %s585]]
        %s587 = ssub.s32 29, %s261
        %s588 = sld [smem:[#allocation5 + %s587]]
        %p589 = scmp.gt.s32.totalorder %s581, 0
        %s590 = ssub.s32 37, %s261
        %s591 = sld [smem:[#allocation5 + %s590]]
        %s592 = scalar_select %p589, %s591, 0.0
        %v593 = vmul.f32 %v580, %v274
        %v594 = vmul.f32 %v580, %v276
        %v596 = vrot.slane %v594, 5
        %v597 = vrot.slane %v596, 4
        %v599 = vadd.f32 %v593, %v597
        %v600 = vmul.f32 %v580, %v283
        %v602 = vrot.slane %v600, 6
        %v603 = vrot.slane %v602, 4
        %v605 = vadd.f32 %v599, %v603
        %v606 = vmul.f32 %v580, %v290
        %v608 = vrot.slane %v606, 7
        %v609 = vrot.slane %v608, 4
        %v611 = vadd.f32 %v605, %v609
        %s612 = smul.u32 %s581, 4
        %s613 = sadd.s32 %s612, 60
        %s614 = sld [smem:[#allocation5 + %s613]]
        %s615 = sadd.f32 %s256, %s614
        %v616 = vstv %s615
        %v617 = vadd.f32 %v611, %v616
        %v619 = vrot.slane %v617, 3
        %v620 = vsel %vm305, %v617, %v619
        %622 = vst.msk [vmem:[#allocation3] ss:$4 sm:$0x3] %vm311, %v620
        %v623 = vmul.f32 %v580, %v313
        %v624 = vmul.f32 %v580, %v315
        %v626 = vrot.slane %v624, 5
        %v627 = vrot.slane %v626, 4
        %v629 = vadd.f32 %v623, %v627
        %v630 = vmul.f32 %v580, %v322
        %v632 = vrot.slane %v630, 6
        %v633 = vrot.slane %v632, 4
        %v635 = vadd.f32 %v629, %v633
        %v636 = vmul.f32 %v580, %v329
        %v638 = vrot.slane %v636, 7
        %v639 = vrot.slane %v638, 4
        %v641 = vadd.f32 %v635, %v639
        %s642 = sadd.s32 %s612, 61
        %s643 = sld [smem:[#allocation5 + %s642]]
        %s644 = sadd.f32 %s257, %s643
        %v645 = vstv %s644
        %v646 = vadd.f32 %v641, %v645
        %v648 = vrot.slane %v646, 3
        %v649 = vsel %vm305, %v646, %v648
        %651 = vst.msk [vmem:[%s345] ss:$4 sm:$0x3] %vm311, %v649
        %v652 = vmul.f32 %v580, %v347
        %v653 = vmul.f32 %v580, %v349
        %v655 = vrot.slane %v653, 5
        %v656 = vrot.slane %v655, 4
        %v658 = vadd.f32 %v652, %v656
        %v659 = vmul.f32 %v580, %v356
        %v661 = vrot.slane %v659, 6
        %v662 = vrot.slane %v661, 4
        %v664 = vadd.f32 %v658, %v662
        %v665 = vmul.f32 %v580, %v363
        %v667 = vrot.slane %v665, 7
        %v668 = vrot.slane %v667, 4
        %v670 = vadd.f32 %v664, %v668
        %s671 = sadd.s32 %s612, 62
        %s672 = sld [smem:[#allocation5 + %s671]]
        %s673 = sadd.f32 %s258, %s672
        %v674 = vstv %s673
        %v675 = vadd.f32 %v670, %v674
        %v677 = vrot.slane %v675, 3
        %v678 = vsel %vm305, %v675, %v677
        %680 = vst.msk [vmem:[%s379] ss:$4 sm:$0x3] %vm311, %v678
        %v681 = vmul.f32 %v580, %v381
        %v682 = vmul.f32 %v580, %v383
        %v684 = vrot.slane %v682, 5
        %v685 = vrot.slane %v684, 4
        %v687 = vadd.f32 %v681, %v685
        %v688 = vmul.f32 %v580, %v390
        %v690 = vrot.slane %v688, 6
        %v691 = vrot.slane %v690, 4
        %v693 = vadd.f32 %v687, %v691
        %v694 = vmul.f32 %v580, %v397
        %v696 = vrot.slane %v694, 7
        %v697 = vrot.slane %v696, 4
        %v699 = vadd.f32 %v693, %v697
        %s700 = sadd.s32 %s612, 63
        %s701 = sld [smem:[#allocation5 + %s700]]
        %s702 = sadd.f32 %s259, %s701
        %v703 = vstv %s702
        %v704 = vadd.f32 %v699, %v703
        %v706 = vrot.slane %v704, 3
        %v707 = vsel %vm305, %v704, %v706
        %709 = vst.msk [vmem:[%s413] ss:$4 sm:$0x3] %vm311, %v707
        %v710 = vld [vmem:[#allocation3] sm:$0xff]
        %v711 = vtanh.pop %v710
        %v712 = vstv %s582
        %v713 = vmul.f32 %v712, %v580
        %v714 = vstv %s584
        %v715 = vmul.f32 %v714, %v711
        %v716 = vsub.f32 %v713, %v715
        %v717 = vmax.f32 %v716, -1.0
        %v718 = vmin.f32 %v717, 1.0
        %v719 = vstv %s586
        %v720 = vmul.f32 %v719, %v718
        %v721 = vstv %s588
        %v722 = vmul.f32 %v721, %v580
        %v723 = vadd.f32 %v720, %v722
        %s724 = scalar_lea.vmem %s203, 16 [#allocation9]
        %v725 = vld [vmem:[%s724] sm:$0xff]
        %v726 = vstv %s592
        %v727 = vmul.f32 %v726, %v725
        %v728 = vadd.f32 %v723, %v727
        %s729 = ssub.s32 4, %s261
        %s730 = sld [smem:[#allocation5 + %s729]]
        %s731 = ssub.s32 12, %s261
        %s732 = sld [smem:[#allocation5 + %s731]]
        %s733 = ssub.s32 20, %s261
        %s734 = sld [smem:[#allocation5 + %s733]]
        %s735 = ssub.s32 28, %s261
        %s736 = sld [smem:[#allocation5 + %s735]]
        %p737 = scmp.gt.s32.totalorder %s729, 0
        %s738 = ssub.s32 36, %s261
        %s739 = sld [smem:[#allocation5 + %s738]]
        %s740 = scalar_select %p737, %s739, 0.0
        %v741 = vmul.f32 %v728, %v274
        %v742 = vmul.f32 %v728, %v276
        %v744 = vrot.slane %v742, 5
        %v745 = vrot.slane %v744, 4
        %v747 = vadd.f32 %v741, %v745
        %v748 = vmul.f32 %v728, %v283
        %v750 = vrot.slane %v748, 6
        %v751 = vrot.slane %v750, 4
        %v753 = vadd.f32 %v747, %v751
        %v754 = vmul.f32 %v728, %v290
        %v756 = vrot.slane %v754, 7
        %v757 = vrot.slane %v756, 4
        %v759 = vadd.f32 %v753, %v757
        %s760 = smul.u32 %s729, 4
        %s761 = sadd.s32 %s760, 60
        %s762 = sld [smem:[#allocation5 + %s761]]
        %s763 = sadd.f32 %s256, %s762
        %v764 = vstv %s763
        %v765 = vadd.f32 %v759, %v764
        %v767 = vrot.slane %v765, 3
        %v768 = vsel %vm305, %v765, %v767
        %770 = vst.msk [vmem:[#allocation3] ss:$4 sm:$0x3] %vm311, %v768
        %v771 = vmul.f32 %v728, %v313
        %v772 = vmul.f32 %v728, %v315
        %v774 = vrot.slane %v772, 5
        %v775 = vrot.slane %v774, 4
        %v777 = vadd.f32 %v771, %v775
        %v778 = vmul.f32 %v728, %v322
        %v780 = vrot.slane %v778, 6
        %v781 = vrot.slane %v780, 4
        %v783 = vadd.f32 %v777, %v781
        %v784 = vmul.f32 %v728, %v329
        %v786 = vrot.slane %v784, 7
        %v787 = vrot.slane %v786, 4
        %v789 = vadd.f32 %v783, %v787
        %s790 = sadd.s32 %s760, 61
        %s791 = sld [smem:[#allocation5 + %s790]]
        %s792 = sadd.f32 %s257, %s791
        %v793 = vstv %s792
        %v794 = vadd.f32 %v789, %v793
        %v796 = vrot.slane %v794, 3
        %v797 = vsel %vm305, %v794, %v796
        %799 = vst.msk [vmem:[%s345] ss:$4 sm:$0x3] %vm311, %v797
        %v800 = vmul.f32 %v728, %v347
        %v801 = vmul.f32 %v728, %v349
        %v803 = vrot.slane %v801, 5
        %v804 = vrot.slane %v803, 4
        %v806 = vadd.f32 %v800, %v804
        %v807 = vmul.f32 %v728, %v356
        %v809 = vrot.slane %v807, 6
        %v810 = vrot.slane %v809, 4
        %v812 = vadd.f32 %v806, %v810
        %v813 = vmul.f32 %v728, %v363
        %v815 = vrot.slane %v813, 7
        %v816 = vrot.slane %v815, 4
        %v818 = vadd.f32 %v812, %v816
        %s819 = sadd.s32 %s760, 62
        %s820 = sld [smem:[#allocation5 + %s819]]
        %s821 = sadd.f32 %s258, %s820
        %v822 = vstv %s821
        %v823 = vadd.f32 %v818, %v822
        %v825 = vrot.slane %v823, 3
        %v826 = vsel %vm305, %v823, %v825
        %828 = vst.msk [vmem:[%s379] ss:$4 sm:$0x3] %vm311, %v826
        %v829 = vmul.f32 %v728, %v381
        %v830 = vmul.f32 %v728, %v383
        %v832 = vrot.slane %v830, 5
        %v833 = vrot.slane %v832, 4
        %v835 = vadd.f32 %v829, %v833
        %v836 = vmul.f32 %v728, %v390
        %v838 = vrot.slane %v836, 6
        %v839 = vrot.slane %v838, 4
        %v841 = vadd.f32 %v835, %v839
        %v842 = vmul.f32 %v728, %v397
        %v844 = vrot.slane %v842, 7
        %v845 = vrot.slane %v844, 4
        %v847 = vadd.f32 %v841, %v845
        %s848 = sadd.s32 %s760, 63
        %s849 = sld [smem:[#allocation5 + %s848]]
        %s850 = sadd.f32 %s259, %s849
        %v851 = vstv %s850
        %v852 = vadd.f32 %v847, %v851
        %v854 = vrot.slane %v852, 3
        %v855 = vsel %vm305, %v852, %v854
        %857 = vst.msk [vmem:[%s413] ss:$4 sm:$0x3] %vm311, %v855
        %v858 = vld [vmem:[#allocation3] sm:$0xff]
        %v859 = vtanh.pop %v858
        %v860 = vstv %s730
        %v861 = vmul.f32 %v860, %v728
        %v862 = vstv %s732
        %v863 = vmul.f32 %v862, %v859
        %v864 = vsub.f32 %v861, %v863
        %v865 = vmax.f32 %v864, -1.0
        %v866 = vmin.f32 %v865, 1.0
        %v867 = vstv %s734
        %v868 = vmul.f32 %v867, %v866
        %v869 = vstv %s736
        %v870 = vmul.f32 %v869, %v728
        %v871 = vadd.f32 %v868, %v870
        %s872 = scalar_lea.vmem %s203, 24 [#allocation9]
        %v873 = vld [vmem:[%s872] sm:$0xff]
        %v874 = vstv %s740
        %v875 = vmul.f32 %v874, %v873
        %v876 = vadd.f32 %v871, %v875
        %s877 = ssub.s32 3, %s261
        %s878 = sld [smem:[#allocation5 + %s877]]
        %s879 = ssub.s32 11, %s261
        %s880 = sld [smem:[#allocation5 + %s879]]
        %s881 = ssub.s32 19, %s261
        %s882 = sld [smem:[#allocation5 + %s881]]
        %s883 = ssub.s32 27, %s261
        %s884 = sld [smem:[#allocation5 + %s883]]
        %p885 = scmp.gt.s32.totalorder %s877, 0
        %s886 = ssub.s32 35, %s261
        %s887 = sld [smem:[#allocation5 + %s886]]
        %s888 = scalar_select %p885, %s887, 0.0
        %v889 = vmul.f32 %v876, %v274
        %v890 = vmul.f32 %v876, %v276
        %v892 = vrot.slane %v890, 5
        %v893 = vrot.slane %v892, 4
        %v895 = vadd.f32 %v889, %v893
        %v896 = vmul.f32 %v876, %v283
        %v898 = vrot.slane %v896, 6
        %v899 = vrot.slane %v898, 4
        %v901 = vadd.f32 %v895, %v899
        %v902 = vmul.f32 %v876, %v290
        %v904 = vrot.slane %v902, 7
        %v905 = vrot.slane %v904, 4
        %v907 = vadd.f32 %v901, %v905
        %s908 = smul.u32 %s877, 4
        %s909 = sadd.s32 %s908, 60
        %s910 = sld [smem:[#allocation5 + %s909]]
        %s911 = sadd.f32 %s256, %s910
        %v912 = vstv %s911
        %v913 = vadd.f32 %v907, %v912
        %v915 = vrot.slane %v913, 3
        %v916 = vsel %vm305, %v913, %v915
        %918 = vst.msk [vmem:[#allocation3] ss:$4 sm:$0x3] %vm311, %v916
        %v919 = vmul.f32 %v876, %v313
        %v920 = vmul.f32 %v876, %v315
        %v922 = vrot.slane %v920, 5
        %v923 = vrot.slane %v922, 4
        %v925 = vadd.f32 %v919, %v923
        %v926 = vmul.f32 %v876, %v322
        %v928 = vrot.slane %v926, 6
        %v929 = vrot.slane %v928, 4
        %v931 = vadd.f32 %v925, %v929
        %v932 = vmul.f32 %v876, %v329
        %v934 = vrot.slane %v932, 7
        %v935 = vrot.slane %v934, 4
        %v937 = vadd.f32 %v931, %v935
        %s938 = sadd.s32 %s908, 61
        %s939 = sld [smem:[#allocation5 + %s938]]
        %s940 = sadd.f32 %s257, %s939
        %v941 = vstv %s940
        %v942 = vadd.f32 %v937, %v941
        %v944 = vrot.slane %v942, 3
        %v945 = vsel %vm305, %v942, %v944
        %947 = vst.msk [vmem:[%s345] ss:$4 sm:$0x3] %vm311, %v945
        %v948 = vmul.f32 %v876, %v347
        %v949 = vmul.f32 %v876, %v349
        %v951 = vrot.slane %v949, 5
        %v952 = vrot.slane %v951, 4
        %v954 = vadd.f32 %v948, %v952
        %v955 = vmul.f32 %v876, %v356
        %v957 = vrot.slane %v955, 6
        %v958 = vrot.slane %v957, 4
        %v960 = vadd.f32 %v954, %v958
        %v961 = vmul.f32 %v876, %v363
        %v963 = vrot.slane %v961, 7
        %v964 = vrot.slane %v963, 4
        %v966 = vadd.f32 %v960, %v964
        %s967 = sadd.s32 %s908, 62
        %s968 = sld [smem:[#allocation5 + %s967]]
        %s969 = sadd.f32 %s258, %s968
        %v970 = vstv %s969
        %v971 = vadd.f32 %v966, %v970
        %v973 = vrot.slane %v971, 3
        %v974 = vsel %vm305, %v971, %v973
        %976 = vst.msk [vmem:[%s379] ss:$4 sm:$0x3] %vm311, %v974
        %v977 = vmul.f32 %v876, %v381
        %v978 = vmul.f32 %v876, %v383
        %v980 = vrot.slane %v978, 5
        %v981 = vrot.slane %v980, 4
        %v983 = vadd.f32 %v977, %v981
        %v984 = vmul.f32 %v876, %v390
        %v986 = vrot.slane %v984, 6
        %v987 = vrot.slane %v986, 4
        %v989 = vadd.f32 %v983, %v987
        %v990 = vmul.f32 %v876, %v397
        %v992 = vrot.slane %v990, 7
        %v993 = vrot.slane %v992, 4
        %v995 = vadd.f32 %v989, %v993
        %s996 = sadd.s32 %s908, 63
        %s997 = sld [smem:[#allocation5 + %s996]]
        %s998 = sadd.f32 %s259, %s997
        %v999 = vstv %s998
        %v1000 = vadd.f32 %v995, %v999
        %v1002 = vrot.slane %v1000, 3
        %v1003 = vsel %vm305, %v1000, %v1002
        %1005 = vst.msk [vmem:[%s413] ss:$4 sm:$0x3] %vm311, %v1003
        %v1006 = vld [vmem:[#allocation3] sm:$0xff]
        %v1007 = vtanh.pop %v1006
        %v1008 = vstv %s878
        %v1009 = vmul.f32 %v1008, %v876
        %v1010 = vstv %s880
        %v1011 = vmul.f32 %v1010, %v1007
        %v1012 = vsub.f32 %v1009, %v1011
        %v1013 = vmax.f32 %v1012, -1.0
        %v1014 = vmin.f32 %v1013, 1.0
        %v1015 = vstv %s882
        %v1016 = vmul.f32 %v1015, %v1014
        %v1017 = vstv %s884
        %v1018 = vmul.f32 %v1017, %v876
        %v1019 = vadd.f32 %v1016, %v1018
        %s1020 = scalar_lea.vmem %s203, 32 [#allocation9]
        %v1021 = vld [vmem:[%s1020] sm:$0xff]
        %v1022 = vstv %s888
        %v1023 = vmul.f32 %v1022, %v1021
        %v1024 = vadd.f32 %v1019, %v1023
        %s1025 = ssub.s32 2, %s261
        %s1026 = sld [smem:[#allocation5 + %s1025]]
        %s1027 = ssub.s32 10, %s261
        %s1028 = sld [smem:[#allocation5 + %s1027]]
        %s1029 = ssub.s32 18, %s261
        %s1030 = sld [smem:[#allocation5 + %s1029]]
        %s1031 = ssub.s32 26, %s261
        %s1032 = sld [smem:[#allocation5 + %s1031]]
        %p1033 = scmp.gt.s32.totalorder %s1025, 0
        %s1034 = ssub.s32 34, %s261
        %s1035 = sld [smem:[#allocation5 + %s1034]]
        %s1036 = scalar_select %p1033, %s1035, 0.0
        %v1037 = vmul.f32 %v1024, %v274
        %v1038 = vmul.f32 %v1024, %v276
        %v1040 = vrot.slane %v1038, 5
        %v1041 = vrot.slane %v1040, 4
        %v1043 = vadd.f32 %v1037, %v1041
        %v1044 = vmul.f32 %v1024, %v283
        %v1046 = vrot.slane %v1044, 6
        %v1047 = vrot.slane %v1046, 4
        %v1049 = vadd.f32 %v1043, %v1047
        %v1050 = vmul.f32 %v1024, %v290
        %v1052 = vrot.slane %v1050, 7
        %v1053 = vrot.slane %v1052, 4
        %v1055 = vadd.f32 %v1049, %v1053
        %s1056 = smul.u32 %s1025, 4
        %s1057 = sadd.s32 %s1056, 60
        %s1058 = sld [smem:[#allocation5 + %s1057]]
        %s1059 = sadd.f32 %s256, %s1058
        %v1060 = vstv %s1059
        %v1061 = vadd.f32 %v1055, %v1060
        %v1063 = vrot.slane %v1061, 3
        %v1064 = vsel %vm305, %v1061, %v1063
        %1066 = vst.msk [vmem:[#allocation3] ss:$4 sm:$0x3] %vm311, %v1064
        %v1067 = vmul.f32 %v1024, %v313
        %v1068 = vmul.f32 %v1024, %v315
        %v1070 = vrot.slane %v1068, 5
        %v1071 = vrot.slane %v1070, 4
        %v1073 = vadd.f32 %v1067, %v1071
        %v1074 = vmul.f32 %v1024, %v322
        %v1076 = vrot.slane %v1074, 6
        %v1077 = vrot.slane %v1076, 4
        %v1079 = vadd.f32 %v1073, %v1077
        %v1080 = vmul.f32 %v1024, %v329
        %v1082 = vrot.slane %v1080, 7
        %v1083 = vrot.slane %v1082, 4
        %v1085 = vadd.f32 %v1079, %v1083
        %s1086 = sadd.s32 %s1056, 61
        %s1087 = sld [smem:[#allocation5 + %s1086]]
        %s1088 = sadd.f32 %s257, %s1087
        %v1089 = vstv %s1088
        %v1090 = vadd.f32 %v1085, %v1089
        %v1092 = vrot.slane %v1090, 3
        %v1093 = vsel %vm305, %v1090, %v1092
        %1095 = vst.msk [vmem:[%s345] ss:$4 sm:$0x3] %vm311, %v1093
        %v1096 = vmul.f32 %v1024, %v347
        %v1097 = vmul.f32 %v1024, %v349
        %v1099 = vrot.slane %v1097, 5
        %v1100 = vrot.slane %v1099, 4
        %v1102 = vadd.f32 %v1096, %v1100
        %v1103 = vmul.f32 %v1024, %v356
        %v1105 = vrot.slane %v1103, 6
        %v1106 = vrot.slane %v1105, 4
        %v1108 = vadd.f32 %v1102, %v1106
        %v1109 = vmul.f32 %v1024, %v363
        %v1111 = vrot.slane %v1109, 7
        %v1112 = vrot.slane %v1111, 4
        %v1114 = vadd.f32 %v1108, %v1112
        %s1115 = sadd.s32 %s1056, 62
        %s1116 = sld [smem:[#allocation5 + %s1115]]
        %s1117 = sadd.f32 %s258, %s1116
        %v1118 = vstv %s1117
        %v1119 = vadd.f32 %v1114, %v1118
        %v1121 = vrot.slane %v1119, 3
        %v1122 = vsel %vm305, %v1119, %v1121
        %1124 = vst.msk [vmem:[%s379] ss:$4 sm:$0x3] %vm311, %v1122
        %v1125 = vmul.f32 %v1024, %v381
        %v1126 = vmul.f32 %v1024, %v383
        %v1128 = vrot.slane %v1126, 5
        %v1129 = vrot.slane %v1128, 4
        %v1131 = vadd.f32 %v1125, %v1129
        %v1132 = vmul.f32 %v1024, %v390
        %v1134 = vrot.slane %v1132, 6
        %v1135 = vrot.slane %v1134, 4
        %v1137 = vadd.f32 %v1131, %v1135
        %v1138 = vmul.f32 %v1024, %v397
        %v1140 = vrot.slane %v1138, 7
        %v1141 = vrot.slane %v1140, 4
        %v1143 = vadd.f32 %v1137, %v1141
        %s1144 = sadd.s32 %s1056, 63
        %s1145 = sld [smem:[#allocation5 + %s1144]]
        %s1146 = sadd.f32 %s259, %s1145
        %v1147 = vstv %s1146
        %v1148 = vadd.f32 %v1143, %v1147
        %v1150 = vrot.slane %v1148, 3
        %v1151 = vsel %vm305, %v1148, %v1150
        %1153 = vst.msk [vmem:[%s413] ss:$4 sm:$0x3] %vm311, %v1151
        %v1154 = vld [vmem:[#allocation3] sm:$0xff]
        %v1155 = vtanh.pop %v1154
        %v1156 = vstv %s1026
        %v1157 = vmul.f32 %v1156, %v1024
        %v1158 = vstv %s1028
        %v1159 = vmul.f32 %v1158, %v1155
        %v1160 = vsub.f32 %v1157, %v1159
        %v1161 = vmax.f32 %v1160, -1.0
        %v1162 = vmin.f32 %v1161, 1.0
        %v1163 = vstv %s1030
        %v1164 = vmul.f32 %v1163, %v1162
        %v1165 = vstv %s1032
        %v1166 = vmul.f32 %v1165, %v1024
        %v1167 = vadd.f32 %v1164, %v1166
        %s1168 = scalar_lea.vmem %s203, 40 [#allocation9]
        %v1169 = vld [vmem:[%s1168] sm:$0xff]
        %v1170 = vstv %s1036
        %v1171 = vmul.f32 %v1170, %v1169
        %v1172 = vadd.f32 %v1167, %v1171
        %s1173 = ssub.s32 1, %s261
        %s1174 = sld [smem:[#allocation5 + %s1173]]
        %s1175 = ssub.s32 9, %s261
        %s1176 = sld [smem:[#allocation5 + %s1175]]
        %s1177 = ssub.s32 17, %s261
        %s1178 = sld [smem:[#allocation5 + %s1177]]
        %s1179 = ssub.s32 25, %s261
        %s1180 = sld [smem:[#allocation5 + %s1179]]
        %p1181 = scmp.gt.s32.totalorder %s1173, 0
        %s1182 = ssub.s32 33, %s261
        %s1183 = sld [smem:[#allocation5 + %s1182]]
        %s1184 = scalar_select %p1181, %s1183, 0.0
        %v1185 = vmul.f32 %v1172, %v274
        %v1186 = vmul.f32 %v1172, %v276
        %v1188 = vrot.slane %v1186, 5
        %v1189 = vrot.slane %v1188, 4
        %v1191 = vadd.f32 %v1185, %v1189
        %v1192 = vmul.f32 %v1172, %v283
        %v1194 = vrot.slane %v1192, 6
        %v1195 = vrot.slane %v1194, 4
        %v1197 = vadd.f32 %v1191, %v1195
        %v1198 = vmul.f32 %v1172, %v290
        %v1200 = vrot.slane %v1198, 7
        %v1201 = vrot.slane %v1200, 4
        %v1203 = vadd.f32 %v1197, %v1201
        %s1204 = smul.u32 %s1173, 4
        %s1205 = sadd.s32 %s1204, 60
        %s1206 = sld [smem:[#allocation5 + %s1205]]
        %s1207 = sadd.f32 %s256, %s1206
        %v1208 = vstv %s1207
        %v1209 = vadd.f32 %v1203, %v1208
        %v1211 = vrot.slane %v1209, 3
        %v1212 = vsel %vm305, %v1209, %v1211
        %1214 = vst.msk [vmem:[#allocation3] ss:$4 sm:$0x3] %vm311, %v1212
        %v1215 = vmul.f32 %v1172, %v313
        %v1216 = vmul.f32 %v1172, %v315
        %v1218 = vrot.slane %v1216, 5
        %v1219 = vrot.slane %v1218, 4
        %v1221 = vadd.f32 %v1215, %v1219
        %v1222 = vmul.f32 %v1172, %v322
        %v1224 = vrot.slane %v1222, 6
        %v1225 = vrot.slane %v1224, 4
        %v1227 = vadd.f32 %v1221, %v1225
        %v1228 = vmul.f32 %v1172, %v329
        %v1230 = vrot.slane %v1228, 7
        %v1231 = vrot.slane %v1230, 4
        %v1233 = vadd.f32 %v1227, %v1231
        %s1234 = sadd.s32 %s1204, 61
        %s1235 = sld [smem:[#allocation5 + %s1234]]
        %s1236 = sadd.f32 %s257, %s1235
        %v1237 = vstv %s1236
        %v1238 = vadd.f32 %v1233, %v1237
        %v1240 = vrot.slane %v1238, 3
        %v1241 = vsel %vm305, %v1238, %v1240
        %1243 = vst.msk [vmem:[%s345] ss:$4 sm:$0x3] %vm311, %v1241
        %v1244 = vmul.f32 %v1172, %v347
        %v1245 = vmul.f32 %v1172, %v349
        %v1247 = vrot.slane %v1245, 5
        %v1248 = vrot.slane %v1247, 4
        %v1250 = vadd.f32 %v1244, %v1248
        %v1251 = vmul.f32 %v1172, %v356
        %v1253 = vrot.slane %v1251, 6
        %v1254 = vrot.slane %v1253, 4
        %v1256 = vadd.f32 %v1250, %v1254
        %v1257 = vmul.f32 %v1172, %v363
        %v1259 = vrot.slane %v1257, 7
        %v1260 = vrot.slane %v1259, 4
        %v1262 = vadd.f32 %v1256, %v1260
        %s1263 = sadd.s32 %s1204, 62
        %s1264 = sld [smem:[#allocation5 + %s1263]]
        %s1265 = sadd.f32 %s258, %s1264
        %v1266 = vstv %s1265
        %v1267 = vadd.f32 %v1262, %v1266
        %v1269 = vrot.slane %v1267, 3
        %v1270 = vsel %vm305, %v1267, %v1269
        %1272 = vst.msk [vmem:[%s379] ss:$4 sm:$0x3] %vm311, %v1270
        %v1273 = vmul.f32 %v1172, %v381
        %v1274 = vmul.f32 %v1172, %v383
        %v1276 = vrot.slane %v1274, 5
        %v1277 = vrot.slane %v1276, 4
        %v1279 = vadd.f32 %v1273, %v1277
        %v1280 = vmul.f32 %v1172, %v390
        %v1282 = vrot.slane %v1280, 6
        %v1283 = vrot.slane %v1282, 4
        %v1285 = vadd.f32 %v1279, %v1283
        %v1286 = vmul.f32 %v1172, %v397
        %v1288 = vrot.slane %v1286, 7
        %v1289 = vrot.slane %v1288, 4
        %v1291 = vadd.f32 %v1285, %v1289
        %s1292 = sadd.s32 %s1204, 63
        %s1293 = sld [smem:[#allocation5 + %s1292]]
        %s1294 = sadd.f32 %s259, %s1293
        %v1295 = vstv %s1294
        %v1296 = vadd.f32 %v1291, %v1295
        %v1298 = vrot.slane %v1296, 3
        %v1299 = vsel %vm305, %v1296, %v1298
        %1301 = vst.msk [vmem:[%s413] ss:$4 sm:$0x3] %vm311, %v1299
        %v1302 = vld [vmem:[#allocation3] sm:$0xff]
        %v1303 = vtanh.pop %v1302
        %v1304 = vstv %s1174
        %v1305 = vmul.f32 %v1304, %v1172
        %v1306 = vstv %s1176
        %v1307 = vmul.f32 %v1306, %v1303
        %v1308 = vsub.f32 %v1305, %v1307
        %v1309 = vmax.f32 %v1308, -1.0
        %v1310 = vmin.f32 %v1309, 1.0
        %v1311 = vstv %s1178
        %v1312 = vmul.f32 %v1311, %v1310
        %v1313 = vstv %s1180
        %v1314 = vmul.f32 %v1313, %v1172
        %v1315 = vadd.f32 %v1312, %v1314
        %s1316 = scalar_lea.vmem %s203, 48 [#allocation9]
        %v1317 = vld [vmem:[%s1316] sm:$0xff]
        %v1318 = vstv %s1184
        %v1319 = vmul.f32 %v1318, %v1317
        %v1320 = vadd.f32 %v1315, %v1319
        %s1321 = ssub.s32 0, %s261
        %s1322 = sld [smem:[#allocation5 + %s1321]]
        %s1323 = ssub.s32 8, %s261
        %s1324 = sld [smem:[#allocation5 + %s1323]]
        %s1325 = ssub.s32 16, %s261
        %s1326 = sld [smem:[#allocation5 + %s1325]]
        %s1327 = ssub.s32 24, %s261
        %s1328 = sld [smem:[#allocation5 + %s1327]]
        %p1329 = scmp.gt.s32.totalorder %s1321, 0
        %s1330 = ssub.s32 32, %s261
        %s1331 = sld [smem:[#allocation5 + %s1330]]
        %s1332 = scalar_select %p1329, %s1331, 0.0
        %v1333 = vmul.f32 %v1320, %v274
        %v1334 = vmul.f32 %v1320, %v276
        %v1336 = vrot.slane %v1334, 5
        %v1337 = vrot.slane %v1336, 4
        %v1339 = vadd.f32 %v1333, %v1337
        %v1340 = vmul.f32 %v1320, %v283
        %v1342 = vrot.slane %v1340, 6
        %v1343 = vrot.slane %v1342, 4
        %v1345 = vadd.f32 %v1339, %v1343
        %v1346 = vmul.f32 %v1320, %v290
        %v1348 = vrot.slane %v1346, 7
        %v1349 = vrot.slane %v1348, 4
        %v1351 = vadd.f32 %v1345, %v1349
        %s1352 = smul.u32 %s1321, 4
        %s1353 = sadd.s32 %s1352, 60
        %s1354 = sld [smem:[#allocation5 + %s1353]]
        %s1355 = sadd.f32 %s256, %s1354
        %v1356 = vstv %s1355
        %v1357 = vadd.f32 %v1351, %v1356
        %v1359 = vrot.slane %v1357, 3
        %v1360 = vsel %vm305, %v1357, %v1359
        %1362 = vst.msk [vmem:[#allocation3] ss:$4 sm:$0x3] %vm311, %v1360
        %v1363 = vmul.f32 %v1320, %v313
        %v1364 = vmul.f32 %v1320, %v315
        %v1366 = vrot.slane %v1364, 5
        %v1367 = vrot.slane %v1366, 4
        %v1369 = vadd.f32 %v1363, %v1367
        %v1370 = vmul.f32 %v1320, %v322
        %v1372 = vrot.slane %v1370, 6
        %v1373 = vrot.slane %v1372, 4
        %v1375 = vadd.f32 %v1369, %v1373
        %v1376 = vmul.f32 %v1320, %v329
        %v1378 = vrot.slane %v1376, 7
        %v1379 = vrot.slane %v1378, 4
        %v1381 = vadd.f32 %v1375, %v1379
        %s1382 = sadd.s32 %s1352, 61
        %s1383 = sld [smem:[#allocation5 + %s1382]]
        %s1384 = sadd.f32 %s257, %s1383
        %v1385 = vstv %s1384
        %v1386 = vadd.f32 %v1381, %v1385
        %v1388 = vrot.slane %v1386, 3
        %v1389 = vsel %vm305, %v1386, %v1388
        %1391 = vst.msk [vmem:[%s345] ss:$4 sm:$0x3] %vm311, %v1389
        %v1392 = vmul.f32 %v1320, %v347
        %v1393 = vmul.f32 %v1320, %v349
        %v1395 = vrot.slane %v1393, 5
        %v1396 = vrot.slane %v1395, 4
        %v1398 = vadd.f32 %v1392, %v1396
        %v1399 = vmul.f32 %v1320, %v356
        %v1401 = vrot.slane %v1399, 6
        %v1402 = vrot.slane %v1401, 4
        %v1404 = vadd.f32 %v1398, %v1402
        %v1405 = vmul.f32 %v1320, %v363
        %v1407 = vrot.slane %v1405, 7
        %v1408 = vrot.slane %v1407, 4
        %v1410 = vadd.f32 %v1404, %v1408
        %s1411 = sadd.s32 %s1352, 62
        %s1412 = sld [smem:[#allocation5 + %s1411]]
        %s1413 = sadd.f32 %s258, %s1412
        %v1414 = vstv %s1413
        %v1415 = vadd.f32 %v1410, %v1414
        %v1417 = vrot.slane %v1415, 3
        %v1418 = vsel %vm305, %v1415, %v1417
        %1420 = vst.msk [vmem:[%s379] ss:$4 sm:$0x3] %vm311, %v1418
        %v1421 = vmul.f32 %v1320, %v381
        %v1422 = vmul.f32 %v1320, %v383
        %v1424 = vrot.slane %v1422, 5
        %v1425 = vrot.slane %v1424, 4
        %v1427 = vadd.f32 %v1421, %v1425
        %v1428 = vmul.f32 %v1320, %v390
        %v1430 = vrot.slane %v1428, 6
        %v1431 = vrot.slane %v1430, 4
        %v1433 = vadd.f32 %v1427, %v1431
        %v1434 = vmul.f32 %v1320, %v397
        %v1436 = vrot.slane %v1434, 7
        %v1437 = vrot.slane %v1436, 4
        %v1439 = vadd.f32 %v1433, %v1437
        %s1440 = sadd.s32 %s1352, 63
        %s1441 = sld [smem:[#allocation5 + %s1440]]
        %s1442 = sadd.f32 %s259, %s1441
        %v1443 = vstv %s1442
        %v1444 = vadd.f32 %v1439, %v1443
        %v1446 = vrot.slane %v1444, 3
        %v1447 = vsel %vm305, %v1444, %v1446
        %1449 = vst.msk [vmem:[%s413] ss:$4 sm:$0x3] %vm311, %v1447
        %v1450 = vld [vmem:[#allocation3] sm:$0xff]
        %v1451 = vtanh.pop %v1450
        %v1452 = vstv %s1322
        %v1453 = vmul.f32 %v1452, %v1320
        %v1454 = vstv %s1324
        %v1455 = vmul.f32 %v1454, %v1451
        %v1456 = vsub.f32 %v1453, %v1455
        %v1457 = vmax.f32 %v1456, -1.0
        %v1458 = vmin.f32 %v1457, 1.0
        %v1459 = vstv %s1326
        %v1460 = vmul.f32 %v1459, %v1458
        %v1461 = vstv %s1328
        %v1462 = vmul.f32 %v1461, %v1320
        %v1463 = vadd.f32 %v1460, %v1462
        %s1464 = scalar_lea.vmem %s203, 56 [#allocation9]
        %v1465 = vld [vmem:[%s1464] sm:$0xff]
        %v1466 = vstv %s1332
        %v1467 = vmul.f32 %v1466, %v1465
        %v1468 = vadd.f32 %v1463, %v1467
        %1469 = vst [vmem:[#allocation2] sm:$0xff] %v1468
        // Predicated region
        $region41: #{tpu_custom_call.1} parent=27 // pred_check
          %p1470 = pneg %p234
        $region42: #{tpu_custom_call.1} parent=27 // pred_check_branch
          %1472 = sbr.rel (%p1470) target = $region44
        $region43: #{tpu_custom_call.1} parent=27 // pred_region
          %v1473 = vmax.f32 %v1468, -1.0
          %v1474 = vmin.f32 %v1473, 1.0
          %1475 = vst [vmem:[%s229] sm:$0xff] %v1474
        $region44: #{tpu_custom_call.1} parent=27 // pred_fallthru
          _
        %s1476 = sand.u32 %s105, 1
        %s1477 = scalar_lea.sflag [#allocation8], %s1476
        %s1478 = sand.u32 %s105, 1
        %s1479 = smul.addr %s1478, 8
        %s1480 = scalar_lea.vmem [#allocation11], %s1479
        // Predicated region
        $region45: #{tpu_custom_call.1} parent=27 // pred_check
          %p1481 = pneg %p115
        $region46: #{tpu_custom_call.1} parent=27 // pred_check_branch
          %1483 = sbr.rel (%p1481) target = $region48
        $region47: #{tpu_custom_call.1} parent=27 // pred_region
          %s1484 = smul.u32 2, %s35
          %1486 = vsyncadd %s1477, 0
          %s1487 = smul.addr %s1484, 4
          %s1488 = scalar_lea.hbm %s3, %s1487
          %s1490 = sshll.u32 %s1480, 4
          %s1491 = int_to_ptr.vmem [resolvable:$true] %s1490
          %s1492 = sshll.u32 %s1488, 4
          %s1493 = int_to_ptr.hbm [resolvable:$true] %s1492
          %1495 = dma.vmem_to_hbm [thread:$0]  %s1491, 128, %s1493, %s1477
        $region48: #{tpu_custom_call.1} parent=27 // pred_fallthru
          _
      $region28: #{tpu_custom_call.1} parent=5 // pred_fallthru
        _
      %p1496 = scmp.le.s32.totalorder 2, %s26
      // Predicated region
      $region49: #{tpu_custom_call.1} parent=5 // pred_check
        %p1497 = pneg %p1496
      $region50: #{tpu_custom_call.1} parent=5 // pred_check_branch
        %1499 = sbr.rel (%p1497) target = $region52
      $region51: #{tpu_custom_call.1} parent=5 // pred_region
        %s1500 = ssub.s32 %s26, 2
        // Predicated region
        $region53: #{tpu_custom_call.1} parent=51 // pred_check
          %p1501 = pneg %p121
        $region54: #{tpu_custom_call.1} parent=51 // pred_check_branch
          %1503 = sbr.rel (%p1501) target = $region56
        $region55: #{tpu_custom_call.1} parent=51 // pred_region
          %s1504 = sand.u32 %s106, 1
          %s1505 = scalar_lea.sflag [#allocation8], %s1504
          %s1506 = sand.u32 %s106, 1
          %s1507 = smul.addr %s1506, 8
          %s1508 = scalar_lea.vmem [#allocation11], %s1507
          %1510 = dma.done %s1505, 128
        $region56: #{tpu_custom_call.1} parent=51 // pred_fallthru
          _
      $region52: #{tpu_custom_call.1} parent=5 // pred_fallthru
        _
    $region6: #{tpu_custom_call.1} parent=1 // loop_footer
      %s30 = sadd.s32 1, %s26
    $region7: #{tpu_custom_call.1} parent=1 // loop_footer_branch
      %25 = sbr.rel target = $region3
    $region8: #{tpu_custom_call.1} parent=1 // loop_exit
      _
    %1511 = vsyncpa [#allocation7], 1
    %s1512 = scalar_lea.sflag [#allocation7], 1
    %1513 = vsyncpa %s1512, 1
    %1514 = vsyncpa [#allocation10], 1
    %s1515 = scalar_lea.sflag [#allocation10], 1
    %1516 = vsyncpa %s1515, 1
    %1517 = vsyncpa [#allocation8], 1
    %s1518 = scalar_lea.sflag [#allocation8], 1
    %1519 = vsyncpa %s1518, 1

</llo_original>
